<compile_context>
chip_gen: v7x
topology: tpu7x:2x2x1
jax: 0.10.0
libtpu: 0.0.40
codegen_flags: <defaults>
</compile_context>

<pallas_src>
import functools
import math

import jax
import jax.numpy as jnp
import numpy as np
from jax import lax
from jax.experimental import pallas as pl
from jax.experimental.pallas import tpu as pltpu

_LN_EPS = 1e-5


# ------------------------------ small helpers -------------------------------

def _layer_norm_rows(y, g, b, eps):
    """LayerNorm over the last dim of a 2-D (rows, C) f32 value."""
    mu = jnp.mean(y, axis=-1, keepdims=True)
    var = jnp.mean(jnp.square(y - mu), axis=-1, keepdims=True)
    return (y - mu) * lax.rsqrt(var + eps) * g + b


def _const_spec(shape):
    """BlockSpec covering the whole array, constant across a rank-1 grid."""
    n = len(shape)
    return pl.BlockSpec(shape, lambda i, n=n: (0,) * n)


def _row_block(rows):
    """Largest row tile (<=512, multiple of 8) that evenly divides `rows`."""
    if rows <= 512:
        return rows
    for cand in (512, 256, 128, 64, 32, 16, 8):
        if rows % cand == 0:
            return cand
    return rows


# --------------------------- fused attention kernel --------------------------

def _mha_ln_kernel(tgt_ref, qpos_ref, kv_ref, kvpos_ref,
                   w_in_ref, b_in_ref, w_out_ref, b_out_ref,
                   g_ref, beta_ref, o_ref, *, num_heads, eps):
    """One batch element per grid step.  Computes LN(tgt + MHA(tgt+qpos, kv+kvpos, kv))."""
    tgt = tgt_ref[0].astype(jnp.float32)          # (Lq, C)  residual input
    q_in = tgt + qpos_ref[0]                      # (Lq, C)
    kv = kv_ref[0].astype(jnp.float32)            # (Lk, C)
    k_in = kv + kvpos_ref[0]                      # (Lk, C)

    c = tgt.shape[-1]
    dh = c // num_heads
    scale = 1.0 / math.sqrt(dh)

    # fused in-projection weight (C, 3C) laid out [Wq^T | Wk^T | Wv^T], stored bf16.
    w_in = w_in_ref[...]
    b_in = b_in_ref[...]                          # (1, 3C) f32
    q = jnp.dot(q_in.astype(jnp.bfloat16), w_in[:, 0:c],
                preferred_element_type=jnp.float32) + b_in[:, 0:c]
    k = jnp.dot(k_in.astype(jnp.bfloat16), w_in[:, c:2 * c],
                preferred_element_type=jnp.float32) + b_in[:, c:2 * c]
    v = jnp.dot(kv.astype(jnp.bfloat16), w_in[:, 2 * c:3 * c],
                preferred_element_type=jnp.float32) + b_in[:, 2 * c:3 * c]

    # per-head attention (static unrolled loop; softmax kept in f32).
    heads = []
    for h in range(num_heads):
        sl = slice(h * dh, (h + 1) * dh)
        qh = q[:, sl].astype(jnp.bfloat16)        # (Lq, dh)
        kh = k[:, sl].astype(jnp.bfloat16)        # (Lk, dh)
        vh = v[:, sl].astype(jnp.bfloat16)        # (Lk, dh)
        s = lax.dot_general(qh, kh, (((1,), (1,)), ((), ())),
                            preferred_element_type=jnp.float32) * scale   # (Lq, Lk)
        m = jnp.max(s, axis=-1, keepdims=True)
        p = jnp.exp(s - m)
        denom = jnp.sum(p, axis=-1, keepdims=True)
        p = p * pl.reciprocal(denom, approx=True)
        heads.append(jnp.dot(p.astype(jnp.bfloat16), vh,
                             preferred_element_type=jnp.float32))          # (Lq, dh)
    attn = jnp.concatenate(heads, axis=-1)        # (Lq, C)

    # output projection + residual + LayerNorm, all in VMEM.
    proj = jnp.dot(attn.astype(jnp.bfloat16), w_out_ref[...],
                   preferred_element_type=jnp.float32) + b_out_ref[...]
    y = tgt + proj
    o_ref[0] = _layer_norm_rows(y, g_ref[...], beta_ref[...], eps)


def mha_ln_block(tgt, qpos, kv, kvpos, p, nhead):
    """tgt/qpos: (B, Lq, C); kv/kvpos: (B, Lk, C).  Returns LN(tgt + MHA(...)), shape (B, Lq, C)."""
    B, Lq, C = tgt.shape
    Lk = kv.shape[1]
    kernel = functools.partial(_mha_ln_kernel, num_heads=nhead, eps=_LN_EPS)
    return pl.pallas_call(
        kernel,
        grid=(B,),
        in_specs=[
            pl.BlockSpec((1, Lq, C), lambda b: (b, 0, 0)),
            pl.BlockSpec((1, Lq, C), lambda b: (b, 0, 0)),
            pl.BlockSpec((1, Lk, C), lambda b: (b, 0, 0)),
            pl.BlockSpec((1, Lk, C), lambda b: (b, 0, 0)),
            _const_spec((C, 3 * C)),
            _const_spec((1, 3 * C)),
            _const_spec((C, C)),
            _const_spec((1, C)),
            _const_spec((1, C)),
            _const_spec((1, C)),
        ],
        out_specs=pl.BlockSpec((1, Lq, C), lambda b: (b, 0, 0)),
        out_shape=jax.ShapeDtypeStruct((B, Lq, C), jnp.float32),
        compiler_params=pltpu.CompilerParams(dimension_semantics=("parallel",)),
    )(tgt, qpos, kv, kvpos,
      p["w_in"], p["b_in"], p["w_out"], p["b_out"], p["ln_w"], p["ln_b"])


# ------------------------------ fused FFN kernel ------------------------------

def _ffn_ln_kernel(x_ref, w1_ref, b1_ref, w2_ref, b2_ref, g_ref, beta_ref, o_ref, *, eps):
    x = x_ref[...].astype(jnp.float32)            # (R, C)
    h = jnp.dot(x.astype(jnp.bfloat16), w1_ref[...],
                preferred_element_type=jnp.float32) + b1_ref[...]
    h = jnp.maximum(h, 0.0)                       # ReLU
    y = jnp.dot(h.astype(jnp.bfloat16), w2_ref[...],
                preferred_element_type=jnp.float32) + b2_ref[...]
    y = x + y                                     # residual
    o_ref[...] = _layer_norm_rows(y, g_ref[...], beta_ref[...], eps)


def ffn_ln_block(x2d, p):
    """x2d: (rows, C).  Returns LN(x + linear2(relu(linear1(x))))."""
    R, C = x2d.shape
    dff = p["w1"].shape[1]
    br = _row_block(R)
    return pl.pallas_call(
        functools.partial(_ffn_ln_kernel, eps=_LN_EPS),
        grid=(R // br,),
        in_specs=[pl.BlockSpec((br, C), lambda i: (i, 0)),
                  _const_spec((C, dff)),
                  _const_spec((1, dff)),
                  _const_spec((dff, C)),
                  _const_spec((1, C)),
                  _const_spec((1, C)),
                  _const_spec((1, C))],
        out_specs=pl.BlockSpec((br, C), lambda i: (i, 0)),
        out_shape=jax.ShapeDtypeStruct((R, C), jnp.float32),
        compiler_params=pltpu.CompilerParams(dimension_semantics=("parallel",)),
    )(x2d, p["w1"], p["b1"], p["w2"], p["b2"], p["ln_w"], p["ln_b"])


# ------------------------------ LayerNorm kernel ------------------------------

def _ln_kernel(x_ref, g_ref, b_ref, o_ref, *, eps):
    o_ref[...] = _layer_norm_rows(x_ref[...].astype(jnp.float32),
                                  g_ref[...], b_ref[...], eps)


def layer_norm(x2d, g, b):
    R, C = x2d.shape
    br = _row_block(R)
    return pl.pallas_call(
        functools.partial(_ln_kernel, eps=_LN_EPS),
        grid=(R // br,),
        in_specs=[pl.BlockSpec((br, C), lambda i: (i, 0)),
                  _const_spec((1, C)),
                  _const_spec((1, C))],
        out_specs=pl.BlockSpec((br, C), lambda i: (i, 0)),
        out_shape=jax.ShapeDtypeStruct((R, C), jnp.float32),
        compiler_params=pltpu.CompilerParams(dimension_semantics=("parallel",)),
    )(x2d, g, b)


# --------------------------- IFC decoder (Pallas path) -----------------------

def _assemble_memory(memory, memory_bus, memory_pos, pos, num_frames, is_train):
    """memory_bus / pos reshuffle exactly as in IFCDecoder.forward (plain XLA data movement)."""
    M, bt, c = memory_bus.shape
    bs = bt // num_frames if is_train else 1
    t = bt // bs
    mb = memory_bus.reshape(M, bs, t, c).transpose(2, 0, 1, 3).reshape(t * M, bs, c)
    memory = jnp.concatenate([memory, mb], axis=0)
    mpos = jnp.tile(memory_pos[None, :, None, :], (t, 1, bs, 1)).reshape(t * M, bs, c)
    pos = jnp.concatenate([pos, mpos], axis=0)
    return memory, pos


def _decoder_layer(tgt_bm, mem_bm, lp, pos_bm, qpos_bm, nhead):
    # self-attention sub-layer (fused attn + residual + LN, post-norm)
    tgt_bm = mha_ln_block(tgt_bm, qpos_bm, tgt_bm, qpos_bm, lp["self"], nhead)
    # cross-attention sub-layer
    tgt_bm = mha_ln_block(tgt_bm, qpos_bm, mem_bm, pos_bm, lp["cross"], nhead)
    # FFN sub-layer
    B, Lq, C = tgt_bm.shape
    return ffn_ln_block(tgt_bm.reshape(B * Lq, C), lp["ffn"]).reshape(B, Lq, C)


def ifc_decoder_forward(tgt, memory, memory_bus, memory_pos, pos, query_pos, params,
                        *, num_frames, nhead, is_train=True, return_intermediate=True):
    # TODO(synk): tgt_mask / memory_mask / key_padding_mask not implemented — IFC passes None
    #             for all of them, so pad_zero(None, ...) is a no-op.
    memory, pos = _assemble_memory(memory, memory_bus, memory_pos, pos, num_frames, is_train)

    # seq-first (L, B, C) -> batch-major (B, L, C) ONCE for the whole stack (avoids all
    # per-MHA head/batch transposes in HBM).
    tgt_bm = tgt.transpose(1, 0, 2)
    qpos_bm = query_pos.transpose(1, 0, 2)
    mem_bm = memory.transpose(1, 0, 2)
    pos_bm = pos.transpose(1, 0, 2)

    B, Lq, C = tgt_bm.shape
    ri = return_intermediate and is_train
    output = tgt_bm
    intermediate = []
    for lp in params["layers"]:
        output = _decoder_layer(output, mem_bm, lp, pos_bm, qpos_bm, nhead)
        if ri:
            normed = layer_norm(output.reshape(B * Lq, C),
                                params["norm_w"], params["norm_b"]).reshape(B, Lq, C)
            intermediate.append(normed)
    final = layer_norm(output.reshape(B * Lq, C),
                       params["norm_w"], params["norm_b"]).reshape(B, Lq, C)
    if ri:
        intermediate[-1] = final                       # pop() + append(output)
        out = jnp.stack(intermediate)                  # (layers, B, Lq, C)
        return out.transpose(0, 2, 1, 3)               # -> (layers, Lq, B, C)
    return final.transpose(1, 0, 2)[None]              # (1, Lq, B, C)


# ----------------------- param prep (hoisted transposes) ----------------------

def prepare_params(params):
    """Transpose torch-layout weights once and cast matmul weights to bf16 (f32 accumulation
    happens inside the kernels).  Biases / LayerNorm params stay f32."""
    def mha_prep(p, nw, nb):
        return {
            "w_in": p["in_proj_weight"].T.astype(jnp.bfloat16),       # (C, 3C)
            "b_in": p["in_proj_bias"].reshape(1, -1).astype(jnp.float32),
            "w_out": p["out_proj_weight"].T.astype(jnp.bfloat16),     # (C, C)
            "b_out": p["out_proj_bias"].reshape(1, -1).astype(jnp.float32),
            "ln_w": nw.reshape(1, -1).astype(jnp.float32),
            "ln_b": nb.reshape(1, -1).astype(jnp.float32),
        }

    layers = []
    for lp in params["layers"]:
        layers.append({
            "self": mha_prep(lp["self_attn"], lp["norm1_w"], lp["norm1_b"]),
            "cross": mha_prep(lp["cross_attn"], lp["norm2_w"], lp["norm2_b"]),
            "ffn": {
                "w1": lp["linear1_w"].T.astype(jnp.bfloat16),          # (C, dff)
                "b1": lp["linear1_b"].reshape(1, -1).astype(jnp.float32),
                "w2": lp["linear2_w"].T.astype(jnp.bfloat16),          # (dff, C)
                "b2": lp["linear2_b"].reshape(1, -1).astype(jnp.float32),
                "ln_w": lp["norm3_w"].reshape(1, -1).astype(jnp.float32),
                "ln_b": lp["norm3_b"].reshape(1, -1).astype(jnp.float32),
            },
        })
    return {"layers": layers,
            "norm_w": params["norm_w"].reshape(1, -1).astype(jnp.float32),
            "norm_b": params["norm_b"].reshape(1, -1).astype(jnp.float32)}


# --------------------------- pure-JAX f32 reference ---------------------------

def _ref_linear(x, w, b):
    return x @ w.T + b


def _ref_ln(x, g, b, eps=_LN_EPS):
    mu = x.mean(-1, keepdims=True)
    var = ((x - mu) ** 2).mean(-1, keepdims=True)
    return (x - mu) / jnp.sqrt(var + eps) * g + b


def _ref_ffn(x, w1, b1, w2, b2):
    return jnp.maximum(x @ w1.T + b1, 0.0) @ w2.T + b2


def _ref_mha(q, k, v, p, H):
    Lq, B, C = q.shape
    Lk = k.shape[0]
    dh = C // H
    wq, wk, wv = jnp.split(p["in_proj_weight"], 3, axis=0)
    bq, bk, bv = jnp.split(p["in_proj_bias"], 3, axis=0)
    qh = _ref_linear(q, wq, bq).reshape(Lq, B, H, dh).transpose(1, 2, 0, 3)
    kh = _ref_linear(k, wk, bk).reshape(Lk, B, H, dh).transpose(1, 2, 0, 3)
    vh = _ref_linear(v, wv, bv).reshape(Lk, B, H, dh).transpose(1, 2, 0, 3)
    s = jnp.einsum('bhqd,bhkd->bhqk', qh, kh) / math.sqrt(dh)
    a = jax.nn.softmax(s, axis=-1)
    o = jnp.einsum('bhqk,bhkd->bhqd', a, vh).transpose(2, 0, 1, 3).reshape(Lq, B, C)
    return _ref_linear(o, p["out_proj_weight"], p["out_proj_bias"])


def ifc_decoder_forward_ref(tgt, memory, memory_bus, memory_pos, pos, query_pos, params,
                            *, num_frames, nhead, is_train=True, return_intermediate=True):
    memory, pos = _assemble_memory(memory, memory_bus, memory_pos, pos, num_frames, is_train)
    output = tgt
    ri = return_intermediate and is_train
    intermediate = []
    for lp in params["layers"]:
        q = output + query_pos
        t2 = _ref_mha(q, q, output, lp["self_attn"], nhead)
        output = _ref_ln(output + t2, lp["norm1_w"], lp["norm1_b"])
        t2 = _ref_mha(output + query_pos, memory + pos, memory, lp["cross_attn"], nhead)
        output = _ref_ln(output + t2, lp["norm2_w"], lp["norm2_b"])
        t2 = _ref_ffn(output, lp["linear1_w"], lp["linear1_b"],
                      lp["linear2_w"], lp["linear2_b"])
        output = _ref_ln(output + t2, lp["norm3_w"], lp["norm3_b"])
        if ri:
            intermediate.append(_ref_ln(output, params["norm_w"], params["norm_b"]))
    final = _ref_ln(output, params["norm_w"], params["norm_b"])
    if ri:
        intermediate[-1] = final
        return jnp.stack(intermediate)
    return final[None]


# ------------------------------- params init ----------------------------------

def init_params(key, num_layers, c, dff):
    def mha_p(k):
        k1, k2, k3, k4 = jax.random.split(k, 4)
        return {
            "in_proj_weight": 0.05 * jax.random.normal(k1, (3 * c, c), jnp.float32),
            "in_proj_bias":   0.05 * jax.random.normal(k2, (3 * c,), jnp.float32),
            "out_proj_weight": 0.05 * jax.random.normal(k3, (c, c), jnp.float32),
            "out_proj_bias":  0.05 * jax.random.normal(k4, (c,), jnp.float32),
        }

    keys = jax.random.split(key, num_layers)
    layers = []
    for lk in keys:
        ks = jax.random.split(lk, 6)
        layers.append({
            "self_attn": mha_p(ks[0]),
            "cross_attn": mha_p(ks[1]),
            "linear1_w": 0.05 * jax.random.normal(ks[2], (dff, c), jnp.float32),
            "linear1_b": 0.05 * jax.random.normal(ks[3], (dff,), jnp.float32),
            "linear2_w": 0.05 * jax.random.normal(ks[4], (c, dff), jnp.float32),
            "linear2_b": 0.05 * jax.random.normal(ks[5], (c,), jnp.float32),
            "norm1_w": jnp.ones((c,), jnp.float32), "norm1_b": jnp.zeros((c,), jnp.float32),
            "norm2_w": jnp.ones((c,), jnp.float32), "norm2_b": jnp.zeros((c,), jnp.float32),
            "norm3_w": jnp.ones((c,), jnp.float32), "norm3_b": jnp.zeros((c,), jnp.float32),
        })
    return {"layers": layers,
            "norm_w": jnp.ones((c,), jnp.float32),
            "norm_b": jnp.zeros((c,), jnp.float32)}


# ----------------------------------- main --------------------------------------

if __name__ == "__main__":
    C, NHEAD, DFF = 32, 4, 64
    NUM_LAYERS, NUM_FRAMES = 2, 2
    BS = 2
    BT = BS * NUM_FRAMES          # bt = bs * t
    M = 4                         # memory-bus tokens
    NQ = 8                        # object queries
    HW = 16                       # per-frame flattened spatial tokens
    S = NUM_FRAMES * HW           # memory length before bus concat

    key = jax.random.PRNGKey(0)
    keys = jax.random.split(key, 7)
    tgt = jax.random.normal(keys[0], (NQ, BS, C), jnp.float32)
    query_pos = jax.random.normal(keys[1], (NQ, BS, C), jnp.float32)
    memory = jax.random.normal(keys[2], (S, BS, C), jnp.float32)
    pos = jax.random.normal(keys[3], (S, BS, C), jnp.float32)
    memory_bus = jax.random.normal(keys[4], (M, BT, C), jnp.float32)
    memory_pos = jax.random.normal(keys[5], (M, C), jnp.float32)
    params = init_params(keys[6], NUM_LAYERS, C, DFF)

    prepared = prepare_params(params)   # one-time weight transposes + bf16 cast (hoisted)

    fwd = jax.jit(ifc_decoder_forward,
                  static_argnames=("num_frames", "nhead", "is_train", "return_intermediate"))
    out = fwd(tgt, memory, memory_bus, memory_pos, pos, query_pos, prepared,
              num_frames=NUM_FRAMES, nhead=NHEAD, is_train=True, return_intermediate=True)
    out = jax.block_until_ready(out)
    assert out.shape == (NUM_LAYERS, NQ, BS, C), out.shape

    ref = ifc_decoder_forward_ref(tgt, memory, memory_bus, memory_pos, pos, query_pos, params,
                                  num_frames=NUM_FRAMES, nhead=NHEAD,
                                  is_train=True, return_intermediate=True)
    # bf16 MXU operands (f32 accumulation) -> loosened tolerance vs. the f32 reference.
    np.testing.assert_allclose(np.asarray(out), np.asarray(ref), rtol=3e-2, atol=3e-2)

    print("KERNEL_OK")
</pallas_src>

<mosaic_0001>
module attributes {stable_mosaic.version = 11 : i64} {
  func.func @_mha_ln_kernel(%arg0: i32, %arg1: memref<1x8x32xf32, #tpu.memory_space<vmem>>, %arg2: memref<1x8x32xf32, #tpu.memory_space<vmem>>, %arg3: memref<1x8x32xf32, #tpu.memory_space<vmem>>, %arg4: memref<1x8x32xf32, #tpu.memory_space<vmem>>, %arg5: memref<32x96xbf16, #tpu.memory_space<vmem>>, %arg6: memref<1x96xf32, #tpu.memory_space<vmem>>, %arg7: memref<32x32xbf16, #tpu.memory_space<vmem>>, %arg8: memref<1x32xf32, #tpu.memory_space<vmem>>, %arg9: memref<1x32xf32, #tpu.memory_space<vmem>>, %arg10: memref<1x32xf32, #tpu.memory_space<vmem>>, %arg11: memref<1x8x32xf32, #tpu.memory_space<vmem>>) attributes {dimension_semantics = [#tpu.dimension_semantics<parallel>], iteration_bounds = array<i64: 2>, scalar_prefetch = 0 : i64, scratch_operands = 0 : i64, tpu.core_type = #tpu.core_type<tc>, window_params = [{transform_indices = @transform_0, window_bounds = array<i64: 1, 8, 32>}, {transform_indices = @transform_1, window_bounds = array<i64: 1, 8, 32>}, {transform_indices = @transform_2, window_bounds = array<i64: 1, 8, 32>}, {transform_indices = @transform_3, window_bounds = array<i64: 1, 8, 32>}, {pipeline_mode = #tpu.pipeline_mode<synchronous>, transform_indices = @transform_4, window_bounds = array<i64: 32, 96>}, {pipeline_mode = #tpu.pipeline_mode<synchronous>, transform_indices = @transform_5, window_bounds = array<i64: 1, 96>}, {pipeline_mode = #tpu.pipeline_mode<synchronous>, transform_indices = @transform_6, window_bounds = array<i64: 32, 32>}, {pipeline_mode = #tpu.pipeline_mode<synchronous>, transform_indices = @transform_7, window_bounds = array<i64: 1, 32>}, {pipeline_mode = #tpu.pipeline_mode<synchronous>, transform_indices = @transform_8, window_bounds = array<i64: 1, 32>}, {pipeline_mode = #tpu.pipeline_mode<synchronous>, transform_indices = @transform_9, window_bounds = array<i64: 1, 32>}, {transform_indices = @transform_10, window_bounds = array<i64: 1, 8, 32>}]} {
    %c0 = arith.constant 0 : index
    %c0_0 = arith.constant 0 : index
    %c0_1 = arith.constant 0 : index
    %0 = vector.load %arg1[%c0, %c0_0, %c0_1] : memref<1x8x32xf32, #tpu.memory_space<vmem>>, vector<1x8x32xf32>
    %1 = vector.shape_cast %0 : vector<1x8x32xf32> to vector<8x32xf32>
    %c0_2 = arith.constant 0 : index
    %c0_3 = arith.constant 0 : index
    %c0_4 = arith.constant 0 : index
    %2 = vector.load %arg2[%c0_2, %c0_3, %c0_4] : memref<1x8x32xf32, #tpu.memory_space<vmem>>, vector<1x8x32xf32>
    %3 = vector.shape_cast %2 : vector<1x8x32xf32> to vector<8x32xf32>
    %4 = arith.addf %1, %3 : vector<8x32xf32>
    %c0_5 = arith.constant 0 : index
    %c0_6 = arith.constant 0 : index
    %c0_7 = arith.constant 0 : index
    %5 = vector.load %arg3[%c0_5, %c0_6, %c0_7] : memref<1x8x32xf32, #tpu.memory_space<vmem>>, vector<1x8x32xf32>
    %6 = vector.shape_cast %5 : vector<1x8x32xf32> to vector<8x32xf32>
    %c0_8 = arith.constant 0 : index
    %c0_9 = arith.constant 0 : index
    %c0_10 = arith.constant 0 : index
    %7 = vector.load %arg4[%c0_8, %c0_9, %c0_10] : memref<1x8x32xf32, #tpu.memory_space<vmem>>, vector<1x8x32xf32>
    %8 = vector.shape_cast %7 : vector<1x8x32xf32> to vector<8x32xf32>
    %9 = arith.addf %6, %8 : vector<8x32xf32>
    %c0_11 = arith.constant 0 : index
    %c0_12 = arith.constant 0 : index
    %10 = vector.load %arg5[%c0_11, %c0_12] : memref<32x96xbf16, #tpu.memory_space<vmem>>, vector<32x96xbf16>
    %c0_13 = arith.constant 0 : index
    %c0_14 = arith.constant 0 : index
    %11 = vector.load %arg6[%c0_13, %c0_14] : memref<1x96xf32, #tpu.memory_space<vmem>>, vector<1x96xf32>
    %12 = arith.truncf %4 : vector<8x32xf32> to vector<8x32xbf16>
    %13 = vector.extract_strided_slice %10 {offsets = [0, 0], sizes = [32, 32], strides = [1, 1]} : vector<32x96xbf16> to vector<32x32xbf16>
    %cst = arith.constant dense<0.000000e+00> : vector<8x32xf32>
    %14 = tpu.matmul %12, %13, %cst {dimension_numbers = #tpu.dot_dimension_numbers<[1], [0], [0], [1], [0, 0, 1, 1], [], []>} : vector<8x32xbf16>, vector<32x32xbf16>, vector<8x32xf32> -> vector<8x32xf32>
    %15 = vector.extract_strided_slice %11 {offsets = [0, 0], sizes = [1, 32], strides = [1, 1]} : vector<1x96xf32> to vector<1x32xf32>
    %16 = vector.broadcast %15 : vector<1x32xf32> to vector<8x32xf32>
    %17 = arith.addf %14, %16 : vector<8x32xf32>
    %18 = arith.truncf %9 : vector<8x32xf32> to vector<8x32xbf16>
    %19 = vector.extract_strided_slice %10 {offsets = [0, 32], sizes = [32, 32], strides = [1, 1]} : vector<32x96xbf16> to vector<32x32xbf16>
    %cst_15 = arith.constant dense<0.000000e+00> : vector<8x32xf32>
    %20 = tpu.matmul %18, %19, %cst_15 {dimension_numbers = #tpu.dot_dimension_numbers<[1], [0], [0], [1], [0, 0, 1, 1], [], []>} : vector<8x32xbf16>, vector<32x32xbf16>, vector<8x32xf32> -> vector<8x32xf32>
    %21 = vector.extract_strided_slice %11 {offsets = [0, 32], sizes = [1, 32], strides = [1, 1]} : vector<1x96xf32> to vector<1x32xf32>
    %22 = vector.broadcast %21 : vector<1x32xf32> to vector<8x32xf32>
    %23 = arith.addf %20, %22 : vector<8x32xf32>
    %24 = arith.truncf %6 : vector<8x32xf32> to vector<8x32xbf16>
    %25 = vector.extract_strided_slice %10 {offsets = [0, 64], sizes = [32, 32], strides = [1, 1]} : vector<32x96xbf16> to vector<32x32xbf16>
    %cst_16 = arith.constant dense<0.000000e+00> : vector<8x32xf32>
    %26 = tpu.matmul %24, %25, %cst_16 {dimension_numbers = #tpu.dot_dimension_numbers<[1], [0], [0], [1], [0, 0, 1, 1], [], []>} : vector<8x32xbf16>, vector<32x32xbf16>, vector<8x32xf32> -> vector<8x32xf32>
    %27 = vector.extract_strided_slice %11 {offsets = [0, 64], sizes = [1, 32], strides = [1, 1]} : vector<1x96xf32> to vector<1x32xf32>
    %28 = vector.broadcast %27 : vector<1x32xf32> to vector<8x32xf32>
    %29 = arith.addf %26, %28 : vector<8x32xf32>
    %30 = vector.extract_strided_slice %17 {offsets = [0, 0], sizes = [8, 8], strides = [1, 1]} : vector<8x32xf32> to vector<8x8xf32>
    %31 = arith.truncf %30 : vector<8x8xf32> to vector<8x8xbf16>
    %32 = vector.extract_strided_slice %23 {offsets = [0, 0], sizes = [8, 8], strides = [1, 1]} : vector<8x32xf32> to vector<8x8xf32>
    %33 = arith.truncf %32 : vector<8x8xf32> to vector<8x8xbf16>
    %34 = vector.extract_strided_slice %29 {offsets = [0, 0], sizes = [8, 8], strides = [1, 1]} : vector<8x32xf32> to vector<8x8xf32>
    %35 = arith.truncf %34 : vector<8x8xf32> to vector<8x8xbf16>
    %cst_17 = arith.constant dense<0.000000e+00> : vector<8x8xf32>
    %36 = tpu.matmul %31, %33, %cst_17 {dimension_numbers = #tpu.dot_dimension_numbers<[1], [1], [0], [0], [0, 0, 1, 0], [], []>} : vector<8x8xbf16>, vector<8x8xbf16>, vector<8x8xf32> -> vector<8x8xf32>
    %cst_18 = arith.constant 0.353553385 : f32
    %37 = vector.broadcast %cst_18 : f32 to vector<8x8xf32>
    %38 = arith.mulf %36, %37 : vector<8x8xf32>
    %cst_19 = arith.constant dense<0xFF800000> : vector<8xf32>
    %39 = vector.multi_reduction <maximumf>, %38, %cst_19 [1] : vector<8x8xf32> to vector<8xf32>
    %40 = vector.shape_cast %39 : vector<8xf32> to vector<8x1xf32>
    %41 = vector.broadcast %40 : vector<8x1xf32> to vector<8x8xf32>
    %42 = arith.subf %38, %41 : vector<8x8xf32>
    %43 = math.exp %42 : vector<8x8xf32>
    %cst_20 = arith.constant dense<0.000000e+00> : vector<8xf32>
    %44 = vector.multi_reduction <add>, %43, %cst_20 [1] : vector<8x8xf32> to vector<8xf32>
    %45 = vector.shape_cast %44 : vector<8xf32> to vector<8x1xf32>
    %46 = tpu.reciprocal %45 {approx = true} : vector<8x1xf32> -> vector<8x1xf32>
    %47 = vector.broadcast %46 : vector<8x1xf32> to vector<8x8xf32>
    %48 = arith.mulf %43, %47 : vector<8x8xf32>
    %49 = arith.truncf %48 : vector<8x8xf32> to vector<8x8xbf16>
    %cst_21 = arith.constant dense<0.000000e+00> : vector<8x8xf32>
    %50 = tpu.matmul %49, %35, %cst_21 {dimension_numbers = #tpu.dot_dimension_numbers<[1], [0], [0], [1], [0, 0, 1, 1], [], []>} : vector<8x8xbf16>, vector<8x8xbf16>, vector<8x8xf32> -> vector<8x8xf32>
    %51 = vector.extract_strided_slice %17 {offsets = [0, 8], sizes = [8, 8], strides = [1, 1]} : vector<8x32xf32> to vector<8x8xf32>
    %52 = arith.truncf %51 : vector<8x8xf32> to vector<8x8xbf16>
    %53 = vector.extract_strided_slice %23 {offsets = [0, 8], sizes = [8, 8], strides = [1, 1]} : vector<8x32xf32> to vector<8x8xf32>
    %54 = arith.truncf %53 : vector<8x8xf32> to vector<8x8xbf16>
    %55 = vector.extract_strided_slice %29 {offsets = [0, 8], sizes = [8, 8], strides = [1, 1]} : vector<8x32xf32> to vector<8x8xf32>
    %56 = arith.truncf %55 : vector<8x8xf32> to vector<8x8xbf16>
    %cst_22 = arith.constant dense<0.000000e+00> : vector<8x8xf32>
    %57 = tpu.matmul %52, %54, %cst_22 {dimension_numbers = #tpu.dot_dimension_numbers<[1], [1], [0], [0], [0, 0, 1, 0], [], []>} : vector<8x8xbf16>, vector<8x8xbf16>, vector<8x8xf32> -> vector<8x8xf32>
    %cst_23 = arith.constant 0.353553385 : f32
    %58 = vector.broadcast %cst_23 : f32 to vector<8x8xf32>
    %59 = arith.mulf %57, %58 : vector<8x8xf32>
    %cst_24 = arith.constant dense<0xFF800000> : vector<8xf32>
    %60 = vector.multi_reduction <maximumf>, %59, %cst_24 [1] : vector<8x8xf32> to vector<8xf32>
    %61 = vector.shape_cast %60 : vector<8xf32> to vector<8x1xf32>
    %62 = vector.broadcast %61 : vector<8x1xf32> to vector<8x8xf32>
    %63 = arith.subf %59, %62 : vector<8x8xf32>
    %64 = math.exp %63 : vector<8x8xf32>
    %cst_25 = arith.constant dense<0.000000e+00> : vector<8xf32>
    %65 = vector.multi_reduction <add>, %64, %cst_25 [1] : vector<8x8xf32> to vector<8xf32>
    %66 = vector.shape_cast %65 : vector<8xf32> to vector<8x1xf32>
    %67 = tpu.reciprocal %66 {approx = true} : vector<8x1xf32> -> vector<8x1xf32>
    %68 = vector.broadcast %67 : vector<8x1xf32> to vector<8x8xf32>
    %69 = arith.mulf %64, %68 : vector<8x8xf32>
    %70 = arith.truncf %69 : vector<8x8xf32> to vector<8x8xbf16>
    %cst_26 = arith.constant dense<0.000000e+00> : vector<8x8xf32>
    %71 = tpu.matmul %70, %56, %cst_26 {dimension_numbers = #tpu.dot_dimension_numbers<[1], [0], [0], [1], [0, 0, 1, 1], [], []>} : vector<8x8xbf16>, vector<8x8xbf16>, vector<8x8xf32> -> vector<8x8xf32>
    %72 = vector.extract_strided_slice %17 {offsets = [0, 16], sizes = [8, 8], strides = [1, 1]} : vector<8x32xf32> to vector<8x8xf32>
    %73 = arith.truncf %72 : vector<8x8xf32> to vector<8x8xbf16>
    %74 = vector.extract_strided_slice %23 {offsets = [0, 16], sizes = [8, 8], strides = [1, 1]} : vector<8x32xf32> to vector<8x8xf32>
    %75 = arith.truncf %74 : vector<8x8xf32> to vector<8x8xbf16>
    %76 = vector.extract_strided_slice %29 {offsets = [0, 16], sizes = [8, 8], strides = [1, 1]} : vector<8x32xf32> to vector<8x8xf32>
    %77 = arith.truncf %76 : vector<8x8xf32> to vector<8x8xbf16>
    %cst_27 = arith.constant dense<0.000000e+00> : vector<8x8xf32>
    %78 = tpu.matmul %73, %75, %cst_27 {dimension_numbers = #tpu.dot_dimension_numbers<[1], [1], [0], [0], [0, 0, 1, 0], [], []>} : vector<8x8xbf16>, vector<8x8xbf16>, vector<8x8xf32> -> vector<8x8xf32>
    %cst_28 = arith.constant 0.353553385 : f32
    %79 = vector.broadcast %cst_28 : f32 to vector<8x8xf32>
    %80 = arith.mulf %78, %79 : vector<8x8xf32>
    %cst_29 = arith.constant dense<0xFF800000> : vector<8xf32>
    %81 = vector.multi_reduction <maximumf>, %80, %cst_29 [1] : vector<8x8xf32> to vector<8xf32>
    %82 = vector.shape_cast %81 : vector<8xf32> to vector<8x1xf32>
    %83 = vector.broadcast %82 : vector<8x1xf32> to vector<8x8xf32>
    %84 = arith.subf %80, %83 : vector<8x8xf32>
    %85 = math.exp %84 : vector<8x8xf32>
    %cst_30 = arith.constant dense<0.000000e+00> : vector<8xf32>
    %86 = vector.multi_reduction <add>, %85, %cst_30 [1] : vector<8x8xf32> to vector<8xf32>
    %87 = vector.shape_cast %86 : vector<8xf32> to vector<8x1xf32>
    %88 = tpu.reciprocal %87 {approx = true} : vector<8x1xf32> -> vector<8x1xf32>
    %89 = vector.broadcast %88 : vector<8x1xf32> to vector<8x8xf32>
    %90 = arith.mulf %85, %89 : vector<8x8xf32>
    %91 = arith.truncf %90 : vector<8x8xf32> to vector<8x8xbf16>
    %cst_31 = arith.constant dense<0.000000e+00> : vector<8x8xf32>
    %92 = tpu.matmul %91, %77, %cst_31 {dimension_numbers = #tpu.dot_dimension_numbers<[1], [0], [0], [1], [0, 0, 1, 1], [], []>} : vector<8x8xbf16>, vector<8x8xbf16>, vector<8x8xf32> -> vector<8x8xf32>
    %93 = vector.extract_strided_slice %17 {offsets = [0, 24], sizes = [8, 8], strides = [1, 1]} : vector<8x32xf32> to vector<8x8xf32>
    %94 = arith.truncf %93 : vector<8x8xf32> to vector<8x8xbf16>
    %95 = vector.extract_strided_slice %23 {offsets = [0, 24], sizes = [8, 8], strides = [1, 1]} : vector<8x32xf32> to vector<8x8xf32>
    %96 = arith.truncf %95 : vector<8x8xf32> to vector<8x8xbf16>
    %97 = vector.extract_strided_slice %29 {offsets = [0, 24], sizes = [8, 8], strides = [1, 1]} : vector<8x32xf32> to vector<8x8xf32>
    %98 = arith.truncf %97 : vector<8x8xf32> to vector<8x8xbf16>
    %cst_32 = arith.constant dense<0.000000e+00> : vector<8x8xf32>
    %99 = tpu.matmul %94, %96, %cst_32 {dimension_numbers = #tpu.dot_dimension_numbers<[1], [1], [0], [0], [0, 0, 1, 0], [], []>} : vector<8x8xbf16>, vector<8x8xbf16>, vector<8x8xf32> -> vector<8x8xf32>
    %cst_33 = arith.constant 0.353553385 : f32
    %100 = vector.broadcast %cst_33 : f32 to vector<8x8xf32>
    %101 = arith.mulf %99, %100 : vector<8x8xf32>
    %cst_34 = arith.constant dense<0xFF800000> : vector<8xf32>
    %102 = vector.multi_reduction <maximumf>, %101, %cst_34 [1] : vector<8x8xf32> to vector<8xf32>
    %103 = vector.shape_cast %102 : vector<8xf32> to vector<8x1xf32>
    %104 = vector.broadcast %103 : vector<8x1xf32> to vector<8x8xf32>
    %105 = arith.subf %101, %104 : vector<8x8xf32>
    %106 = math.exp %105 : vector<8x8xf32>
    %cst_35 = arith.constant dense<0.000000e+00> : vector<8xf32>
    %107 = vector.multi_reduction <add>, %106, %cst_35 [1] : vector<8x8xf32> to vector<8xf32>
    %108 = vector.shape_cast %107 : vector<8xf32> to vector<8x1xf32>
    %109 = tpu.reciprocal %108 {approx = true} : vector<8x1xf32> -> vector<8x1xf32>
    %110 = vector.broadcast %109 : vector<8x1xf32> to vector<8x8xf32>
    %111 = arith.mulf %106, %110 : vector<8x8xf32>
    %112 = arith.truncf %111 : vector<8x8xf32> to vector<8x8xbf16>
    %cst_36 = arith.constant dense<0.000000e+00> : vector<8x8xf32>
    %113 = tpu.matmul %112, %98, %cst_36 {dimension_numbers = #tpu.dot_dimension_numbers<[1], [0], [0], [1], [0, 0, 1, 1], [], []>} : vector<8x8xbf16>, vector<8x8xbf16>, vector<8x8xf32> -> vector<8x8xf32>
    %114 = tpu.concatenate %50, %71, %92, %113 in 1 : vector<8x8xf32>, vector<8x8xf32>, vector<8x8xf32>, vector<8x8xf32> -> vector<8x32xf32>
    %115 = arith.truncf %114 : vector<8x32xf32> to vector<8x32xbf16>
    %c0_37 = arith.constant 0 : index
    %c0_38 = arith.constant 0 : index
    %116 = vector.load %arg7[%c0_37, %c0_38] : memref<32x32xbf16, #tpu.memory_space<vmem>>, vector<32x32xbf16>
    %cst_39 = arith.constant dense<0.000000e+00> : vector<8x32xf32>
    %117 = tpu.matmul %115, %116, %cst_39 {dimension_numbers = #tpu.dot_dimension_numbers<[1], [0], [0], [1], [0, 0, 1, 1], [], []>} : vector<8x32xbf16>, vector<32x32xbf16>, vector<8x32xf32> -> vector<8x32xf32>
    %c0_40 = arith.constant 0 : index
    %c0_41 = arith.constant 0 : index
    %118 = vector.load %arg8[%c0_40, %c0_41] : memref<1x32xf32, #tpu.memory_space<vmem>>, vector<1x32xf32>
    %119 = vector.broadcast %118 : vector<1x32xf32> to vector<8x32xf32>
    %120 = arith.addf %117, %119 : vector<8x32xf32>
    %121 = arith.addf %1, %120 : vector<8x32xf32>
    %c0_42 = arith.constant 0 : index
    %c0_43 = arith.constant 0 : index
    %122 = vector.load %arg9[%c0_42, %c0_43] : memref<1x32xf32, #tpu.memory_space<vmem>>, vector<1x32xf32>
    %c0_44 = arith.constant 0 : index
    %c0_45 = arith.constant 0 : index
    %123 = vector.load %arg10[%c0_44, %c0_45] : memref<1x32xf32, #tpu.memory_space<vmem>>, vector<1x32xf32>
    %cst_46 = arith.constant dense<0.000000e+00> : vector<8xf32>
    %124 = vector.multi_reduction <add>, %121, %cst_46 [1] : vector<8x32xf32> to vector<8xf32>
    %125 = vector.shape_cast %124 : vector<8xf32> to vector<8x1xf32>
    %cst_47 = arith.constant 3.200000e+01 : f32
    %126 = vector.broadcast %cst_47 : f32 to vector<8x1xf32>
    %127 = arith.divf %125, %126 : vector<8x1xf32>
    %128 = vector.broadcast %127 : vector<8x1xf32> to vector<8x32xf32>
    %129 = arith.subf %121, %128 : vector<8x32xf32>
    %130 = arith.mulf %129, %129 : vector<8x32xf32>
    %cst_48 = arith.constant dense<0.000000e+00> : vector<8xf32>
    %131 = vector.multi_reduction <add>, %130, %cst_48 [1] : vector<8x32xf32> to vector<8xf32>
    %132 = vector.shape_cast %131 : vector<8xf32> to vector<8x1xf32>
    %cst_49 = arith.constant 3.200000e+01 : f32
    %133 = vector.broadcast %cst_49 : f32 to vector<8x1xf32>
    %134 = arith.divf %132, %133 : vector<8x1xf32>
    %135 = vector.broadcast %127 : vector<8x1xf32> to vector<8x32xf32>
    %136 = arith.subf %121, %135 : vector<8x32xf32>
    %cst_50 = arith.constant 9.99999974E-6 : f32
    %137 = vector.broadcast %cst_50 : f32 to vector<8x1xf32>
    %138 = arith.addf %134, %137 : vector<8x1xf32>
    %139 = math.rsqrt %138 : vector<8x1xf32>
    %140 = vector.broadcast %139 : vector<8x1xf32> to vector<8x32xf32>
    %141 = arith.mulf %136, %140 : vector<8x32xf32>
    %142 = vector.broadcast %122 : vector<1x32xf32> to vector<8x32xf32>
    %143 = arith.mulf %141, %142 : vector<8x32xf32>
    %144 = vector.broadcast %123 : vector<1x32xf32> to vector<8x32xf32>
    %145 = arith.addf %143, %144 : vector<8x32xf32>
    %c0_51 = arith.constant 0 : index
    %c0_52 = arith.constant 0 : index
    %c0_53 = arith.constant 0 : index
    %146 = vector.load %arg11[%c0_51, %c0_52, %c0_53] : memref<1x8x32xf32, #tpu.memory_space<vmem>>, vector<1x8x32xf32>
    %147 = vector.shape_cast %146 : vector<1x8x32xf32> to vector<8x32xf32>
    %148 = vector.shape_cast %145 : vector<8x32xf32> to vector<1x8x32xf32>
    tpu.vector_store %arg11[%c0_51, %c0_52, %c0_53], %148 {strides = array<i32>} : memref<1x8x32xf32, #tpu.memory_space<vmem>>, vector<1x8x32xf32>,
    return
  }
  func.func @transform_0(%arg0: i32) -> (i32, i32, i32) {
    %c0_i32 = arith.constant 0 : i32
    %c0_i32_0 = arith.constant 0 : i32
    %c0_i32_1 = arith.constant 0 : i32
    return %arg0, %c0_i32, %c0_i32_0 : i32, i32, i32
  }
  func.func @transform_1(%arg0: i32) -> (i32, i32, i32) {
    %c0_i32 = arith.constant 0 : i32
    %c0_i32_0 = arith.constant 0 : i32
    %c0_i32_1 = arith.constant 0 : i32
    return %arg0, %c0_i32, %c0_i32_0 : i32, i32, i32
  }
  func.func @transform_2(%arg0: i32) -> (i32, i32, i32) {
    %c0_i32 = arith.constant 0 : i32
    %c0_i32_0 = arith.constant 0 : i32
    %c0_i32_1 = arith.constant 0 : i32
    return %arg0, %c0_i32, %c0_i32_0 : i32, i32, i32
  }
  func.func @transform_3(%arg0: i32) -> (i32, i32, i32) {
    %c0_i32 = arith.constant 0 : i32
    %c0_i32_0 = arith.constant 0 : i32
    %c0_i32_1 = arith.constant 0 : i32
    return %arg0, %c0_i32, %c0_i32_0 : i32, i32, i32
  }
  func.func @transform_4(%arg0: i32) -> (i32, i32) {
    %c0_i32 = arith.constant 0 : i32
    %c0_i32_0 = arith.constant 0 : i32
    %c0_i32_1 = arith.constant 0 : i32
    return %c0_i32, %c0_i32_0 : i32, i32
  }
  func.func @transform_5(%arg0: i32) -> (i32, i32) {
    %c0_i32 = arith.constant 0 : i32
    %c0_i32_0 = arith.constant 0 : i32
    %c0_i32_1 = arith.constant 0 : i32
    return %c0_i32, %c0_i32_0 : i32, i32
  }
  func.func @transform_6(%arg0: i32) -> (i32, i32) {
    %c0_i32 = arith.constant 0 : i32
    %c0_i32_0 = arith.constant 0 : i32
    %c0_i32_1 = arith.constant 0 : i32
    return %c0_i32, %c0_i32_0 : i32, i32
  }
  func.func @transform_7(%arg0: i32) -> (i32, i32) {
    %c0_i32 = arith.constant 0 : i32
    %c0_i32_0 = arith.constant 0 : i32
    %c0_i32_1 = arith.constant 0 : i32
    return %c0_i32, %c0_i32_0 : i32, i32
  }
  func.func @transform_8(%arg0: i32) -> (i32, i32) {
    %c0_i32 = arith.constant 0 : i32
    %c0_i32_0 = arith.constant 0 : i32
    %c0_i32_1 = arith.constant 0 : i32
    return %c0_i32, %c0_i32_0 : i32, i32
  }
  func.func @transform_9(%arg0: i32) -> (i32, i32) {
    %c0_i32 = arith.constant 0 : i32
    %c0_i32_0 = arith.constant 0 : i32
    %c0_i32_1 = arith.constant 0 : i32
    return %c0_i32, %c0_i32_0 : i32, i32
  }
  func.func @transform_10(%arg0: i32) -> (i32, i32, i32) {
    %c0_i32 = arith.constant 0 : i32
    %c0_i32_0 = arith.constant 0 : i32
    %c0_i32_1 = arith.constant 0 : i32
    return %arg0, %c0_i32, %c0_i32_0 : i32, i32, i32
  }
}

module attributes {stable_mosaic.version = 11 : i64} {
  func.func @_mha_ln_kernel(%arg0: i32, %arg1: memref<1x8x32xf32, #tpu.memory_space<vmem>>, %arg2: memref<1x8x32xf32, #tpu.memory_space<vmem>>, %arg3: memref<1x40x32xf32, #tpu.memory_space<vmem>>, %arg4: memref<1x40x32xf32, #tpu.memory_space<vmem>>, %arg5: memref<32x96xbf16, #tpu.memory_space<vmem>>, %arg6: memref<1x96xf32, #tpu.memory_space<vmem>>, %arg7: memref<32x32xbf16, #tpu.memory_space<vmem>>, %arg8: memref<1x32xf32, #tpu.memory_space<vmem>>, %arg9: memref<1x32xf32, #tpu.memory_space<vmem>>, %arg10: memref<1x32xf32, #tpu.memory_space<vmem>>, %arg11: memref<1x8x32xf32, #tpu.memory_space<vmem>>) attributes {dimension_semantics = [#tpu.dimension_semantics<parallel>], iteration_bounds = array<i64: 2>, scalar_prefetch = 0 : i64, scratch_operands = 0 : i64, tpu.core_type = #tpu.core_type<tc>, window_params = [{transform_indices = @transform_0, window_bounds = array<i64: 1, 8, 32>}, {transform_indices = @transform_1, window_bounds = array<i64: 1, 8, 32>}, {transform_indices = @transform_2, window_bounds = array<i64: 1, 40, 32>}, {transform_indices = @transform_3, window_bounds = array<i64: 1, 40, 32>}, {pipeline_mode = #tpu.pipeline_mode<synchronous>, transform_indices = @transform_4, window_bounds = array<i64: 32, 96>}, {pipeline_mode = #tpu.pipeline_mode<synchronous>, transform_indices = @transform_5, window_bounds = array<i64: 1, 96>}, {pipeline_mode = #tpu.pipeline_mode<synchronous>, transform_indices = @transform_6, window_bounds = array<i64: 32, 32>}, {pipeline_mode = #tpu.pipeline_mode<synchronous>, transform_indices = @transform_7, window_bounds = array<i64: 1, 32>}, {pipeline_mode = #tpu.pipeline_mode<synchronous>, transform_indices = @transform_8, window_bounds = array<i64: 1, 32>}, {pipeline_mode = #tpu.pipeline_mode<synchronous>, transform_indices = @transform_9, window_bounds = array<i64: 1, 32>}, {transform_indices = @transform_10, window_bounds = array<i64: 1, 8, 32>}]} {
    %c0 = arith.constant 0 : index
    %c0_0 = arith.constant 0 : index
    %c0_1 = arith.constant 0 : index
    %0 = vector.load %arg1[%c0, %c0_0, %c0_1] : memref<1x8x32xf32, #tpu.memory_space<vmem>>, vector<1x8x32xf32>
    %1 = vector.shape_cast %0 : vector<1x8x32xf32> to vector<8x32xf32>
    %c0_2 = arith.constant 0 : index
    %c0_3 = arith.constant 0 : index
    %c0_4 = arith.constant 0 : index
    %2 = vector.load %arg2[%c0_2, %c0_3, %c0_4] : memref<1x8x32xf32, #tpu.memory_space<vmem>>, vector<1x8x32xf32>
    %3 = vector.shape_cast %2 : vector<1x8x32xf32> to vector<8x32xf32>
    %4 = arith.addf %1, %3 : vector<8x32xf32>
    %c0_5 = arith.constant 0 : index
    %c0_6 = arith.constant 0 : index
    %c0_7 = arith.constant 0 : index
    %5 = vector.load %arg3[%c0_5, %c0_6, %c0_7] : memref<1x40x32xf32, #tpu.memory_space<vmem>>, vector<1x40x32xf32>
    %6 = vector.shape_cast %5 : vector<1x40x32xf32> to vector<40x32xf32>
    %c0_8 = arith.constant 0 : index
    %c0_9 = arith.constant 0 : index
    %c0_10 = arith.constant 0 : index
    %7 = vector.load %arg4[%c0_8, %c0_9, %c0_10] : memref<1x40x32xf32, #tpu.memory_space<vmem>>, vector<1x40x32xf32>
    %8 = vector.shape_cast %7 : vector<1x40x32xf32> to vector<40x32xf32>
    %9 = arith.addf %6, %8 : vector<40x32xf32>
    %c0_11 = arith.constant 0 : index
    %c0_12 = arith.constant 0 : index
    %10 = vector.load %arg5[%c0_11, %c0_12] : memref<32x96xbf16, #tpu.memory_space<vmem>>, vector<32x96xbf16>
    %c0_13 = arith.constant 0 : index
    %c0_14 = arith.constant 0 : index
    %11 = vector.load %arg6[%c0_13, %c0_14] : memref<1x96xf32, #tpu.memory_space<vmem>>, vector<1x96xf32>
    %12 = arith.truncf %4 : vector<8x32xf32> to vector<8x32xbf16>
    %13 = vector.extract_strided_slice %10 {offsets = [0, 0], sizes = [32, 32], strides = [1, 1]} : vector<32x96xbf16> to vector<32x32xbf16>
    %cst = arith.constant dense<0.000000e+00> : vector<8x32xf32>
    %14 = tpu.matmul %12, %13, %cst {dimension_numbers = #tpu.dot_dimension_numbers<[1], [0], [0], [1], [0, 0, 1, 1], [], []>} : vector<8x32xbf16>, vector<32x32xbf16>, vector<8x32xf32> -> vector<8x32xf32>
    %15 = vector.extract_strided_slice %11 {offsets = [0, 0], sizes = [1, 32], strides = [1, 1]} : vector<1x96xf32> to vector<1x32xf32>
    %16 = vector.broadcast %15 : vector<1x32xf32> to vector<8x32xf32>
    %17 = arith.addf %14, %16 : vector<8x32xf32>
    %18 = arith.truncf %9 : vector<40x32xf32> to vector<40x32xbf16>
    %19 = vector.extract_strided_slice %10 {offsets = [0, 32], sizes = [32, 32], strides = [1, 1]} : vector<32x96xbf16> to vector<32x32xbf16>
    %cst_15 = arith.constant dense<0.000000e+00> : vector<40x32xf32>
    %20 = tpu.matmul %18, %19, %cst_15 {dimension_numbers = #tpu.dot_dimension_numbers<[1], [0], [0], [1], [0, 0, 1, 1], [], []>} : vector<40x32xbf16>, vector<32x32xbf16>, vector<40x32xf32> -> vector<40x32xf32>
    %21 = vector.extract_strided_slice %11 {offsets = [0, 32], sizes = [1, 32], strides = [1, 1]} : vector<1x96xf32> to vector<1x32xf32>
    %22 = vector.broadcast %21 : vector<1x32xf32> to vector<40x32xf32>
    %23 = arith.addf %20, %22 : vector<40x32xf32>
    %24 = arith.truncf %6 : vector<40x32xf32> to vector<40x32xbf16>
    %25 = vector.extract_strided_slice %10 {offsets = [0, 64], sizes = [32, 32], strides = [1, 1]} : vector<32x96xbf16> to vector<32x32xbf16>
    %cst_16 = arith.constant dense<0.000000e+00> : vector<40x32xf32>
    %26 = tpu.matmul %24, %25, %cst_16 {dimension_numbers = #tpu.dot_dimension_numbers<[1], [0], [0], [1], [0, 0, 1, 1], [], []>} : vector<40x32xbf16>, vector<32x32xbf16>, vector<40x32xf32> -> vector<40x32xf32>
    %27 = vector.extract_strided_slice %11 {offsets = [0, 64], sizes = [1, 32], strides = [1, 1]} : vector<1x96xf32> to vector<1x32xf32>
    %28 = vector.broadcast %27 : vector<1x32xf32> to vector<40x32xf32>
    %29 = arith.addf %26, %28 : vector<40x32xf32>
    %30 = vector.extract_strided_slice %17 {offsets = [0, 0], sizes = [8, 8], strides = [1, 1]} : vector<8x32xf32> to vector<8x8xf32>
    %31 = arith.truncf %30 : vector<8x8xf32> to vector<8x8xbf16>
    %32 = vector.extract_strided_slice %23 {offsets = [0, 0], sizes = [40, 8], strides = [1, 1]} : vector<40x32xf32> to vector<40x8xf32>
    %33 = arith.truncf %32 : vector<40x8xf32> to vector<40x8xbf16>
    %34 = vector.extract_strided_slice %29 {offsets = [0, 0], sizes = [40, 8], strides = [1, 1]} : vector<40x32xf32> to vector<40x8xf32>
    %35 = arith.truncf %34 : vector<40x8xf32> to vector<40x8xbf16>
    %cst_17 = arith.constant dense<0.000000e+00> : vector<8x40xf32>
    %36 = tpu.matmul %31, %33, %cst_17 {dimension_numbers = #tpu.dot_dimension_numbers<[1], [1], [0], [0], [0, 0, 1, 0], [], []>} : vector<8x8xbf16>, vector<40x8xbf16>, vector<8x40xf32> -> vector<8x40xf32>
    %cst_18 = arith.constant 0.353553385 : f32
    %37 = vector.broadcast %cst_18 : f32 to vector<8x40xf32>
    %38 = arith.mulf %36, %37 : vector<8x40xf32>
    %cst_19 = arith.constant dense<0xFF800000> : vector<8xf32>
    %39 = vector.multi_reduction <maximumf>, %38, %cst_19 [1] : vector<8x40xf32> to vector<8xf32>
    %40 = vector.shape_cast %39 : vector<8xf32> to vector<8x1xf32>
    %41 = vector.broadcast %40 : vector<8x1xf32> to vector<8x40xf32>
    %42 = arith.subf %38, %41 : vector<8x40xf32>
    %43 = math.exp %42 : vector<8x40xf32>
    %cst_20 = arith.constant dense<0.000000e+00> : vector<8xf32>
    %44 = vector.multi_reduction <add>, %43, %cst_20 [1] : vector<8x40xf32> to vector<8xf32>
    %45 = vector.shape_cast %44 : vector<8xf32> to vector<8x1xf32>
    %46 = tpu.reciprocal %45 {approx = true} : vector<8x1xf32> -> vector<8x1xf32>
    %47 = vector.broadcast %46 : vector<8x1xf32> to vector<8x40xf32>
    %48 = arith.mulf %43, %47 : vector<8x40xf32>
    %49 = arith.truncf %48 : vector<8x40xf32> to vector<8x40xbf16>
    %cst_21 = arith.constant dense<0.000000e+00> : vector<8x8xf32>
    %50 = tpu.matmul %49, %35, %cst_21 {dimension_numbers = #tpu.dot_dimension_numbers<[1], [0], [0], [1], [0, 0, 1, 1], [], []>} : vector<8x40xbf16>, vector<40x8xbf16>, vector<8x8xf32> -> vector<8x8xf32>
    %51 = vector.extract_strided_slice %17 {offsets = [0, 8], sizes = [8, 8], strides = [1, 1]} : vector<8x32xf32> to vector<8x8xf32>
    %52 = arith.truncf %51 : vector<8x8xf32> to vector<8x8xbf16>
    %53 = vector.extract_strided_slice %23 {offsets = [0, 8], sizes = [40, 8], strides = [1, 1]} : vector<40x32xf32> to vector<40x8xf32>
    %54 = arith.truncf %53 : vector<40x8xf32> to vector<40x8xbf16>
    %55 = vector.extract_strided_slice %29 {offsets = [0, 8], sizes = [40, 8], strides = [1, 1]} : vector<40x32xf32> to vector<40x8xf32>
    %56 = arith.truncf %55 : vector<40x8xf32> to vector<40x8xbf16>
    %cst_22 = arith.constant dense<0.000000e+00> : vector<8x40xf32>
    %57 = tpu.matmul %52, %54, %cst_22 {dimension_numbers = #tpu.dot_dimension_numbers<[1], [1], [0], [0], [0, 0, 1, 0], [], []>} : vector<8x8xbf16>, vector<40x8xbf16>, vector<8x40xf32> -> vector<8x40xf32>
    %cst_23 = arith.constant 0.353553385 : f32
    %58 = vector.broadcast %cst_23 : f32 to vector<8x40xf32>
    %59 = arith.mulf %57, %58 : vector<8x40xf32>
    %cst_24 = arith.constant dense<0xFF800000> : vector<8xf32>
    %60 = vector.multi_reduction <maximumf>, %59, %cst_24 [1] : vector<8x40xf32> to vector<8xf32>
    %61 = vector.shape_cast %60 : vector<8xf32> to vector<8x1xf32>
    %62 = vector.broadcast %61 : vector<8x1xf32> to vector<8x40xf32>
    %63 = arith.subf %59, %62 : vector<8x40xf32>
    %64 = math.exp %63 : vector<8x40xf32>
    %cst_25 = arith.constant dense<0.000000e+00> : vector<8xf32>
    %65 = vector.multi_reduction <add>, %64, %cst_25 [1] : vector<8x40xf32> to vector<8xf32>
    %66 = vector.shape_cast %65 : vector<8xf32> to vector<8x1xf32>
    %67 = tpu.reciprocal %66 {approx = true} : vector<8x1xf32> -> vector<8x1xf32>
    %68 = vector.broadcast %67 : vector<8x1xf32> to vector<8x40xf32>
    %69 = arith.mulf %64, %68 : vector<8x40xf32>
    %70 = arith.truncf %69 : vector<8x40xf32> to vector<8x40xbf16>
    %cst_26 = arith.constant dense<0.000000e+00> : vector<8x8xf32>
    %71 = tpu.matmul %70, %56, %cst_26 {dimension_numbers = #tpu.dot_dimension_numbers<[1], [0], [0], [1], [0, 0, 1, 1], [], []>} : vector<8x40xbf16>, vector<40x8xbf16>, vector<8x8xf32> -> vector<8x8xf32>
    %72 = vector.extract_strided_slice %17 {offsets = [0, 16], sizes = [8, 8], strides = [1, 1]} : vector<8x32xf32> to vector<8x8xf32>
    %73 = arith.truncf %72 : vector<8x8xf32> to vector<8x8xbf16>
    %74 = vector.extract_strided_slice %23 {offsets = [0, 16], sizes = [40, 8], strides = [1, 1]} : vector<40x32xf32> to vector<40x8xf32>
    %75 = arith.truncf %74 : vector<40x8xf32> to vector<40x8xbf16>
    %76 = vector.extract_strided_slice %29 {offsets = [0, 16], sizes = [40, 8], strides = [1, 1]} : vector<40x32xf32> to vector<40x8xf32>
    %77 = arith.truncf %76 : vector<40x8xf32> to vector<40x8xbf16>
    %cst_27 = arith.constant dense<0.000000e+00> : vector<8x40xf32>
    %78 = tpu.matmul %73, %75, %cst_27 {dimension_numbers = #tpu.dot_dimension_numbers<[1], [1], [0], [0], [0, 0, 1, 0], [], []>} : vector<8x8xbf16>, vector<40x8xbf16>, vector<8x40xf32> -> vector<8x40xf32>
    %cst_28 = arith.constant 0.353553385 : f32
    %79 = vector.broadcast %cst_28 : f32 to vector<8x40xf32>
    %80 = arith.mulf %78, %79 : vector<8x40xf32>
    %cst_29 = arith.constant dense<0xFF800000> : vector<8xf32>
    %81 = vector.multi_reduction <maximumf>, %80, %cst_29 [1] : vector<8x40xf32> to vector<8xf32>
    %82 = vector.shape_cast %81 : vector<8xf32> to vector<8x1xf32>
    %83 = vector.broadcast %82 : vector<8x1xf32> to vector<8x40xf32>
    %84 = arith.subf %80, %83 : vector<8x40xf32>
    %85 = math.exp %84 : vector<8x40xf32>
    %cst_30 = arith.constant dense<0.000000e+00> : vector<8xf32>
    %86 = vector.multi_reduction <add>, %85, %cst_30 [1] : vector<8x40xf32> to vector<8xf32>
    %87 = vector.shape_cast %86 : vector<8xf32> to vector<8x1xf32>
    %88 = tpu.reciprocal %87 {approx = true} : vector<8x1xf32> -> vector<8x1xf32>
    %89 = vector.broadcast %88 : vector<8x1xf32> to vector<8x40xf32>
    %90 = arith.mulf %85, %89 : vector<8x40xf32>
    %91 = arith.truncf %90 : vector<8x40xf32> to vector<8x40xbf16>
    %cst_31 = arith.constant dense<0.000000e+00> : vector<8x8xf32>
    %92 = tpu.matmul %91, %77, %cst_31 {dimension_numbers = #tpu.dot_dimension_numbers<[1], [0], [0], [1], [0, 0, 1, 1], [], []>} : vector<8x40xbf16>, vector<40x8xbf16>, vector<8x8xf32> -> vector<8x8xf32>
    %93 = vector.extract_strided_slice %17 {offsets = [0, 24], sizes = [8, 8], strides = [1, 1]} : vector<8x32xf32> to vector<8x8xf32>
    %94 = arith.truncf %93 : vector<8x8xf32> to vector<8x8xbf16>
    %95 = vector.extract_strided_slice %23 {offsets = [0, 24], sizes = [40, 8], strides = [1, 1]} : vector<40x32xf32> to vector<40x8xf32>
    %96 = arith.truncf %95 : vector<40x8xf32> to vector<40x8xbf16>
    %97 = vector.extract_strided_slice %29 {offsets = [0, 24], sizes = [40, 8], strides = [1, 1]} : vector<40x32xf32> to vector<40x8xf32>
    %98 = arith.truncf %97 : vector<40x8xf32> to vector<40x8xbf16>
    %cst_32 = arith.constant dense<0.000000e+00> : vector<8x40xf32>
    %99 = tpu.matmul %94, %96, %cst_32 {dimension_numbers = #tpu.dot_dimension_numbers<[1], [1], [0], [0], [0, 0, 1, 0], [], []>} : vector<8x8xbf16>, vector<40x8xbf16>, vector<8x40xf32> -> vector<8x40xf32>
    %cst_33 = arith.constant 0.353553385 : f32
    %100 = vector.broadcast %cst_33 : f32 to vector<8x40xf32>
    %101 = arith.mulf %99, %100 : vector<8x40xf32>
    %cst_34 = arith.constant dense<0xFF800000> : vector<8xf32>
    %102 = vector.multi_reduction <maximumf>, %101, %cst_34 [1] : vector<8x40xf32> to vector<8xf32>
    %103 = vector.shape_cast %102 : vector<8xf32> to vector<8x1xf32>
    %104 = vector.broadcast %103 : vector<8x1xf32> to vector<8x40xf32>
    %105 = arith.subf %101, %104 : vector<8x40xf32>
    %106 = math.exp %105 : vector<8x40xf32>
    %cst_35 = arith.constant dense<0.000000e+00> : vector<8xf32>
    %107 = vector.multi_reduction <add>, %106, %cst_35 [1] : vector<8x40xf32> to vector<8xf32>
    %108 = vector.shape_cast %107 : vector<8xf32> to vector<8x1xf32>
    %109 = tpu.reciprocal %108 {approx = true} : vector<8x1xf32> -> vector<8x1xf32>
    %110 = vector.broadcast %109 : vector<8x1xf32> to vector<8x40xf32>
    %111 = arith.mulf %106, %110 : vector<8x40xf32>
    %112 = arith.truncf %111 : vector<8x40xf32> to vector<8x40xbf16>
    %cst_36 = arith.constant dense<0.000000e+00> : vector<8x8xf32>
    %113 = tpu.matmul %112, %98, %cst_36 {dimension_numbers = #tpu.dot_dimension_numbers<[1], [0], [0], [1], [0, 0, 1, 1], [], []>} : vector<8x40xbf16>, vector<40x8xbf16>, vector<8x8xf32> -> vector<8x8xf32>
    %114 = tpu.concatenate %50, %71, %92, %113 in 1 : vector<8x8xf32>, vector<8x8xf32>, vector<8x8xf32>, vector<8x8xf32> -> vector<8x32xf32>
    %115 = arith.truncf %114 : vector<8x32xf32> to vector<8x32xbf16>
    %c0_37 = arith.constant 0 : index
    %c0_38 = arith.constant 0 : index
    %116 = vector.load %arg7[%c0_37, %c0_38] : memref<32x32xbf16, #tpu.memory_space<vmem>>, vector<32x32xbf16>
    %cst_39 = arith.constant dense<0.000000e+00> : vector<8x32xf32>
    %117 = tpu.matmul %115, %116, %cst_39 {dimension_numbers = #tpu.dot_dimension_numbers<[1], [0], [0], [1], [0, 0, 1, 1], [], []>} : vector<8x32xbf16>, vector<32x32xbf16>, vector<8x32xf32> -> vector<8x32xf32>
    %c0_40 = arith.constant 0 : index
    %c0_41 = arith.constant 0 : index
    %118 = vector.load %arg8[%c0_40, %c0_41] : memref<1x32xf32, #tpu.memory_space<vmem>>, vector<1x32xf32>
    %119 = vector.broadcast %118 : vector<1x32xf32> to vector<8x32xf32>
    %120 = arith.addf %117, %119 : vector<8x32xf32>
    %121 = arith.addf %1, %120 : vector<8x32xf32>
    %c0_42 = arith.constant 0 : index
    %c0_43 = arith.constant 0 : index
    %122 = vector.load %arg9[%c0_42, %c0_43] : memref<1x32xf32, #tpu.memory_space<vmem>>, vector<1x32xf32>
    %c0_44 = arith.constant 0 : index
    %c0_45 = arith.constant 0 : index
    %123 = vector.load %arg10[%c0_44, %c0_45] : memref<1x32xf32, #tpu.memory_space<vmem>>, vector<1x32xf32>
    %cst_46 = arith.constant dense<0.000000e+00> : vector<8xf32>
    %124 = vector.multi_reduction <add>, %121, %cst_46 [1] : vector<8x32xf32> to vector<8xf32>
    %125 = vector.shape_cast %124 : vector<8xf32> to vector<8x1xf32>
    %cst_47 = arith.constant 3.200000e+01 : f32
    %126 = vector.broadcast %cst_47 : f32 to vector<8x1xf32>
    %127 = arith.divf %125, %126 : vector<8x1xf32>
    %128 = vector.broadcast %127 : vector<8x1xf32> to vector<8x32xf32>
    %129 = arith.subf %121, %128 : vector<8x32xf32>
    %130 = arith.mulf %129, %129 : vector<8x32xf32>
    %cst_48 = arith.constant dense<0.000000e+00> : vector<8xf32>
    %131 = vector.multi_reduction <add>, %130, %cst_48 [1] : vector<8x32xf32> to vector<8xf32>
    %132 = vector.shape_cast %131 : vector<8xf32> to vector<8x1xf32>
    %cst_49 = arith.constant 3.200000e+01 : f32
    %133 = vector.broadcast %cst_49 : f32 to vector<8x1xf32>
    %134 = arith.divf %132, %133 : vector<8x1xf32>
    %135 = vector.broadcast %127 : vector<8x1xf32> to vector<8x32xf32>
    %136 = arith.subf %121, %135 : vector<8x32xf32>
    %cst_50 = arith.constant 9.99999974E-6 : f32
    %137 = vector.broadcast %cst_50 : f32 to vector<8x1xf32>
    %138 = arith.addf %134, %137 : vector<8x1xf32>
    %139 = math.rsqrt %138 : vector<8x1xf32>
    %140 = vector.broadcast %139 : vector<8x1xf32> to vector<8x32xf32>
    %141 = arith.mulf %136, %140 : vector<8x32xf32>
    %142 = vector.broadcast %122 : vector<1x32xf32> to vector<8x32xf32>
    %143 = arith.mulf %141, %142 : vector<8x32xf32>
    %144 = vector.broadcast %123 : vector<1x32xf32> to vector<8x32xf32>
    %145 = arith.addf %143, %144 : vector<8x32xf32>
    %c0_51 = arith.constant 0 : index
    %c0_52 = arith.constant 0 : index
    %c0_53 = arith.constant 0 : index
    %146 = vector.load %arg11[%c0_51, %c0_52, %c0_53] : memref<1x8x32xf32, #tpu.memory_space<vmem>>, vector<1x8x32xf32>
    %147 = vector.shape_cast %146 : vector<1x8x32xf32> to vector<8x32xf32>
    %148 = vector.shape_cast %145 : vector<8x32xf32> to vector<1x8x32xf32>
    tpu.vector_store %arg11[%c0_51, %c0_52, %c0_53], %148 {strides = array<i32>} : memref<1x8x32xf32, #tpu.memory_space<vmem>>, vector<1x8x32xf32>,
    return
  }
  func.func @transform_0(%arg0: i32) -> (i32, i32, i32) {
    %c0_i32 = arith.constant 0 : i32
    %c0_i32_0 = arith.constant 0 : i32
    %c0_i32_1 = arith.constant 0 : i32
    return %arg0, %c0_i32, %c0_i32_0 : i32, i32, i32
  }
  func.func @transform_1(%arg0: i32) -> (i32, i32, i32) {
    %c0_i32 = arith.constant 0 : i32
    %c0_i32_0 = arith.constant 0 : i32
    %c0_i32_1 = arith.constant 0 : i32
    return %arg0, %c0_i32, %c0_i32_0 : i32, i32, i32
  }
  func.func @transform_2(%arg0: i32) -> (i32, i32, i32) {
    %c0_i32 = arith.constant 0 : i32
    %c0_i32_0 = arith.constant 0 : i32
    %c0_i32_1 = arith.constant 0 : i32
    return %arg0, %c0_i32, %c0_i32_0 : i32, i32, i32
  }
  func.func @transform_3(%arg0: i32) -> (i32, i32, i32) {
    %c0_i32 = arith.constant 0 : i32
    %c0_i32_0 = arith.constant 0 : i32
    %c0_i32_1 = arith.constant 0 : i32
    return %arg0, %c0_i32, %c0_i32_0 : i32, i32, i32
  }
  func.func @transform_4(%arg0: i32) -> (i32, i32) {
    %c0_i32 = arith.constant 0 : i32
    %c0_i32_0 = arith.constant 0 : i32
    %c0_i32_1 = arith.constant 0 : i32
    return %c0_i32, %c0_i32_0 : i32, i32
  }
  func.func @transform_5(%arg0: i32) -> (i32, i32) {
    %c0_i32 = arith.constant 0 : i32
    %c0_i32_0 = arith.constant 0 : i32
    %c0_i32_1 = arith.constant 0 : i32
    return %c0_i32, %c0_i32_0 : i32, i32
  }
  func.func @transform_6(%arg0: i32) -> (i32, i32) {
    %c0_i32 = arith.constant 0 : i32
    %c0_i32_0 = arith.constant 0 : i32
    %c0_i32_1 = arith.constant 0 : i32
    return %c0_i32, %c0_i32_0 : i32, i32
  }
  func.func @transform_7(%arg0: i32) -> (i32, i32) {
    %c0_i32 = arith.constant 0 : i32
    %c0_i32_0 = arith.constant 0 : i32
    %c0_i32_1 = arith.constant 0 : i32
    return %c0_i32, %c0_i32_0 : i32, i32
  }
  func.func @transform_8(%arg0: i32) -> (i32, i32) {
    %c0_i32 = arith.constant 0 : i32
    %c0_i32_0 = arith.constant 0 : i32
    %c0_i32_1 = arith.constant 0 : i32
    return %c0_i32, %c0_i32_0 : i32, i32
  }
  func.func @transform_9(%arg0: i32) -> (i32, i32) {
    %c0_i32 = arith.constant 0 : i32
    %c0_i32_0 = arith.constant 0 : i32
    %c0_i32_1 = arith.constant 0 : i32
    return %c0_i32, %c0_i32_0 : i32, i32
  }
  func.func @transform_10(%arg0: i32) -> (i32, i32, i32) {
    %c0_i32 = arith.constant 0 : i32
    %c0_i32_0 = arith.constant 0 : i32
    %c0_i32_1 = arith.constant 0 : i32
    return %arg0, %c0_i32, %c0_i32_0 : i32, i32, i32
  }
}

module attributes {stable_mosaic.version = 11 : i64} {
  func.func @_ffn_ln_kernel(%arg0: i32, %arg1: memref<16x32xf32, #tpu.memory_space<vmem>>, %arg2: memref<32x64xbf16, #tpu.memory_space<vmem>>, %arg3: memref<1x64xf32, #tpu.memory_space<vmem>>, %arg4: memref<64x32xbf16, #tpu.memory_space<vmem>>, %arg5: memref<1x32xf32, #tpu.memory_space<vmem>>, %arg6: memref<1x32xf32, #tpu.memory_space<vmem>>, %arg7: memref<1x32xf32, #tpu.memory_space<vmem>>, %arg8: memref<16x32xf32, #tpu.memory_space<vmem>>) attributes {dimension_semantics = [#tpu.dimension_semantics<parallel>], iteration_bounds = array<i64: 1>, scalar_prefetch = 0 : i64, scratch_operands = 0 : i64, tpu.core_type = #tpu.core_type<tc>, window_params = [{transform_indices = @transform_0, window_bounds = array<i64: 16, 32>}, {pipeline_mode = #tpu.pipeline_mode<synchronous>, transform_indices = @transform_1, window_bounds = array<i64: 32, 64>}, {pipeline_mode = #tpu.pipeline_mode<synchronous>, transform_indices = @transform_2, window_bounds = array<i64: 1, 64>}, {pipeline_mode = #tpu.pipeline_mode<synchronous>, transform_indices = @transform_3, window_bounds = array<i64: 64, 32>}, {pipeline_mode = #tpu.pipeline_mode<synchronous>, transform_indices = @transform_4, window_bounds = array<i64: 1, 32>}, {pipeline_mode = #tpu.pipeline_mode<synchronous>, transform_indices = @transform_5, window_bounds = array<i64: 1, 32>}, {pipeline_mode = #tpu.pipeline_mode<synchronous>, transform_indices = @transform_6, window_bounds = array<i64: 1, 32>}, {transform_indices = @transform_7, window_bounds = array<i64: 16, 32>}]} {
    %c0 = arith.constant 0 : index
    %c0_0 = arith.constant 0 : index
    %0 = vector.load %arg1[%c0, %c0_0] : memref<16x32xf32, #tpu.memory_space<vmem>>, vector<16x32xf32>
    %1 = arith.truncf %0 : vector<16x32xf32> to vector<16x32xbf16>
    %c0_1 = arith.constant 0 : index
    %c0_2 = arith.constant 0 : index
    %2 = vector.load %arg2[%c0_1, %c0_2] : memref<32x64xbf16, #tpu.memory_space<vmem>>, vector<32x64xbf16>
    %cst = arith.constant dense<0.000000e+00> : vector<16x64xf32>
    %3 = tpu.matmul %1, %2, %cst {dimension_numbers = #tpu.dot_dimension_numbers<[1], [0], [0], [1], [0, 0, 1, 1], [], []>} : vector<16x32xbf16>, vector<32x64xbf16>, vector<16x64xf32> -> vector<16x64xf32>
    %c0_3 = arith.constant 0 : index
    %c0_4 = arith.constant 0 : index
    %4 = vector.load %arg3[%c0_3, %c0_4] : memref<1x64xf32, #tpu.memory_space<vmem>>, vector<1x64xf32>
    %5 = vector.broadcast %4 : vector<1x64xf32> to vector<16x64xf32>
    %6 = arith.addf %3, %5 : vector<16x64xf32>
    %cst_5 = arith.constant 0.000000e+00 : f32
    %7 = vector.broadcast %cst_5 : f32 to vector<16x64xf32>
    %8 = arith.maximumf %6, %7 : vector<16x64xf32>
    %9 = arith.truncf %8 : vector<16x64xf32> to vector<16x64xbf16>
    %c0_6 = arith.constant 0 : index
    %c0_7 = arith.constant 0 : index
    %10 = vector.load %arg4[%c0_6, %c0_7] : memref<64x32xbf16, #tpu.memory_space<vmem>>, vector<64x32xbf16>
    %cst_8 = arith.constant dense<0.000000e+00> : vector<16x32xf32>
    %11 = tpu.matmul %9, %10, %cst_8 {dimension_numbers = #tpu.dot_dimension_numbers<[1], [0], [0], [1], [0, 0, 1, 1], [], []>} : vector<16x64xbf16>, vector<64x32xbf16>, vector<16x32xf32> -> vector<16x32xf32>
    %c0_9 = arith.constant 0 : index
    %c0_10 = arith.constant 0 : index
    %12 = vector.load %arg5[%c0_9, %c0_10] : memref<1x32xf32, #tpu.memory_space<vmem>>, vector<1x32xf32>
    %13 = vector.broadcast %12 : vector<1x32xf32> to vector<16x32xf32>
    %14 = arith.addf %11, %13 : vector<16x32xf32>
    %15 = arith.addf %0, %14 : vector<16x32xf32>
    %c0_11 = arith.constant 0 : index
    %c0_12 = arith.constant 0 : index
    %16 = vector.load %arg6[%c0_11, %c0_12] : memref<1x32xf32, #tpu.memory_space<vmem>>, vector<1x32xf32>
    %c0_13 = arith.constant 0 : index
    %c0_14 = arith.constant 0 : index
    %17 = vector.load %arg7[%c0_13, %c0_14] : memref<1x32xf32, #tpu.memory_space<vmem>>, vector<1x32xf32>
    %cst_15 = arith.constant dense<0.000000e+00> : vector<16xf32>
    %18 = vector.multi_reduction <add>, %15, %cst_15 [1] : vector<16x32xf32> to vector<16xf32>
    %19 = vector.shape_cast %18 : vector<16xf32> to vector<16x1xf32>
    %cst_16 = arith.constant 3.200000e+01 : f32
    %20 = vector.broadcast %cst_16 : f32 to vector<16x1xf32>
    %21 = arith.divf %19, %20 : vector<16x1xf32>
    %22 = vector.broadcast %21 : vector<16x1xf32> to vector<16x32xf32>
    %23 = arith.subf %15, %22 : vector<16x32xf32>
    %24 = arith.mulf %23, %23 : vector<16x32xf32>
    %cst_17 = arith.constant dense<0.000000e+00> : vector<16xf32>
    %25 = vector.multi_reduction <add>, %24, %cst_17 [1] : vector<16x32xf32> to vector<16xf32>
    %26 = vector.shape_cast %25 : vector<16xf32> to vector<16x1xf32>
    %cst_18 = arith.constant 3.200000e+01 : f32
    %27 = vector.broadcast %cst_18 : f32 to vector<16x1xf32>
    %28 = arith.divf %26, %27 : vector<16x1xf32>
    %29 = vector.broadcast %21 : vector<16x1xf32> to vector<16x32xf32>
    %30 = arith.subf %15, %29 : vector<16x32xf32>
    %cst_19 = arith.constant 9.99999974E-6 : f32
    %31 = vector.broadcast %cst_19 : f32 to vector<16x1xf32>
    %32 = arith.addf %28, %31 : vector<16x1xf32>
    %33 = math.rsqrt %32 : vector<16x1xf32>
    %34 = vector.broadcast %33 : vector<16x1xf32> to vector<16x32xf32>
    %35 = arith.mulf %30, %34 : vector<16x32xf32>
    %36 = vector.broadcast %16 : vector<1x32xf32> to vector<16x32xf32>
    %37 = arith.mulf %35, %36 : vector<16x32xf32>
    %38 = vector.broadcast %17 : vector<1x32xf32> to vector<16x32xf32>
    %39 = arith.addf %37, %38 : vector<16x32xf32>
    %c0_20 = arith.constant 0 : index
    %c0_21 = arith.constant 0 : index
    %40 = vector.load %arg8[%c0_20, %c0_21] : memref<16x32xf32, #tpu.memory_space<vmem>>, vector<16x32xf32>
    tpu.vector_store %arg8[%c0_20, %c0_21], %39 {strides = array<i32>} : memref<16x32xf32, #tpu.memory_space<vmem>>, vector<16x32xf32>,
    return
  }
  func.func @transform_0(%arg0: i32) -> (i32, i32) {
    %c0_i32 = arith.constant 0 : i32
    %c0_i32_0 = arith.constant 0 : i32
    return %arg0, %c0_i32 : i32, i32
  }
  func.func @transform_1(%arg0: i32) -> (i32, i32) {
    %c0_i32 = arith.constant 0 : i32
    %c0_i32_0 = arith.constant 0 : i32
    %c0_i32_1 = arith.constant 0 : i32
    return %c0_i32, %c0_i32_0 : i32, i32
  }
  func.func @transform_2(%arg0: i32) -> (i32, i32) {
    %c0_i32 = arith.constant 0 : i32
    %c0_i32_0 = arith.constant 0 : i32
    %c0_i32_1 = arith.constant 0 : i32
    return %c0_i32, %c0_i32_0 : i32, i32
  }
  func.func @transform_3(%arg0: i32) -> (i32, i32) {
    %c0_i32 = arith.constant 0 : i32
    %c0_i32_0 = arith.constant 0 : i32
    %c0_i32_1 = arith.constant 0 : i32
    return %c0_i32, %c0_i32_0 : i32, i32
  }
  func.func @transform_4(%arg0: i32) -> (i32, i32) {
    %c0_i32 = arith.constant 0 : i32
    %c0_i32_0 = arith.constant 0 : i32
    %c0_i32_1 = arith.constant 0 : i32
    return %c0_i32, %c0_i32_0 : i32, i32
  }
  func.func @transform_5(%arg0: i32) -> (i32, i32) {
    %c0_i32 = arith.constant 0 : i32
    %c0_i32_0 = arith.constant 0 : i32
    %c0_i32_1 = arith.constant 0 : i32
    return %c0_i32, %c0_i32_0 : i32, i32
  }
  func.func @transform_6(%arg0: i32) -> (i32, i32) {
    %c0_i32 = arith.constant 0 : i32
    %c0_i32_0 = arith.constant 0 : i32
    %c0_i32_1 = arith.constant 0 : i32
    return %c0_i32, %c0_i32_0 : i32, i32
  }
  func.func @transform_7(%arg0: i32) -> (i32, i32) {
    %c0_i32 = arith.constant 0 : i32
    %c0_i32_0 = arith.constant 0 : i32
    return %arg0, %c0_i32 : i32, i32
  }
}

module attributes {stable_mosaic.version = 11 : i64} {
  func.func @_ln_kernel(%arg0: i32, %arg1: memref<16x32xf32, #tpu.memory_space<vmem>>, %arg2: memref<1x32xf32, #tpu.memory_space<vmem>>, %arg3: memref<1x32xf32, #tpu.memory_space<vmem>>, %arg4: memref<16x32xf32, #tpu.memory_space<vmem>>) attributes {dimension_semantics = [#tpu.dimension_semantics<parallel>], iteration_bounds = array<i64: 1>, scalar_prefetch = 0 : i64, scratch_operands = 0 : i64, tpu.core_type = #tpu.core_type<tc>, window_params = [{transform_indices = @transform_0, window_bounds = array<i64: 16, 32>}, {pipeline_mode = #tpu.pipeline_mode<synchronous>, transform_indices = @transform_1, window_bounds = array<i64: 1, 32>}, {pipeline_mode = #tpu.pipeline_mode<synchronous>, transform_indices = @transform_2, window_bounds = array<i64: 1, 32>}, {transform_indices = @transform_3, window_bounds = array<i64: 16, 32>}]} {
    %c0 = arith.constant 0 : index
    %c0_0 = arith.constant 0 : index
    %0 = vector.load %arg1[%c0, %c0_0] : memref<16x32xf32, #tpu.memory_space<vmem>>, vector<16x32xf32>
    %c0_1 = arith.constant 0 : index
    %c0_2 = arith.constant 0 : index
    %1 = vector.load %arg2[%c0_1, %c0_2] : memref<1x32xf32, #tpu.memory_space<vmem>>, vector<1x32xf32>
    %c0_3 = arith.constant 0 : index
    %c0_4 = arith.constant 0 : index
    %2 = vector.load %arg3[%c0_3, %c0_4] : memref<1x32xf32, #tpu.memory_space<vmem>>, vector<1x32xf32>
    %cst = arith.constant dense<0.000000e+00> : vector<16xf32>
    %3 = vector.multi_reduction <add>, %0, %cst [1] : vector<16x32xf32> to vector<16xf32>
    %4 = vector.shape_cast %3 : vector<16xf32> to vector<16x1xf32>
    %cst_5 = arith.constant 3.200000e+01 : f32
    %5 = vector.broadcast %cst_5 : f32 to vector<16x1xf32>
    %6 = arith.divf %4, %5 : vector<16x1xf32>
    %7 = vector.broadcast %6 : vector<16x1xf32> to vector<16x32xf32>
    %8 = arith.subf %0, %7 : vector<16x32xf32>
    %9 = arith.mulf %8, %8 : vector<16x32xf32>
    %cst_6 = arith.constant dense<0.000000e+00> : vector<16xf32>
    %10 = vector.multi_reduction <add>, %9, %cst_6 [1] : vector<16x32xf32> to vector<16xf32>
    %11 = vector.shape_cast %10 : vector<16xf32> to vector<16x1xf32>
    %cst_7 = arith.constant 3.200000e+01 : f32
    %12 = vector.broadcast %cst_7 : f32 to vector<16x1xf32>
    %13 = arith.divf %11, %12 : vector<16x1xf32>
    %14 = vector.broadcast %6 : vector<16x1xf32> to vector<16x32xf32>
    %15 = arith.subf %0, %14 : vector<16x32xf32>
    %cst_8 = arith.constant 9.99999974E-6 : f32
    %16 = vector.broadcast %cst_8 : f32 to vector<16x1xf32>
    %17 = arith.addf %13, %16 : vector<16x1xf32>
    %18 = math.rsqrt %17 : vector<16x1xf32>
    %19 = vector.broadcast %18 : vector<16x1xf32> to vector<16x32xf32>
    %20 = arith.mulf %15, %19 : vector<16x32xf32>
    %21 = vector.broadcast %1 : vector<1x32xf32> to vector<16x32xf32>
    %22 = arith.mulf %20, %21 : vector<16x32xf32>
    %23 = vector.broadcast %2 : vector<1x32xf32> to vector<16x32xf32>
    %24 = arith.addf %22, %23 : vector<16x32xf32>
    %c0_9 = arith.constant 0 : index
    %c0_10 = arith.constant 0 : index
    %25 = vector.load %arg4[%c0_9, %c0_10] : memref<16x32xf32, #tpu.memory_space<vmem>>, vector<16x32xf32>
    tpu.vector_store %arg4[%c0_9, %c0_10], %24 {strides = array<i32>} : memref<16x32xf32, #tpu.memory_space<vmem>>, vector<16x32xf32>,
    return
  }
  func.func @transform_0(%arg0: i32) -> (i32, i32) {
    %c0_i32 = arith.constant 0 : i32
    %c0_i32_0 = arith.constant 0 : i32
    return %arg0, %c0_i32 : i32, i32
  }
  func.func @transform_1(%arg0: i32) -> (i32, i32) {
    %c0_i32 = arith.constant 0 : i32
    %c0_i32_0 = arith.constant 0 : i32
    %c0_i32_1 = arith.constant 0 : i32
    return %c0_i32, %c0_i32_0 : i32, i32
  }
  func.func @transform_2(%arg0: i32) -> (i32, i32) {
    %c0_i32 = arith.constant 0 : i32
    %c0_i32_0 = arith.constant 0 : i32
    %c0_i32_1 = arith.constant 0 : i32
    return %c0_i32, %c0_i32_0 : i32, i32
  }
  func.func @transform_3(%arg0: i32) -> (i32, i32) {
    %c0_i32 = arith.constant 0 : i32
    %c0_i32_0 = arith.constant 0 : i32
    return %arg0, %c0_i32 : i32, i32
  }
}

</mosaic_0001>

<llo_original>
// kernel: ifc_decoder_forward.10
$region0: #{ifc_decoder_forward.10}
  #allocation0 [shape = 'u32[]', space=smem, size = 0x4, offset = 0x4, fixed_abs, tag = 'smem constant byte address 0x4 - core index']
  #allocation1 [shape = 'u32[144,128]{1,0:T(1,128)}', space=vmem, size = 0x12000, scoped, tag = 'internal scratch']
  %s0 = inlined_call_operand.vmem [shape: f32[16,32], index: 0, kind: input, shape index: {}]
  %s1 = inlined_call_operand.vmem [shape: bf16[32,64], index: 1, kind: input, shape index: {}]
  %s2 = inlined_call_operand.vmem [shape: f32[1,64], index: 2, kind: input, shape index: {}]
  %s3 = inlined_call_operand.vmem [shape: bf16[64,32], index: 3, kind: input, shape index: {}]
  %s4 = inlined_call_operand.vmem [shape: f32[1,32], index: 4, kind: input, shape index: {}]
  %s5 = inlined_call_operand.vmem [shape: f32[1,32], index: 5, kind: input, shape index: {}]
  %s6 = inlined_call_operand.vmem [shape: f32[1,32], index: 6, kind: input, shape index: {}]
  %s7 = inlined_call_operand.vmem [shape: f32[16,32], index: 7, kind: output, shape index: {}]
  %s8 = sld [smem:[#allocation0]]
  $region38: #{ifc_decoder_forward.10} parent=0
    _
  %s10 = ssub.s32 1, %s8
  %s11 = scalar_select 0, %s10, %s8
  // Predicated region
  $region2: #{ifc_decoder_forward.10} parent=0 // pred_check
    _
  $region3: #{ifc_decoder_forward.10} parent=0 // pred_check_branch
    %13 = sbr.rel (0) target = $region5
  $region4: #{ifc_decoder_forward.10} parent=0 // pred_region
    _
  $region5: #{ifc_decoder_forward.10} parent=0 // pred_fallthru
    _
  // Predicated region
  $region6: #{ifc_decoder_forward.10} parent=0 // pred_check
    _
  $region7: #{ifc_decoder_forward.10} parent=0 // pred_check_branch
    %15 = sbr.rel (0) target = $region9
  $region8: #{ifc_decoder_forward.10} parent=0 // pred_region
    _
  $region9: #{ifc_decoder_forward.10} parent=0 // pred_fallthru
    _
  // Predicated region
  $region10: #{ifc_decoder_forward.10} parent=0 // pred_check
    _
  $region11: #{ifc_decoder_forward.10} parent=0 // pred_check_branch
    %17 = sbr.rel (0) target = $region13
  $region12: #{ifc_decoder_forward.10} parent=0 // pred_region
    _
  $region13: #{ifc_decoder_forward.10} parent=0 // pred_fallthru
    _
  // Predicated region
  $region14: #{ifc_decoder_forward.10} parent=0 // pred_check
    _
  $region15: #{ifc_decoder_forward.10} parent=0 // pred_check_branch
    %19 = sbr.rel (0) target = $region17
  $region16: #{ifc_decoder_forward.10} parent=0 // pred_region
    _
  $region17: #{ifc_decoder_forward.10} parent=0 // pred_fallthru
    _
  // Predicated region
  $region18: #{ifc_decoder_forward.10} parent=0 // pred_check
    _
  $region19: #{ifc_decoder_forward.10} parent=0 // pred_check_branch
    %21 = sbr.rel (0) target = $region21
  $region20: #{ifc_decoder_forward.10} parent=0 // pred_region
    _
  $region21: #{ifc_decoder_forward.10} parent=0 // pred_fallthru
    _
  // Predicated region
  $region22: #{ifc_decoder_forward.10} parent=0 // pred_check
    _
  $region23: #{ifc_decoder_forward.10} parent=0 // pred_check_branch
    %23 = sbr.rel (0) target = $region25
  $region24: #{ifc_decoder_forward.10} parent=0 // pred_region
    _
  $region25: #{ifc_decoder_forward.10} parent=0 // pred_fallthru
    _
  // Predicated region
  $region26: #{ifc_decoder_forward.10} parent=0 // pred_check
    _
  $region27: #{ifc_decoder_forward.10} parent=0 // pred_check_branch
    %25 = sbr.rel (0) target = $region29
  $region28: #{ifc_decoder_forward.10} parent=0 // pred_region
    _
  $region29: #{ifc_decoder_forward.10} parent=0 // pred_fallthru
    _
  %v27 = vld [vmem:[%s0] sm:$0xff]
  %v28 = vld [vmem:[%s0 + $0x8] sm:$0xff]
  %v29 = vpack.c.bf16 %v28, %v27
  %v30 = vld [vmem:[%s1] sm:$0xf]
  %v31 = vld [vmem:[%s1 + $0x4] sm:$0xf]
  %v32 = vld [vmem:[%s1 + $0x8] sm:$0xf]
  %v33 = vld [vmem:[%s1 + $0xc] sm:$0xf]
  %v34 = vld [vmem:[%s2] sm:$0x1]
  %v36 = vlaneseq
  %v37 = vshrl.u32 %v36, 7
  %v38 = vsub.s32 0, %v37
  %v39 = vrot.slane %v34, %v38
  %v45 = vunpack.c.l.b16 %v30
  %v46 = vunpack.c.l.b16 %v31
  %v47 = vunpack.c.l.b16 %v32
  %v48 = vunpack.c.l.b16 %v33
  %v49 = vpack.c.b16 %v46, %v45
  %v50 = vpack.c.b16 %v48, %v47
  %vm53 = vcmask 261120
  %v55 = vsel %vm53, %v29, 0
  %57 = vmatprep.subr.bf16.mxu0 0
  %58 = vmatpush1.bf16.msra.mxu0 %v49
  %59 = vmatprep.subr.bf16.mxu0 0
  %60 = vmatpush1.bf16.msra.mxu0 %v50
  %61 = vmatprep.subr.bf16.mxu0 0
  %62 = vmatpush1.bf16.msra.mxu0 0
  %63 = vmatprep.subr.bf16.mxu0 0
  %64 = vmatpush1.bf16.msra.mxu0 0
  %65 = vmatprep.subr.bf16.mxu0 0
  %66 = vmatpush1.bf16.msra.mxu0 0
  %67 = vmatprep.subr.bf16.mxu0 0
  %68 = vmatpush1.bf16.msra.mxu0 0
  %69 = vmatprep.subr.bf16.mxu0 0
  %70 = vmatpush1.bf16.msra.mxu0 0
  %71 = vmatprep.subr.bf16.mxu0 0
  %72 = vmatpush1.bf16.msra.mxu0 0
  %73 = vmatprep.subr.bf16.mxu0 0
  %74 = vmatpush1.bf16.msra.mxu0 0
  %75 = vmatprep.subr.bf16.mxu0 0
  %76 = vmatpush1.bf16.msra.mxu0 0
  %77 = vmatprep.subr.bf16.mxu0 0
  %78 = vmatpush1.bf16.msra.mxu0 0
  %79 = vmatprep.subr.bf16.mxu0 0
  %80 = vmatpush1.bf16.msra.mxu0 0
  %81 = vmatprep.subr.bf16.mxu0 0
  %82 = vmatpush1.bf16.msra.mxu0 0
  %83 = vmatprep.subr.bf16.mxu0 0
  %84 = vmatpush1.bf16.msra.mxu0 0
  %85 = vmatprep.subr.bf16.mxu0 0
  %86 = vmatpush1.bf16.msra.mxu0 0
  %87 = vmatprep.subr.bf16.mxu0 0
  %88 = vmatpush1.bf16.msra.mxu0 0
  %89 = vmatprep.mubr.bf16.mxu0 0
  %90 = vmatmul.mubr.bf16.gmra.mrb[0].mxu0 %v55
  %v91 = vpop.f32.mrb[0].mxu0
  %v92 = vadd.f32 %v39, %v91
  %v93 = vpop.f32.mrb[0].mxu0
  %v94 = vpop.f32.mrb[0].mxu0
  %v95 = vadd.f32 %v39, %v94
  %v96 = vpop.f32.mrb[0].mxu0
  %97 = vdwg.mxu0
  %v98 = vmax.f32 %v92, 0.0
  %v99 = vmax.f32 %v95, 0.0
  %v100 = vpack.c.bf16 %v99, %v98
  %v101 = vld [vmem:[%s3] sm:$0xf]
  %v102 = vld [vmem:[%s3 + $0x4] sm:$0xf]
  %v103 = vld [vmem:[%s3 + $0x8] sm:$0xf]
  %v104 = vld [vmem:[%s3 + $0xc] sm:$0xf]
  %v105 = vld [vmem:[%s3 + $0x10] sm:$0xf]
  %v106 = vld [vmem:[%s3 + $0x14] sm:$0xf]
  %v107 = vld [vmem:[%s3 + $0x18] sm:$0xf]
  %v108 = vld [vmem:[%s3 + $0x1c] sm:$0xf]
  %v109 = vld [vmem:[%s4] sm:$0x1]
  %v111 = vlaneseq
  %v112 = vshrl.u32 %v111, 7
  %v113 = vsub.s32 0, %v112
  %v114 = vrot.slane %v109, %v113
  %v124 = vunpack.c.l.b16 %v101
  %v125 = vunpack.c.l.b16 %v102
  %v126 = vunpack.c.l.b16 %v103
  %v127 = vunpack.c.l.b16 %v104
  %v128 = vunpack.c.l.b16 %v105
  %v129 = vunpack.c.l.b16 %v106
  %v130 = vunpack.c.l.b16 %v107
  %v131 = vunpack.c.l.b16 %v108
  %v132 = vpack.c.b16 %v125, %v124
  %v133 = vpack.c.b16 %v127, %v126
  %v134 = vpack.c.b16 %v129, %v128
  %v135 = vpack.c.b16 %v131, %v130
  %vm140 = vcmask 523264
  %v142 = vsel %vm140, %v100, 0
  %144 = vmatprep.subr.bf16.mxu0 0
  %145 = vmatpush1.bf16.msra.mxu0 %v132
  %146 = vmatprep.subr.bf16.mxu0 0
  %147 = vmatpush1.bf16.msra.mxu0 %v133
  %148 = vmatprep.subr.bf16.mxu0 0
  %149 = vmatpush1.bf16.msra.mxu0 %v134
  %150 = vmatprep.subr.bf16.mxu0 0
  %151 = vmatpush1.bf16.msra.mxu0 %v135
  %152 = vmatprep.subr.bf16.mxu0 0
  %153 = vmatpush1.bf16.msra.mxu0 0
  %154 = vmatprep.subr.bf16.mxu0 0
  %155 = vmatpush1.bf16.msra.mxu0 0
  %156 = vmatprep.subr.bf16.mxu0 0
  %157 = vmatpush1.bf16.msra.mxu0 0
  %158 = vmatprep.subr.bf16.mxu0 0
  %159 = vmatpush1.bf16.msra.mxu0 0
  %160 = vmatprep.subr.bf16.mxu0 0
  %161 = vmatpush1.bf16.msra.mxu0 0
  %162 = vmatprep.subr.bf16.mxu0 0
  %163 = vmatpush1.bf16.msra.mxu0 0
  %164 = vmatprep.subr.bf16.mxu0 0
  %165 = vmatpush1.bf16.msra.mxu0 0
  %166 = vmatprep.subr.bf16.mxu0 0
  %167 = vmatpush1.bf16.msra.mxu0 0
  %168 = vmatprep.subr.bf16.mxu0 0
  %169 = vmatpush1.bf16.msra.mxu0 0
  %170 = vmatprep.subr.bf16.mxu0 0
  %171 = vmatpush1.bf16.msra.mxu0 0
  %172 = vmatprep.subr.bf16.mxu0 0
  %173 = vmatpush1.bf16.msra.mxu0 0
  %174 = vmatprep.subr.bf16.mxu0 0
  %175 = vmatpush1.bf16.msra.mxu0 0
  %176 = vmatprep.mubr.bf16.mxu0 0
  %177 = vmatmul.mubr.bf16.gmra.mrb[0].mxu0 %v142
  %v178 = vpop.f32.mrb[0].mxu0
  %v179 = vadd.f32 %v114, %v178
  %v180 = vpop.f32.mrb[0].mxu0
  %v181 = vpop.f32.mrb[0].mxu0
  %v182 = vadd.f32 %v114, %v181
  %v183 = vpop.f32.mrb[0].mxu0
  %184 = vdwg.mxu0
  %v185 = vadd.f32 %v27, %v179
  %v186 = vadd.f32 %v28, %v182
  %v187 = vld [vmem:[%s5] sm:$0x1]
  %v188 = vld [vmem:[%s6] sm:$0x1]
  %v189 = vsel %vm53, %v185, 0.0
  %190 = vadd.xlane.f32.xlu0 %v189
  %v191 = vpop.xlane.xlu0 %190
  %v192 = vsel %vm53, %v186, 0.0
  %193 = vadd.xlane.f32.xlu0 %v192
  %v194 = vpop.xlane.xlu0 %193
  %v195 = vrcp.pop 32.0
  %v196 = vmul.f32 %v191, %v195
  %v197 = vmul.f32 %v194, %v195
  %v198 = vsub.f32 %v185, %v196
  %v199 = vsub.f32 %v186, %v197
  %v200 = vmul.f32 %v198, %v198
  %v201 = vmul.f32 %v199, %v199
  %v202 = vsel %vm53, %v200, 0.0
  %203 = vadd.xlane.f32.xlu0 %v202
  %v204 = vpop.xlane.xlu0 %203
  %v205 = vsel %vm53, %v201, 0.0
  %206 = vadd.xlane.f32.xlu0 %v205
  %v207 = vpop.xlane.xlu0 %206
  %v208 = vmul.f32 %v204, %v195
  %v209 = vmul.f32 %v207, %v195
  %v210 = vadd.f32 %v208, 1e-05
  %v211 = vadd.f32 %v209, 1e-05
  %v212 = vrsqrt.pop %v210
  %v213 = vrsqrt.pop %v211
  %v214 = vmul.f32 %v198, %v212
  %v215 = vmul.f32 %v199, %v213
  %v217 = vlaneseq
  %v218 = vshrl.u32 %v217, 7
  %v219 = vsub.s32 0, %v218
  %v220 = vrot.slane %v187, %v219
  %v222 = vmul.f32 %v214, %v220
  %v223 = vmul.f32 %v215, %v220
  %v225 = vlaneseq
  %v226 = vshrl.u32 %v225, 7
  %v227 = vsub.s32 0, %v226
  %v228 = vrot.slane %v188, %v227
  %v230 = vadd.f32 %v222, %v228
  %v231 = vadd.f32 %v223, %v228
  %232 = vst.msk [vmem:[%s7] sm:$0xff] %vm53, %v230
  %233 = vst.msk [vmem:[%s7 + $0x8] sm:$0xff] %vm53, %v231
  // Predicated region
  $region30: #{ifc_decoder_forward.10} parent=0 // pred_check
    _
  $region31: #{ifc_decoder_forward.10} parent=0 // pred_check_branch
    %235 = sbr.rel (0) target = $region33
  $region32: #{ifc_decoder_forward.10} parent=0 // pred_region
    _
  $region33: #{ifc_decoder_forward.10} parent=0 // pred_fallthru
    _
  // Predicated region
  $region34: #{ifc_decoder_forward.10} parent=0 // pred_check
    _
  $region35: #{ifc_decoder_forward.10} parent=0 // pred_check_branch
    %237 = sbr.rel (0) target = $region37
  $region36: #{ifc_decoder_forward.10} parent=0 // pred_region
    _
  $region37: #{ifc_decoder_forward.10} parent=0 // pred_fallthru
    _

// kernel: ifc_decoder_forward.15
$region0: #{ifc_decoder_forward.15}
  #allocation0 [shape = 'u32[]', space=smem, size = 0x4, offset = 0x4, fixed_abs, tag = 'smem constant byte address 0x4 - core index']
  #allocation1 [shape = 'u32[144,128]{1,0:T(1,128)}', space=vmem, size = 0x12000, scoped, tag = 'internal scratch']
  %s0 = inlined_call_operand.vmem [shape: f32[16,32], index: 0, kind: input, shape index: {}]
  %s1 = inlined_call_operand.vmem [shape: f32[1,32], index: 1, kind: input, shape index: {}]
  %s2 = inlined_call_operand.vmem [shape: f32[1,32], index: 2, kind: input, shape index: {}]
  %s3 = inlined_call_operand.vmem [shape: f32[16,32], index: 3, kind: output, shape index: {}]
  %s4 = sld [smem:[#allocation0]]
  $region22: #{ifc_decoder_forward.15} parent=0
    _
  %s6 = ssub.s32 1, %s4
  %s7 = scalar_select 0, %s6, %s4
  // Predicated region
  $region2: #{ifc_decoder_forward.15} parent=0 // pred_check
    _
  $region3: #{ifc_decoder_forward.15} parent=0 // pred_check_branch
    %9 = sbr.rel (0) target = $region5
  $region4: #{ifc_decoder_forward.15} parent=0 // pred_region
    _
  $region5: #{ifc_decoder_forward.15} parent=0 // pred_fallthru
    _
  // Predicated region
  $region6: #{ifc_decoder_forward.15} parent=0 // pred_check
    _
  $region7: #{ifc_decoder_forward.15} parent=0 // pred_check_branch
    %11 = sbr.rel (0) target = $region9
  $region8: #{ifc_decoder_forward.15} parent=0 // pred_region
    _
  $region9: #{ifc_decoder_forward.15} parent=0 // pred_fallthru
    _
  // Predicated region
  $region10: #{ifc_decoder_forward.15} parent=0 // pred_check
    _
  $region11: #{ifc_decoder_forward.15} parent=0 // pred_check_branch
    %13 = sbr.rel (0) target = $region13
  $region12: #{ifc_decoder_forward.15} parent=0 // pred_region
    _
  $region13: #{ifc_decoder_forward.15} parent=0 // pred_fallthru
    _
  %v14 = vld [vmem:[%s0] sm:$0xff]
  %v15 = vld [vmem:[%s0 + $0x8] sm:$0xff]
  %v16 = vld [vmem:[%s1] sm:$0x1]
  %v17 = vld [vmem:[%s2] sm:$0x1]
  %vm18 = vcmask 261120
  %v19 = vsel %vm18, %v14, 0.0
  %20 = vadd.xlane.f32.xlu0 %v19
  %v21 = vpop.xlane.xlu0 %20
  %v22 = vsel %vm18, %v15, 0.0
  %23 = vadd.xlane.f32.xlu0 %v22
  %v24 = vpop.xlane.xlu0 %23
  %v25 = vrcp.pop 32.0
  %v26 = vmul.f32 %v21, %v25
  %v27 = vmul.f32 %v24, %v25
  %v28 = vsub.f32 %v14, %v26
  %v29 = vsub.f32 %v15, %v27
  %v30 = vmul.f32 %v28, %v28
  %v31 = vmul.f32 %v29, %v29
  %v32 = vsel %vm18, %v30, 0.0
  %33 = vadd.xlane.f32.xlu0 %v32
  %v34 = vpop.xlane.xlu0 %33
  %v35 = vsel %vm18, %v31, 0.0
  %36 = vadd.xlane.f32.xlu0 %v35
  %v37 = vpop.xlane.xlu0 %36
  %v38 = vmul.f32 %v34, %v25
  %v39 = vmul.f32 %v37, %v25
  %v40 = vadd.f32 %v38, 1e-05
  %v41 = vadd.f32 %v39, 1e-05
  %v42 = vrsqrt.pop %v40
  %v43 = vrsqrt.pop %v41
  %v44 = vmul.f32 %v28, %v42
  %v45 = vmul.f32 %v29, %v43
  %v47 = vlaneseq
  %v48 = vshrl.u32 %v47, 7
  %v49 = vsub.s32 0, %v48
  %v50 = vrot.slane %v16, %v49
  %v52 = vmul.f32 %v44, %v50
  %v53 = vmul.f32 %v45, %v50
  %v55 = vlaneseq
  %v56 = vshrl.u32 %v55, 7
  %v57 = vsub.s32 0, %v56
  %v58 = vrot.slane %v17, %v57
  %v60 = vadd.f32 %v52, %v58
  %v61 = vadd.f32 %v53, %v58
  %62 = vst.msk [vmem:[%s3] sm:$0xff] %vm18, %v60
  %63 = vst.msk [vmem:[%s3 + $0x8] sm:$0xff] %vm18, %v61
  // Predicated region
  $region14: #{ifc_decoder_forward.15} parent=0 // pred_check
    _
  $region15: #{ifc_decoder_forward.15} parent=0 // pred_check_branch
    %65 = sbr.rel (0) target = $region17
  $region16: #{ifc_decoder_forward.15} parent=0 // pred_region
    _
  $region17: #{ifc_decoder_forward.15} parent=0 // pred_fallthru
    _
  // Predicated region
  $region18: #{ifc_decoder_forward.15} parent=0 // pred_check
    _
  $region19: #{ifc_decoder_forward.15} parent=0 // pred_check_branch
    %67 = sbr.rel (0) target = $region21
  $region20: #{ifc_decoder_forward.15} parent=0 // pred_region
    _
  $region21: #{ifc_decoder_forward.15} parent=0 // pred_fallthru
    _

// kernel: ifc_decoder_forward.9
$region0: #{ifc_decoder_forward.9}
  #allocation0 [shape = 'u32[]', space=smem, size = 0x4, offset = 0x4, fixed_abs, tag = 'smem constant byte address 0x4 - core index']
  #allocation1 [shape = 'u32[144,128]{1,0:T(1,128)}', space=vmem, size = 0x12000, scoped, tag = 'internal scratch']
  %s0 = inlined_call_operand.vmem [shape: f32[2,8,32], index: 0, kind: input, shape index: {}]
  %s1 = inlined_call_operand.vmem [shape: f32[2,8,32], index: 1, kind: input, shape index: {}]
  %s2 = inlined_call_operand.vmem [shape: f32[2,40,32], index: 2, kind: input, shape index: {}]
  %s3 = inlined_call_operand.vmem [shape: f32[2,40,32], index: 3, kind: input, shape index: {}]
  %s4 = inlined_call_operand.vmem [shape: bf16[32,96], index: 4, kind: input, shape index: {}]
  %s5 = inlined_call_operand.vmem [shape: f32[1,96], index: 5, kind: input, shape index: {}]
  %s6 = inlined_call_operand.vmem [shape: bf16[32,32], index: 6, kind: input, shape index: {}]
  %s7 = inlined_call_operand.vmem [shape: f32[1,32], index: 7, kind: input, shape index: {}]
  %s8 = inlined_call_operand.vmem [shape: f32[1,32], index: 8, kind: input, shape index: {}]
  %s9 = inlined_call_operand.vmem [shape: f32[1,32], index: 9, kind: input, shape index: {}]
  %s10 = inlined_call_operand.vmem [shape: f32[2,8,32], index: 10, kind: output, shape index: {}]
  %s11 = sld [smem:[#allocation0]]
  $region73: #{ifc_decoder_forward.9} parent=0
    _
  %s13 = ssub.s32 1, %s11
  %s14 = scalar_select 0, %s13, %s11
  loop: start=0, step=1, limit=4
  $region2: #{ifc_decoder_forward.9} parent=0 // loop_pre_header
    _
  $region3: #{ifc_decoder_forward.9} parent=0 // loop_header
    %s16 = sphi 0, %s20
    %p17 = scmp.ge.s32.totalorder %s16, 4
    %s26 = sphi 0, %s28
    %s29 = sphi 0, %s26
    %s30 = sphi 0, %s29
    %s46 = sphi 0, %s30
    %s52 = sphi 0, %s54
    %s55 = sphi 0, %s52
    %s56 = sphi 0, %s55
    %s72 = sphi 0, %s56
    %s78 = sphi 0, %s80
    %s81 = sphi 0, %s78
    %s82 = sphi 0, %s81
    %s98 = sphi 0, %s82
    %s104 = sphi 0, %s106
    %s107 = sphi 0, %s104
    %s108 = sphi 0, %s107
    %s124 = sphi 0, %s108
    %s128 = sphi 0, %s128
    %s130 = sphi 0, %s128
    %s131 = sphi 0, %s130
    %s145 = sphi 0, %s131
    %s149 = sphi 0, %s149
    %s151 = sphi 0, %s149
    %s152 = sphi 0, %s151
    %s166 = sphi 0, %s152
    %s170 = sphi 0, %s170
    %s172 = sphi 0, %s170
    %s173 = sphi 0, %s172
    %s187 = sphi 0, %s173
    %s191 = sphi 0, %s191
    %s193 = sphi 0, %s191
    %s194 = sphi 0, %s193
    %s208 = sphi 0, %s194
    %s212 = sphi 0, %s212
    %s214 = sphi 0, %s212
    %s215 = sphi 0, %s214
    %s229 = sphi 0, %s215
    %s233 = sphi 0, %s233
    %s235 = sphi 0, %s233
    %s236 = sphi 0, %s235
    %s250 = sphi 0, %s236
    %s256 = sphi 0, %s258
    %s259 = sphi 0, %s256
    %s260 = sphi 0, %s259
    %s276 = sphi 0, %s260
  $region4: #{ifc_decoder_forward.9} parent=0 // loop_header_branch
    %19 = sbr.rel (%p17) target = $region8
  $region5: #{ifc_decoder_forward.9} parent=0 // loop_body
    %s21 = ssub.s32 %s16, 1
    %s22 = ssub.s32 %s16, 2
    %s23 = sadd.s32 %s16, 1
    %s24 = ssub.s32 %s16, %s23
    %p25 = scmp.eq.s32.totalorder %s24, 0
    %s27 = sadd.s32 %s26, 1
    %s28 = scalar_select %p25, %s26, %s27
    %p31 = pneg %p25
    %p32 = scmp.eq.s32.totalorder %s16, 1
    %p33 = por %p31, %p32
    %p34 = scmp.ne.s32.totalorder %s26, %s29
    %p35 = scmp.eq.s32.totalorder %s16, 0
    %p36 = por %p34, %p35
    %p37 = scmp.ne.s32.totalorder %s26, %s29
    %p38 = scmp.eq.s32.totalorder %s21, 1
    %p39 = por %p37, %p38
    %p40 = scmp.ne.s32.totalorder %s29, %s30
    %p41 = scmp.eq.s32.totalorder %s21, 0
    %p42 = por %p40, %p41
    %p43 = scmp.ne.s32.totalorder %s29, %s30
    %p44 = scmp.eq.s32.totalorder %s22, 1
    %p45 = por %p43, %p44
    %p47 = scmp.ne.s32.totalorder %s30, %s46
    %p48 = scmp.eq.s32.totalorder %s22, 0
    %p49 = por %p47, %p48
    %s50 = ssub.s32 %s16, %s23
    %p51 = scmp.eq.s32.totalorder %s50, 0
    %s53 = sadd.s32 %s52, 1
    %s54 = scalar_select %p51, %s52, %s53
    %p57 = pneg %p51
    %p58 = scmp.eq.s32.totalorder %s16, 1
    %p59 = por %p57, %p58
    %p60 = scmp.ne.s32.totalorder %s52, %s55
    %p61 = scmp.eq.s32.totalorder %s16, 0
    %p62 = por %p60, %p61
    %p63 = scmp.ne.s32.totalorder %s52, %s55
    %p64 = scmp.eq.s32.totalorder %s21, 1
    %p65 = por %p63, %p64
    %p66 = scmp.ne.s32.totalorder %s55, %s56
    %p67 = scmp.eq.s32.totalorder %s21, 0
    %p68 = por %p66, %p67
    %p69 = scmp.ne.s32.totalorder %s55, %s56
    %p70 = scmp.eq.s32.totalorder %s22, 1
    %p71 = por %p69, %p70
    %p73 = scmp.ne.s32.totalorder %s56, %s72
    %p74 = scmp.eq.s32.totalorder %s22, 0
    %p75 = por %p73, %p74
    %s76 = ssub.s32 %s16, %s23
    %p77 = scmp.eq.s32.totalorder %s76, 0
    %s79 = sadd.s32 %s78, 1
    %s80 = scalar_select %p77, %s78, %s79
    %p83 = pneg %p77
    %p84 = scmp.eq.s32.totalorder %s16, 1
    %p85 = por %p83, %p84
    %p86 = scmp.ne.s32.totalorder %s78, %s81
    %p87 = scmp.eq.s32.totalorder %s16, 0
    %p88 = por %p86, %p87
    %p89 = scmp.ne.s32.totalorder %s78, %s81
    %p90 = scmp.eq.s32.totalorder %s21, 1
    %p91 = por %p89, %p90
    %p92 = scmp.ne.s32.totalorder %s81, %s82
    %p93 = scmp.eq.s32.totalorder %s21, 0
    %p94 = por %p92, %p93
    %p95 = scmp.ne.s32.totalorder %s81, %s82
    %p96 = scmp.eq.s32.totalorder %s22, 1
    %p97 = por %p95, %p96
    %p99 = scmp.ne.s32.totalorder %s82, %s98
    %p100 = scmp.eq.s32.totalorder %s22, 0
    %p101 = por %p99, %p100
    %s102 = ssub.s32 %s16, %s23
    %p103 = scmp.eq.s32.totalorder %s102, 0
    %s105 = sadd.s32 %s104, 1
    %s106 = scalar_select %p103, %s104, %s105
    %p109 = pneg %p103
    %p110 = scmp.eq.s32.totalorder %s16, 1
    %p111 = por %p109, %p110
    %p112 = scmp.ne.s32.totalorder %s104, %s107
    %p113 = scmp.eq.s32.totalorder %s16, 0
    %p114 = por %p112, %p113
    %p115 = scmp.ne.s32.totalorder %s104, %s107
    %p116 = scmp.eq.s32.totalorder %s21, 1
    %p117 = por %p115, %p116
    %p118 = scmp.ne.s32.totalorder %s107, %s108
    %p119 = scmp.eq.s32.totalorder %s21, 0
    %p120 = por %p118, %p119
    %p121 = scmp.ne.s32.totalorder %s107, %s108
    %p122 = scmp.eq.s32.totalorder %s22, 1
    %p123 = por %p121, %p122
    %p125 = scmp.ne.s32.totalorder %s108, %s124
    %p126 = scmp.eq.s32.totalorder %s22, 0
    %p127 = por %p125, %p126
    %s129 = sadd.s32 %s128, 1
    %p132 = scmp.eq.s32.totalorder %s16, 1
    %p133 = scmp.ne.s32.totalorder %s128, %s130
    %p134 = scmp.eq.s32.totalorder %s16, 0
    %p135 = por %p133, %p134
    %p136 = scmp.ne.s32.totalorder %s128, %s130
    %p137 = scmp.eq.s32.totalorder %s21, 1
    %p138 = por %p136, %p137
    %p139 = scmp.ne.s32.totalorder %s130, %s131
    %p140 = scmp.eq.s32.totalorder %s21, 0
    %p141 = por %p139, %p140
    %p142 = scmp.ne.s32.totalorder %s130, %s131
    %p143 = scmp.eq.s32.totalorder %s22, 1
    %p144 = por %p142, %p143
    %p146 = scmp.ne.s32.totalorder %s131, %s145
    %p147 = scmp.eq.s32.totalorder %s22, 0
    %p148 = por %p146, %p147
    %s150 = sadd.s32 %s149, 1
    %p153 = scmp.eq.s32.totalorder %s16, 1
    %p154 = scmp.ne.s32.totalorder %s149, %s151
    %p155 = scmp.eq.s32.totalorder %s16, 0
    %p156 = por %p154, %p155
    %p157 = scmp.ne.s32.totalorder %s149, %s151
    %p158 = scmp.eq.s32.totalorder %s21, 1
    %p159 = por %p157, %p158
    %p160 = scmp.ne.s32.totalorder %s151, %s152
    %p161 = scmp.eq.s32.totalorder %s21, 0
    %p162 = por %p160, %p161
    %p163 = scmp.ne.s32.totalorder %s151, %s152
    %p164 = scmp.eq.s32.totalorder %s22, 1
    %p165 = por %p163, %p164
    %p167 = scmp.ne.s32.totalorder %s152, %s166
    %p168 = scmp.eq.s32.totalorder %s22, 0
    %p169 = por %p167, %p168
    %s171 = sadd.s32 %s170, 1
    %p174 = scmp.eq.s32.totalorder %s16, 1
    %p175 = scmp.ne.s32.totalorder %s170, %s172
    %p176 = scmp.eq.s32.totalorder %s16, 0
    %p177 = por %p175, %p176
    %p178 = scmp.ne.s32.totalorder %s170, %s172
    %p179 = scmp.eq.s32.totalorder %s21, 1
    %p180 = por %p178, %p179
    %p181 = scmp.ne.s32.totalorder %s172, %s173
    %p182 = scmp.eq.s32.totalorder %s21, 0
    %p183 = por %p181, %p182
    %p184 = scmp.ne.s32.totalorder %s172, %s173
    %p185 = scmp.eq.s32.totalorder %s22, 1
    %p186 = por %p184, %p185
    %p188 = scmp.ne.s32.totalorder %s173, %s187
    %p189 = scmp.eq.s32.totalorder %s22, 0
    %p190 = por %p188, %p189
    %s192 = sadd.s32 %s191, 1
    %p195 = scmp.eq.s32.totalorder %s16, 1
    %p196 = scmp.ne.s32.totalorder %s191, %s193
    %p197 = scmp.eq.s32.totalorder %s16, 0
    %p198 = por %p196, %p197
    %p199 = scmp.ne.s32.totalorder %s191, %s193
    %p200 = scmp.eq.s32.totalorder %s21, 1
    %p201 = por %p199, %p200
    %p202 = scmp.ne.s32.totalorder %s193, %s194
    %p203 = scmp.eq.s32.totalorder %s21, 0
    %p204 = por %p202, %p203
    %p205 = scmp.ne.s32.totalorder %s193, %s194
    %p206 = scmp.eq.s32.totalorder %s22, 1
    %p207 = por %p205, %p206
    %p209 = scmp.ne.s32.totalorder %s194, %s208
    %p210 = scmp.eq.s32.totalorder %s22, 0
    %p211 = por %p209, %p210
    %s213 = sadd.s32 %s212, 1
    %p216 = scmp.eq.s32.totalorder %s16, 1
    %p217 = scmp.ne.s32.totalorder %s212, %s214
    %p218 = scmp.eq.s32.totalorder %s16, 0
    %p219 = por %p217, %p218
    %p220 = scmp.ne.s32.totalorder %s212, %s214
    %p221 = scmp.eq.s32.totalorder %s21, 1
    %p222 = por %p220, %p221
    %p223 = scmp.ne.s32.totalorder %s214, %s215
    %p224 = scmp.eq.s32.totalorder %s21, 0
    %p225 = por %p223, %p224
    %p226 = scmp.ne.s32.totalorder %s214, %s215
    %p227 = scmp.eq.s32.totalorder %s22, 1
    %p228 = por %p226, %p227
    %p230 = scmp.ne.s32.totalorder %s215, %s229
    %p231 = scmp.eq.s32.totalorder %s22, 0
    %p232 = por %p230, %p231
    %s234 = sadd.s32 %s233, 1
    %p237 = scmp.eq.s32.totalorder %s16, 1
    %p238 = scmp.ne.s32.totalorder %s233, %s235
    %p239 = scmp.eq.s32.totalorder %s16, 0
    %p240 = por %p238, %p239
    %p241 = scmp.ne.s32.totalorder %s233, %s235
    %p242 = scmp.eq.s32.totalorder %s21, 1
    %p243 = por %p241, %p242
    %p244 = scmp.ne.s32.totalorder %s235, %s236
    %p245 = scmp.eq.s32.totalorder %s21, 0
    %p246 = por %p244, %p245
    %p247 = scmp.ne.s32.totalorder %s235, %s236
    %p248 = scmp.eq.s32.totalorder %s22, 1
    %p249 = por %p247, %p248
    %p251 = scmp.ne.s32.totalorder %s236, %s250
    %p252 = scmp.eq.s32.totalorder %s22, 0
    %p253 = por %p251, %p252
    %s254 = ssub.s32 %s16, %s23
    %p255 = scmp.eq.s32.totalorder %s254, 0
    %s257 = sadd.s32 %s256, 1
    %s258 = scalar_select %p255, %s256, %s257
    %p261 = pneg %p255
    %p262 = scmp.eq.s32.totalorder %s16, 1
    %p263 = por %p261, %p262
    %p264 = scmp.ne.s32.totalorder %s256, %s259
    %p265 = scmp.eq.s32.totalorder %s16, 0
    %p266 = por %p264, %p265
    %p267 = scmp.ne.s32.totalorder %s256, %s259
    %p268 = scmp.eq.s32.totalorder %s21, 1
    %p269 = por %p267, %p268
    %p270 = scmp.ne.s32.totalorder %s259, %s260
    %p271 = scmp.eq.s32.totalorder %s21, 0
    %p272 = por %p270, %p271
    %p273 = scmp.ne.s32.totalorder %s259, %s260
    %p274 = scmp.eq.s32.totalorder %s22, 1
    %p275 = por %p273, %p274
    %p277 = scmp.ne.s32.totalorder %s260, %s276
    %p278 = scmp.eq.s32.totalorder %s22, 0
    %p279 = por %p277, %p278
    %p280 = scmp.le.s32.totalorder 1, %s16
    %p281 = scmp.lt.s32.totalorder %s16, 3
    %p282 = pnand %p280, %p281
    %p283 = pneg %p282
    // Predicated region
    $region9: #{ifc_decoder_forward.9} parent=5 // pred_check
      _
    $region10: #{ifc_decoder_forward.9} parent=5 // pred_check_branch
      %285 = sbr.rel (%p282) target = $region12
    $region11: #{ifc_decoder_forward.9} parent=5 // pred_region
      %s286 = ssub.s32 %s16, 1
      // Predicated region
      $region13: #{ifc_decoder_forward.9} parent=11 // pred_check
        %p287 = pneg %p141
      $region14: #{ifc_decoder_forward.9} parent=11 // pred_check_branch
        %289 = sbr.rel (%p287) target = $region16
      $region15: #{ifc_decoder_forward.9} parent=11 // pred_region
        _
      $region16: #{ifc_decoder_forward.9} parent=11 // pred_fallthru
        _
      // Predicated region
      $region17: #{ifc_decoder_forward.9} parent=11 // pred_check
        %p290 = pneg %p162
      $region18: #{ifc_decoder_forward.9} parent=11 // pred_check_branch
        %292 = sbr.rel (%p290) target = $region20
      $region19: #{ifc_decoder_forward.9} parent=11 // pred_region
        _
      $region20: #{ifc_decoder_forward.9} parent=11 // pred_fallthru
        _
      // Predicated region
      $region21: #{ifc_decoder_forward.9} parent=11 // pred_check
        %p293 = pneg %p183
      $region22: #{ifc_decoder_forward.9} parent=11 // pred_check_branch
        %295 = sbr.rel (%p293) target = $region24
      $region23: #{ifc_decoder_forward.9} parent=11 // pred_region
        _
      $region24: #{ifc_decoder_forward.9} parent=11 // pred_fallthru
        _
      // Predicated region
      $region25: #{ifc_decoder_forward.9} parent=11 // pred_check
        %p296 = pneg %p204
      $region26: #{ifc_decoder_forward.9} parent=11 // pred_check_branch
        %298 = sbr.rel (%p296) target = $region28
      $region27: #{ifc_decoder_forward.9} parent=11 // pred_region
        _
      $region28: #{ifc_decoder_forward.9} parent=11 // pred_fallthru
        _
      // Predicated region
      $region29: #{ifc_decoder_forward.9} parent=11 // pred_check
        %p299 = pneg %p225
      $region30: #{ifc_decoder_forward.9} parent=11 // pred_check_branch
        %301 = sbr.rel (%p299) target = $region32
      $region31: #{ifc_decoder_forward.9} parent=11 // pred_region
        _
      $region32: #{ifc_decoder_forward.9} parent=11 // pred_fallthru
        _
      // Predicated region
      $region33: #{ifc_decoder_forward.9} parent=11 // pred_check
        %p302 = pneg %p246
      $region34: #{ifc_decoder_forward.9} parent=11 // pred_check_branch
        %304 = sbr.rel (%p302) target = $region36
      $region35: #{ifc_decoder_forward.9} parent=11 // pred_region
        _
      $region36: #{ifc_decoder_forward.9} parent=11 // pred_fallthru
        _
    $region12: #{ifc_decoder_forward.9} parent=5 // pred_fallthru
      _
    %p305 = scmp.lt.s32.totalorder %s16, 2
    // Predicated region
    $region37: #{ifc_decoder_forward.9} parent=5 // pred_check
      %p306 = pneg %p305
    $region38: #{ifc_decoder_forward.9} parent=5 // pred_check_branch
      %308 = sbr.rel (%p306) target = $region40
    $region39: #{ifc_decoder_forward.9} parent=5 // pred_region
      // Predicated region
      $region41: #{ifc_decoder_forward.9} parent=39 // pred_check
        %p309 = pneg %p36
      $region42: #{ifc_decoder_forward.9} parent=39 // pred_check_branch
        %311 = sbr.rel (%p309) target = $region44
      $region43: #{ifc_decoder_forward.9} parent=39 // pred_region
        %p312 = scmp.lt.s32.totalorder %s16, 1
        %s313 = scalar_select %p312, %s16, 1
        %s314 = smul.addr %s313, 8
        %s315 = scalar_lea.vmem %s0, %s314
      $region44: #{ifc_decoder_forward.9} parent=39 // pred_fallthru
        _
      // Predicated region
      $region45: #{ifc_decoder_forward.9} parent=39 // pred_check
        %p316 = pneg %p62
      $region46: #{ifc_decoder_forward.9} parent=39 // pred_check_branch
        %318 = sbr.rel (%p316) target = $region48
      $region47: #{ifc_decoder_forward.9} parent=39 // pred_region
        %p319 = scmp.lt.s32.totalorder %s16, 1
        %s320 = scalar_select %p319, %s16, 1
        %s321 = smul.addr %s320, 8
        %s322 = scalar_lea.vmem %s1, %s321
      $region48: #{ifc_decoder_forward.9} parent=39 // pred_fallthru
        _
      // Predicated region
      $region49: #{ifc_decoder_forward.9} parent=39 // pred_check
        %p323 = pneg %p88
      $region50: #{ifc_decoder_forward.9} parent=39 // pred_check_branch
        %325 = sbr.rel (%p323) target = $region52
      $region51: #{ifc_decoder_forward.9} parent=39 // pred_region
        %p326 = scmp.lt.s32.totalorder %s16, 1
        %s327 = scalar_select %p326, %s16, 1
        %s328 = smul.addr %s327, 5
        %s329 = smul.addr %s328, 8
        %s330 = scalar_lea.vmem %s2, %s329
      $region52: #{ifc_decoder_forward.9} parent=39 // pred_fallthru
        _
      // Predicated region
      $region53: #{ifc_decoder_forward.9} parent=39 // pred_check
        %p331 = pneg %p114
      $region54: #{ifc_decoder_forward.9} parent=39 // pred_check_branch
        %333 = sbr.rel (%p331) target = $region56
      $region55: #{ifc_decoder_forward.9} parent=39 // pred_region
        %p334 = scmp.lt.s32.totalorder %s16, 1
        %s335 = scalar_select %p334, %s16, 1
        %s336 = smul.addr %s335, 5
        %s337 = smul.addr %s336, 8
        %s338 = scalar_lea.vmem %s3, %s337
      $region56: #{ifc_decoder_forward.9} parent=39 // pred_fallthru
        _
    $region40: #{ifc_decoder_forward.9} parent=5 // pred_fallthru
      _
    %p339 = scmp.le.s32.totalorder 1, %s16
    %p340 = scmp.lt.s32.totalorder %s16, 3
    %p341 = pnand %p339, %p340
    %p342 = pneg %p341
    // Predicated region
    $region57: #{ifc_decoder_forward.9} parent=5 // pred_check
      _
    $region58: #{ifc_decoder_forward.9} parent=5 // pred_check_branch
      %344 = sbr.rel (%p341) target = $region60
    $region59: #{ifc_decoder_forward.9} parent=5 // pred_region
      %s345 = ssub.s32 %s16, 1
      %p346 = scmp.lt.s32.totalorder %s21, 1
      %s347 = scalar_select %p346, %s21, 1
      %s348 = smul.addr %s347, 8
      %s349 = scalar_lea.vmem %s0, %s348
      %p350 = pneg %p42
      %p351 = pneg %p39
      %p352 = scmp.lt.s32.totalorder %s21, 1
      %s353 = scalar_select %p352, %s21, 1
      %s354 = smul.addr %s353, 8
      %s355 = scalar_lea.vmem %s1, %s354
      %p356 = pneg %p68
      %p357 = pneg %p65
      %p358 = scmp.lt.s32.totalorder %s21, 1
      %s359 = scalar_select %p358, %s21, 1
      %s360 = smul.addr %s359, 5
      %s361 = smul.addr %s360, 8
      %s362 = scalar_lea.vmem %s2, %s361
      %p363 = pneg %p94
      %p364 = pneg %p91
      %p365 = scmp.lt.s32.totalorder %s21, 1
      %s366 = scalar_select %p365, %s21, 1
      %s367 = smul.addr %s366, 5
      %s368 = smul.addr %s367, 8
      %s369 = scalar_lea.vmem %s3, %s368
      %p370 = pneg %p120
      %p371 = pneg %p117
      %p372 = pneg %p141
      %p373 = pneg %p138
      %p374 = pneg %p162
      %p375 = pneg %p159
      %p376 = pneg %p183
      %p377 = pneg %p180
      %p378 = pneg %p204
      %p379 = pneg %p201
      %p380 = pneg %p225
      %p381 = pneg %p222
      %p382 = pneg %p246
      %p383 = pneg %p243
      %p384 = pneg %p272
      %p385 = pneg %p269
      %p386 = scmp.lt.s32.totalorder %s21, 1
      %s387 = scalar_select %p386, %s21, 1
      %s388 = smul.addr %s387, 8
      %s389 = scalar_lea.vmem %s10, %s388
      %p390 = scmp.lt.s32.totalorder %s21, 1
      %s391 = scalar_select %p390, %s21, 1
      %s392 = smul.addr %s391, 8
      %s393 = scalar_lea.vmem %s0, %s392
      %p394 = scmp.lt.s32.totalorder %s21, 1
      %s395 = scalar_select %p394, %s21, 1
      %s396 = smul.addr %s395, 8
      %s397 = scalar_lea.vmem %s1, %s396
      %p398 = scmp.lt.s32.totalorder %s21, 1
      %s399 = scalar_select %p398, %s21, 1
      %s400 = smul.addr %s399, 5
      %s401 = smul.addr %s400, 8
      %s402 = scalar_lea.vmem %s2, %s401
      %p403 = scmp.lt.s32.totalorder %s21, 1
      %s404 = scalar_select %p403, %s21, 1
      %s405 = smul.addr %s404, 5
      %s406 = smul.addr %s405, 8
      %s407 = scalar_lea.vmem %s3, %s406
      %p408 = scmp.lt.s32.totalorder %s21, 1
      %s409 = scalar_select %p408, %s21, 1
      %s410 = smul.addr %s409, 8
      %s411 = scalar_lea.vmem %s10, %s410
      %v413 = vld [vmem:[%s393] sm:$0xff]
      %v414 = vld [vmem:[%s397] sm:$0xff]
      %v415 = vadd.f32 %v413, %v414
      %v416 = vld [vmem:[%s402] sm:$0xff]
      %v417 = vld [vmem:[%s402 + $0x8] sm:$0xff]
      %v418 = vld [vmem:[%s402 + $0x10] sm:$0xff]
      %v419 = vld [vmem:[%s402 + $0x18] sm:$0xff]
      %v420 = vld [vmem:[%s402 + $0x20] sm:$0xff]
      %v421 = vld [vmem:[%s407] sm:$0xff]
      %v422 = vld [vmem:[%s407 + $0x8] sm:$0xff]
      %v423 = vld [vmem:[%s407 + $0x10] sm:$0xff]
      %v424 = vld [vmem:[%s407 + $0x18] sm:$0xff]
      %v425 = vld [vmem:[%s407 + $0x20] sm:$0xff]
      %v426 = vadd.f32 %v416, %v421
      %v427 = vadd.f32 %v417, %v422
      %v428 = vadd.f32 %v418, %v423
      %v429 = vadd.f32 %v419, %v424
      %v430 = vadd.f32 %v420, %v425
      %v431 = vld [vmem:[%s4] sm:$0xf]
      %v432 = vld [vmem:[%s4 + $0x4] sm:$0xf]
      %v433 = vld [vmem:[%s4 + $0x8] sm:$0xf]
      %v434 = vld [vmem:[%s4 + $0xc] sm:$0xf]
      %v435 = vld [vmem:[%s5] sm:$0x1]
      %v436 = vpack.c.bf16 %v415, %v415
      %v438 = vlaneseq
      %v439 = vshrl.u32 %v438, 7
      %v440 = vsub.s32 0, %v439
      %v441 = vrot.slane %v435, %v440
      %v447 = vunpack.c.l.b16 %v431
      %v448 = vunpack.c.l.b16 %v432
      %v449 = vunpack.c.l.b16 %v433
      %v450 = vunpack.c.l.b16 %v434
      %v451 = vpack.c.b16 %v448, %v447
      %v452 = vpack.c.b16 %v450, %v449
      %vm455 = vcmask 261120
      %v457 = vsel %vm455, %v436, 0
      %459 = vmatprep.subr.bf16.mxu0 0
      %460 = vmatpush1.bf16.msra.mxu0 %v451
      %461 = vmatprep.subr.bf16.mxu0 0
      %462 = vmatpush1.bf16.msra.mxu0 %v452
      %463 = vmatprep.subr.bf16.mxu0 0
      %464 = vmatpush1.bf16.msra.mxu0 0
      %465 = vmatprep.subr.bf16.mxu0 0
      %466 = vmatpush1.bf16.msra.mxu0 0
      %467 = vmatprep.subr.bf16.mxu0 0
      %468 = vmatpush1.bf16.msra.mxu0 0
      %469 = vmatprep.subr.bf16.mxu0 0
      %470 = vmatpush1.bf16.msra.mxu0 0
      %471 = vmatprep.subr.bf16.mxu0 0
      %472 = vmatpush1.bf16.msra.mxu0 0
      %473 = vmatprep.subr.bf16.mxu0 0
      %474 = vmatpush1.bf16.msra.mxu0 0
      %475 = vmatprep.subr.bf16.mxu0 0
      %476 = vmatpush1.bf16.msra.mxu0 0
      %477 = vmatprep.subr.bf16.mxu0 0
      %478 = vmatpush1.bf16.msra.mxu0 0
      %479 = vmatprep.subr.bf16.mxu0 0
      %480 = vmatpush1.bf16.msra.mxu0 0
      %481 = vmatprep.subr.bf16.mxu0 0
      %482 = vmatpush1.bf16.msra.mxu0 0
      %483 = vmatprep.subr.bf16.mxu0 0
      %484 = vmatpush1.bf16.msra.mxu0 0
      %485 = vmatprep.subr.bf16.mxu0 0
      %486 = vmatpush1.bf16.msra.mxu0 0
      %487 = vmatprep.subr.bf16.mxu0 0
      %488 = vmatpush1.bf16.msra.mxu0 0
      %489 = vmatprep.subr.bf16.mxu0 0
      %490 = vmatpush1.bf16.msra.mxu0 0
      %491 = vmatprep.mubr.bf16.mxu0 0
      %492 = vmatmul.mubr.bf16.gmra.mrb[0].mxu0 %v457
      %v493 = vpop.f32.mrb[0].mxu0
      %v494 = vadd.f32 %v441, %v493
      %v495 = vpop.f32.mrb[0].mxu0
      %v496 = vpop.f32.mrb[0].mxu0
      %v497 = vpop.f32.mrb[0].mxu0
      %498 = vdwg.mxu0
      %v499 = vpack.c.bf16 %v427, %v426
      %v500 = vpack.c.bf16 %v429, %v428
      %v501 = vpack.c.bf16 %v430, %v430
      %502 = vrot.lane.b32.xlu0 %v451, 96
      %v503 = vpop.permute.xlu0 %502
      %504 = vrot.lane.b32.xlu0 %v452, 96
      %v505 = vpop.permute.xlu0 %504
      %508 = vrot.lane.b32.xlu0 %v441, 96
      %v509 = vpop.permute.xlu0 %508
      %v512 = vsel %vm455, %v499, 0
      %v515 = vsel %vm455, %v500, 0
      %v518 = vsel %vm455, %v501, 0
      %520 = vmatprep.subr.bf16.mxu0 0
      %521 = vmatpush1.bf16.msra.mxu0 %v503
      %522 = vmatprep.subr.bf16.mxu0 0
      %523 = vmatpush1.bf16.msra.mxu0 %v505
      %524 = vmatprep.subr.bf16.mxu0 0
      %525 = vmatpush1.bf16.msra.mxu0 0
      %526 = vmatprep.subr.bf16.mxu0 0
      %527 = vmatpush1.bf16.msra.mxu0 0
      %528 = vmatprep.subr.bf16.mxu0 0
      %529 = vmatpush1.bf16.msra.mxu0 0
      %530 = vmatprep.subr.bf16.mxu0 0
      %531 = vmatpush1.bf16.msra.mxu0 0
      %532 = vmatprep.subr.bf16.mxu0 0
      %533 = vmatpush1.bf16.msra.mxu0 0
      %534 = vmatprep.subr.bf16.mxu0 0
      %535 = vmatpush1.bf16.msra.mxu0 0
      %536 = vmatprep.subr.bf16.mxu0 0
      %537 = vmatpush1.bf16.msra.mxu0 0
      %538 = vmatprep.subr.bf16.mxu0 0
      %539 = vmatpush1.bf16.msra.mxu0 0
      %540 = vmatprep.subr.bf16.mxu0 0
      %541 = vmatpush1.bf16.msra.mxu0 0
      %542 = vmatprep.subr.bf16.mxu0 0
      %543 = vmatpush1.bf16.msra.mxu0 0
      %544 = vmatprep.subr.bf16.mxu0 0
      %545 = vmatpush1.bf16.msra.mxu0 0
      %546 = vmatprep.subr.bf16.mxu0 0
      %547 = vmatpush1.bf16.msra.mxu0 0
      %548 = vmatprep.subr.bf16.mxu0 0
      %549 = vmatpush1.bf16.msra.mxu0 0
      %550 = vmatprep.subr.bf16.mxu0 0
      %551 = vmatpush1.bf16.msra.mxu0 0
      %552 = vmatprep.mubr.bf16.mxu0 0
      %553 = vmatmul.mubr.bf16.gmra.mrb[0].mxu0 %v512
      %v554 = vpop.f32.mrb[0].mxu0
      %v555 = vadd.f32 %v509, %v554
      %v556 = vpop.f32.mrb[0].mxu0
      %v557 = vpop.f32.mrb[0].mxu0
      %v558 = vadd.f32 %v509, %v557
      %v559 = vpop.f32.mrb[0].mxu0
      %560 = vmatprep.mubr.bf16.mxu0 0
      %561 = vmatmul.mubr.bf16.gmra.mrb[0].mxu0 %v515
      %v562 = vpop.f32.mrb[0].mxu0
      %v563 = vadd.f32 %v509, %v562
      %v564 = vpop.f32.mrb[0].mxu0
      %v565 = vpop.f32.mrb[0].mxu0
      %v566 = vadd.f32 %v509, %v565
      %v567 = vpop.f32.mrb[0].mxu0
      %568 = vmatprep.mubr.bf16.mxu0 0
      %569 = vmatmul.mubr.bf16.gmra.mrb[0].mxu0 %v518
      %v570 = vpop.f32.mrb[0].mxu0
      %v571 = vadd.f32 %v509, %v570
      %v572 = vpop.f32.mrb[0].mxu0
      %v573 = vpop.f32.mrb[0].mxu0
      %v574 = vpop.f32.mrb[0].mxu0
      %575 = vdwg.mxu0
      %v576 = vpack.c.bf16 %v417, %v416
      %v577 = vpack.c.bf16 %v419, %v418
      %v578 = vpack.c.bf16 %v420, %v420
      %579 = vrot.lane.b32.xlu0 %v451, 64
      %v580 = vpop.permute.xlu0 %579
      %581 = vrot.lane.b32.xlu0 %v452, 64
      %v582 = vpop.permute.xlu0 %581
      %585 = vrot.lane.b32.xlu0 %v441, 64
      %v586 = vpop.permute.xlu0 %585
      %v589 = vsel %vm455, %v576, 0
      %v592 = vsel %vm455, %v577, 0
      %v595 = vsel %vm455, %v578, 0
      %597 = vmatprep.subr.bf16.mxu0 0
      %598 = vmatpush1.bf16.msra.mxu0 %v580
      %599 = vmatprep.subr.bf16.mxu0 0
      %600 = vmatpush1.bf16.msra.mxu0 %v582
      %601 = vmatprep.subr.bf16.mxu0 0
      %602 = vmatpush1.bf16.msra.mxu0 0
      %603 = vmatprep.subr.bf16.mxu0 0
      %604 = vmatpush1.bf16.msra.mxu0 0
      %605 = vmatprep.subr.bf16.mxu0 0
      %606 = vmatpush1.bf16.msra.mxu0 0
      %607 = vmatprep.subr.bf16.mxu0 0
      %608 = vmatpush1.bf16.msra.mxu0 0
      %609 = vmatprep.subr.bf16.mxu0 0
      %610 = vmatpush1.bf16.msra.mxu0 0
      %611 = vmatprep.subr.bf16.mxu0 0
      %612 = vmatpush1.bf16.msra.mxu0 0
      %613 = vmatprep.subr.bf16.mxu0 0
      %614 = vmatpush1.bf16.msra.mxu0 0
      %615 = vmatprep.subr.bf16.mxu0 0
      %616 = vmatpush1.bf16.msra.mxu0 0
      %617 = vmatprep.subr.bf16.mxu0 0
      %618 = vmatpush1.bf16.msra.mxu0 0
      %619 = vmatprep.subr.bf16.mxu0 0
      %620 = vmatpush1.bf16.msra.mxu0 0
      %621 = vmatprep.subr.bf16.mxu0 0
      %622 = vmatpush1.bf16.msra.mxu0 0
      %623 = vmatprep.subr.bf16.mxu0 0
      %624 = vmatpush1.bf16.msra.mxu0 0
      %625 = vmatprep.subr.bf16.mxu0 0
      %626 = vmatpush1.bf16.msra.mxu0 0
      %627 = vmatprep.subr.bf16.mxu0 0
      %628 = vmatpush1.bf16.msra.mxu0 0
      %629 = vmatprep.mubr.bf16.mxu0 0
      %630 = vmatmul.mubr.bf16.gmra.mrb[0].mxu0 %v589
      %v631 = vpop.f32.mrb[0].mxu0
      %v632 = vadd.f32 %v586, %v631
      %v633 = vpop.f32.mrb[0].mxu0
      %v634 = vpop.f32.mrb[0].mxu0
      %v635 = vadd.f32 %v586, %v634
      %v636 = vpop.f32.mrb[0].mxu0
      %637 = vmatprep.mubr.bf16.mxu0 0
      %638 = vmatmul.mubr.bf16.gmra.mrb[0].mxu0 %v592
      %v639 = vpop.f32.mrb[0].mxu0
      %v640 = vadd.f32 %v586, %v639
      %v641 = vpop.f32.mrb[0].mxu0
      %v642 = vpop.f32.mrb[0].mxu0
      %v643 = vadd.f32 %v586, %v642
      %v644 = vpop.f32.mrb[0].mxu0
      %645 = vmatprep.mubr.bf16.mxu0 0
      %646 = vmatmul.mubr.bf16.gmra.mrb[0].mxu0 %v595
      %v647 = vpop.f32.mrb[0].mxu0
      %v648 = vadd.f32 %v586, %v647
      %v649 = vpop.f32.mrb[0].mxu0
      %v650 = vpop.f32.mrb[0].mxu0
      %v651 = vpop.f32.mrb[0].mxu0
      %652 = vdwg.mxu0
      %v653 = vpack.c.bf16 %v494, %v494
      %v654 = vpack.c.bf16 %v558, %v555
      %v655 = vpack.c.bf16 %v566, %v563
      %v656 = vpack.c.bf16 %v571, %v571
      %v657 = vpack.c.bf16 %v635, %v632
      %v658 = vpack.c.bf16 %v643, %v640
      %v659 = vpack.c.bf16 %v648, %v648
      %vm660 = vcmask 64512
      %v662 = vsel %vm660, %v653, 0
      %v665 = vsel %vm660, %v654, 0
      %v668 = vsel %vm660, %v655, 0
      %v671 = vsel %vm660, %v656, 0
      %673 = vmatprep.subr.bf16.mxu0 0
      %674 = vmatpush1.bf16.xpose.msra.mxu0 %v665
      %675 = vmatprep.subr.bf16.mxu0 0
      %676 = vmatpush1.bf16.xpose.msra.mxu0 %v668
      %677 = vmatprep.subr.bf16.mxu0 0
      %678 = vmatpush1.bf16.xpose.msra.mxu0 %v671
      %679 = vmatprep.subr.bf16.mxu0 0
      %680 = vmatpush1.bf16.xpose.msra.mxu0 0
      %681 = vmatprep.subr.bf16.mxu0 0
      %682 = vmatpush1.bf16.xpose.msra.mxu0 0
      %683 = vmatprep.subr.bf16.mxu0 0
      %684 = vmatpush1.bf16.xpose.msra.mxu0 0
      %685 = vmatprep.subr.bf16.mxu0 0
      %686 = vmatpush1.bf16.xpose.msra.mxu0 0
      %687 = vmatprep.subr.bf16.mxu0 0
      %688 = vmatpush1.bf16.xpose.msra.mxu0 0
      %689 = vmatprep.subr.bf16.mxu0 0
      %690 = vmatpush1.bf16.xpose.msra.mxu0 0
      %691 = vmatprep.subr.bf16.mxu0 0
      %692 = vmatpush1.bf16.xpose.msra.mxu0 0
      %693 = vmatprep.subr.bf16.mxu0 0
      %694 = vmatpush1.bf16.xpose.msra.mxu0 0
      %695 = vmatprep.subr.bf16.mxu0 0
      %696 = vmatpush1.bf16.xpose.msra.mxu0 0
      %697 = vmatprep.subr.bf16.mxu0 0
      %698 = vmatpush1.bf16.xpose.msra.mxu0 0
      %699 = vmatprep.subr.bf16.mxu0 0
      %700 = vmatpush1.bf16.xpose.msra.mxu0 0
      %701 = vmatprep.subr.bf16.mxu0 0
      %702 = vmatpush1.bf16.xpose.msra.mxu0 0
      %703 = vmatprep.subr.bf16.mxu0 0
      %704 = vmatpush1.bf16.xpose.msra.mxu0 0
      %705 = vmatprep.mubr.bf16.mxu0 0
      %706 = vmatmul.mubr.bf16.gmra.mrb[0].mxu0 %v662
      %v707 = vpop.f32.mrb[0].mxu0
      %v708 = vadd.f32 0.0, %v707
      %v709 = vpop.f32.mrb[0].mxu0
      %v710 = vpop.f32.mrb[0].mxu0
      %v711 = vpop.f32.mrb[0].mxu0
      %712 = vdwg.mxu0
      %v713 = vmul.f32 %v708, 0.35355338
      %vm714 = vcmask 326656
      %v715 = vsel %vm714, %v713, -inf
      %716 = vmax.xlane.f32.xlu0 %v715
      %v717 = vpop.xlane.xlu0 %716
      %v718 = vsub.f32 %v713, %v717
      %v719 = vmul.f32 %v718, 1.442695
      %v720 = vpow.pop %v719
      %v721 = vsel %vm714, %v720, 0.0
      %722 = vadd.xlane.f32.xlu0 %v721
      %v723 = vpop.xlane.xlu0 %722
      %v724 = vrcp.pop %v723
      %v725 = vmul.f32 %v720, %v724
      %v726 = vpack.c.bf16 %v725, %v725
      %v728 = vsel %vm714, %v726, 0
      %vm730 = vcmask 1043456
      %v732 = vsel %vm730, %v659, 0
      %734 = vmatprep.subr.bf16.mxu0 0
      %735 = vmatpush1.bf16.msra.mxu0 %v657
      %736 = vmatprep.subr.bf16.mxu0 0
      %737 = vmatpush1.bf16.msra.mxu0 %v658
      %738 = vmatprep.subr.bf16.mxu0 0
      %739 = vmatpush1.bf16.msra.mxu0 %v732
      %740 = vmatprep.subr.bf16.mxu0 0
      %741 = vmatpush1.bf16.msra.mxu0 0
      %742 = vmatprep.subr.bf16.mxu0 0
      %743 = vmatpush1.bf16.msra.mxu0 0
      %744 = vmatprep.subr.bf16.mxu0 0
      %745 = vmatpush1.bf16.msra.mxu0 0
      %746 = vmatprep.subr.bf16.mxu0 0
      %747 = vmatpush1.bf16.msra.mxu0 0
      %748 = vmatprep.subr.bf16.mxu0 0
      %749 = vmatpush1.bf16.msra.mxu0 0
      %750 = vmatprep.subr.bf16.mxu0 0
      %751 = vmatpush1.bf16.msra.mxu0 0
      %752 = vmatprep.subr.bf16.mxu0 0
      %753 = vmatpush1.bf16.msra.mxu0 0
      %754 = vmatprep.subr.bf16.mxu0 0
      %755 = vmatpush1.bf16.msra.mxu0 0
      %756 = vmatprep.subr.bf16.mxu0 0
      %757 = vmatpush1.bf16.msra.mxu0 0
      %758 = vmatprep.subr.bf16.mxu0 0
      %759 = vmatpush1.bf16.msra.mxu0 0
      %760 = vmatprep.subr.bf16.mxu0 0
      %761 = vmatpush1.bf16.msra.mxu0 0
      %762 = vmatprep.subr.bf16.mxu0 0
      %763 = vmatpush1.bf16.msra.mxu0 0
      %764 = vmatprep.subr.bf16.mxu0 0
      %765 = vmatpush1.bf16.msra.mxu0 0
      %766 = vmatprep.mubr.bf16.mxu0 0
      %767 = vmatmul.mubr.bf16.gmra.mrb[0].mxu0 %v728
      %v768 = vpop.f32.mrb[0].mxu0
      %v769 = vadd.f32 0.0, %v768
      %v770 = vpop.f32.mrb[0].mxu0
      %v771 = vpop.f32.mrb[0].mxu0
      %v772 = vpop.f32.mrb[0].mxu0
      %773 = vdwg.mxu0
      %775 = vrot.lane.b32.xlu0 %v653, 120
      %v776 = vpop.permute.xlu0 %775
      %780 = vrot.lane.b32.xlu0 %v654, 120
      %v781 = vpop.permute.xlu0 %780
      %782 = vrot.lane.b32.xlu0 %v655, 120
      %v783 = vpop.permute.xlu0 %782
      %784 = vrot.lane.b32.xlu0 %v656, 120
      %v785 = vpop.permute.xlu0 %784
      %v787 = vsel %vm660, %v776, 0
      %v790 = vsel %vm660, %v781, 0
      %v793 = vsel %vm660, %v783, 0
      %v796 = vsel %vm660, %v785, 0
      %798 = vmatprep.subr.bf16.mxu0 0
      %799 = vmatpush1.bf16.xpose.msra.mxu0 %v790
      %800 = vmatprep.subr.bf16.mxu0 0
      %801 = vmatpush1.bf16.xpose.msra.mxu0 %v793
      %802 = vmatprep.subr.bf16.mxu0 0
      %803 = vmatpush1.bf16.xpose.msra.mxu0 %v796
      %804 = vmatprep.subr.bf16.mxu0 0
      %805 = vmatpush1.bf16.xpose.msra.mxu0 0
      %806 = vmatprep.subr.bf16.mxu0 0
      %807 = vmatpush1.bf16.xpose.msra.mxu0 0
      %808 = vmatprep.subr.bf16.mxu0 0
      %809 = vmatpush1.bf16.xpose.msra.mxu0 0
      %810 = vmatprep.subr.bf16.mxu0 0
      %811 = vmatpush1.bf16.xpose.msra.mxu0 0
      %812 = vmatprep.subr.bf16.mxu0 0
      %813 = vmatpush1.bf16.xpose.msra.mxu0 0
      %814 = vmatprep.subr.bf16.mxu0 0
      %815 = vmatpush1.bf16.xpose.msra.mxu0 0
      %816 = vmatprep.subr.bf16.mxu0 0
      %817 = vmatpush1.bf16.xpose.msra.mxu0 0
      %818 = vmatprep.subr.bf16.mxu0 0
      %819 = vmatpush1.bf16.xpose.msra.mxu0 0
      %820 = vmatprep.subr.bf16.mxu0 0
      %821 = vmatpush1.bf16.xpose.msra.mxu0 0
      %822 = vmatprep.subr.bf16.mxu0 0
      %823 = vmatpush1.bf16.xpose.msra.mxu0 0
      %824 = vmatprep.subr.bf16.mxu0 0
      %825 = vmatpush1.bf16.xpose.msra.mxu0 0
      %826 = vmatprep.subr.bf16.mxu0 0
      %827 = vmatpush1.bf16.xpose.msra.mxu0 0
      %828 = vmatprep.subr.bf16.mxu0 0
      %829 = vmatpush1.bf16.xpose.msra.mxu0 0
      %830 = vmatprep.mubr.bf16.mxu0 0
      %831 = vmatmul.mubr.bf16.gmra.mrb[0].mxu0 %v787
      %v832 = vpop.f32.mrb[0].mxu0
      %v833 = vadd.f32 0.0, %v832
      %v834 = vpop.f32.mrb[0].mxu0
      %v835 = vpop.f32.mrb[0].mxu0
      %v836 = vpop.f32.mrb[0].mxu0
      %837 = vdwg.mxu0
      %v838 = vmul.f32 %v833, 0.35355338
      %v839 = vsel %vm714, %v838, -inf
      %840 = vmax.xlane.f32.xlu0 %v839
      %v841 = vpop.xlane.xlu0 %840
      %v842 = vsub.f32 %v838, %v841
      %v843 = vmul.f32 %v842, 1.442695
      %v844 = vpow.pop %v843
      %v845 = vsel %vm714, %v844, 0.0
      %846 = vadd.xlane.f32.xlu0 %v845
      %v847 = vpop.xlane.xlu0 %846
      %v848 = vrcp.pop %v847
      %v849 = vmul.f32 %v844, %v848
      %v850 = vpack.c.bf16 %v849, %v849
      %854 = vrot.lane.b32.xlu0 %v657, 120
      %v855 = vpop.permute.xlu0 %854
      %856 = vrot.lane.b32.xlu0 %v658, 120
      %v857 = vpop.permute.xlu0 %856
      %858 = vrot.lane.b32.xlu0 %v659, 120
      %v859 = vpop.permute.xlu0 %858
      %v863 = vsel %vm714, %v850, 0
      %v866 = vsel %vm730, %v859, 0
      %868 = vmatprep.subr.bf16.mxu0 0
      %869 = vmatpush1.bf16.msra.mxu0 %v855
      %870 = vmatprep.subr.bf16.mxu0 0
      %871 = vmatpush1.bf16.msra.mxu0 %v857
      %872 = vmatprep.subr.bf16.mxu0 0
      %873 = vmatpush1.bf16.msra.mxu0 %v866
      %874 = vmatprep.subr.bf16.mxu0 0
      %875 = vmatpush1.bf16.msra.mxu0 0
      %876 = vmatprep.subr.bf16.mxu0 0
      %877 = vmatpush1.bf16.msra.mxu0 0
      %878 = vmatprep.subr.bf16.mxu0 0
      %879 = vmatpush1.bf16.msra.mxu0 0
      %880 = vmatprep.subr.bf16.mxu0 0
      %881 = vmatpush1.bf16.msra.mxu0 0
      %882 = vmatprep.subr.bf16.mxu0 0
      %883 = vmatpush1.bf16.msra.mxu0 0
      %884 = vmatprep.subr.bf16.mxu0 0
      %885 = vmatpush1.bf16.msra.mxu0 0
      %886 = vmatprep.subr.bf16.mxu0 0
      %887 = vmatpush1.bf16.msra.mxu0 0
      %888 = vmatprep.subr.bf16.mxu0 0
      %889 = vmatpush1.bf16.msra.mxu0 0
      %890 = vmatprep.subr.bf16.mxu0 0
      %891 = vmatpush1.bf16.msra.mxu0 0
      %892 = vmatprep.subr.bf16.mxu0 0
      %893 = vmatpush1.bf16.msra.mxu0 0
      %894 = vmatprep.subr.bf16.mxu0 0
      %895 = vmatpush1.bf16.msra.mxu0 0
      %896 = vmatprep.subr.bf16.mxu0 0
      %897 = vmatpush1.bf16.msra.mxu0 0
      %898 = vmatprep.subr.bf16.mxu0 0
      %899 = vmatpush1.bf16.msra.mxu0 0
      %900 = vmatprep.mubr.bf16.mxu0 0
      %901 = vmatmul.mubr.bf16.gmra.mrb[0].mxu0 %v863
      %v902 = vpop.f32.mrb[0].mxu0
      %v903 = vadd.f32 0.0, %v902
      %v904 = vpop.f32.mrb[0].mxu0
      %v905 = vpop.f32.mrb[0].mxu0
      %v906 = vpop.f32.mrb[0].mxu0
      %907 = vdwg.mxu0
      %908 = vrot.lane.b32.xlu0 %v653, 112
      %v909 = vpop.permute.xlu0 %908
      %910 = vrot.lane.b32.xlu0 %v654, 112
      %v911 = vpop.permute.xlu0 %910
      %912 = vrot.lane.b32.xlu0 %v655, 112
      %v913 = vpop.permute.xlu0 %912
      %914 = vrot.lane.b32.xlu0 %v656, 112
      %v915 = vpop.permute.xlu0 %914
      %v917 = vsel %vm660, %v909, 0
      %v920 = vsel %vm660, %v911, 0
      %v923 = vsel %vm660, %v913, 0
      %v926 = vsel %vm660, %v915, 0
      %928 = vmatprep.subr.bf16.mxu0 0
      %929 = vmatpush1.bf16.xpose.msra.mxu0 %v920
      %930 = vmatprep.subr.bf16.mxu0 0
      %931 = vmatpush1.bf16.xpose.msra.mxu0 %v923
      %932 = vmatprep.subr.bf16.mxu0 0
      %933 = vmatpush1.bf16.xpose.msra.mxu0 %v926
      %934 = vmatprep.subr.bf16.mxu0 0
      %935 = vmatpush1.bf16.xpose.msra.mxu0 0
      %936 = vmatprep.subr.bf16.mxu0 0
      %937 = vmatpush1.bf16.xpose.msra.mxu0 0
      %938 = vmatprep.subr.bf16.mxu0 0
      %939 = vmatpush1.bf16.xpose.msra.mxu0 0
      %940 = vmatprep.subr.bf16.mxu0 0
      %941 = vmatpush1.bf16.xpose.msra.mxu0 0
      %942 = vmatprep.subr.bf16.mxu0 0
      %943 = vmatpush1.bf16.xpose.msra.mxu0 0
      %944 = vmatprep.subr.bf16.mxu0 0
      %945 = vmatpush1.bf16.xpose.msra.mxu0 0
      %946 = vmatprep.subr.bf16.mxu0 0
      %947 = vmatpush1.bf16.xpose.msra.mxu0 0
      %948 = vmatprep.subr.bf16.mxu0 0
      %949 = vmatpush1.bf16.xpose.msra.mxu0 0
      %950 = vmatprep.subr.bf16.mxu0 0
      %951 = vmatpush1.bf16.xpose.msra.mxu0 0
      %952 = vmatprep.subr.bf16.mxu0 0
      %953 = vmatpush1.bf16.xpose.msra.mxu0 0
      %954 = vmatprep.subr.bf16.mxu0 0
      %955 = vmatpush1.bf16.xpose.msra.mxu0 0
      %956 = vmatprep.subr.bf16.mxu0 0
      %957 = vmatpush1.bf16.xpose.msra.mxu0 0
      %958 = vmatprep.subr.bf16.mxu0 0
      %959 = vmatpush1.bf16.xpose.msra.mxu0 0
      %960 = vmatprep.mubr.bf16.mxu0 0
      %961 = vmatmul.mubr.bf16.gmra.mrb[0].mxu0 %v917
      %v962 = vpop.f32.mrb[0].mxu0
      %v963 = vadd.f32 0.0, %v962
      %v964 = vpop.f32.mrb[0].mxu0
      %v965 = vpop.f32.mrb[0].mxu0
      %v966 = vpop.f32.mrb[0].mxu0
      %967 = vdwg.mxu0
      %v968 = vmul.f32 %v963, 0.35355338
      %v969 = vsel %vm714, %v968, -inf
      %970 = vmax.xlane.f32.xlu0 %v969
      %v971 = vpop.xlane.xlu0 %970
      %v972 = vsub.f32 %v968, %v971
      %v973 = vmul.f32 %v972, 1.442695
      %v974 = vpow.pop %v973
      %v975 = vsel %vm714, %v974, 0.0
      %976 = vadd.xlane.f32.xlu0 %v975
      %v977 = vpop.xlane.xlu0 %976
      %v978 = vrcp.pop %v977
      %v979 = vmul.f32 %v974, %v978
      %v980 = vpack.c.bf16 %v979, %v979
      %981 = vrot.lane.b32.xlu0 %v657, 112
      %v982 = vpop.permute.xlu0 %981
      %983 = vrot.lane.b32.xlu0 %v658, 112
      %v984 = vpop.permute.xlu0 %983
      %985 = vrot.lane.b32.xlu0 %v659, 112
      %v986 = vpop.permute.xlu0 %985
      %v990 = vsel %vm714, %v980, 0
      %v993 = vsel %vm730, %v986, 0
      %995 = vmatprep.subr.bf16.mxu0 0
      %996 = vmatpush1.bf16.msra.mxu0 %v982
      %997 = vmatprep.subr.bf16.mxu0 0
      %998 = vmatpush1.bf16.msra.mxu0 %v984
      %999 = vmatprep.subr.bf16.mxu0 0
      %1000 = vmatpush1.bf16.msra.mxu0 %v993
      %1001 = vmatprep.subr.bf16.mxu0 0
      %1002 = vmatpush1.bf16.msra.mxu0 0
      %1003 = vmatprep.subr.bf16.mxu0 0
      %1004 = vmatpush1.bf16.msra.mxu0 0
      %1005 = vmatprep.subr.bf16.mxu0 0
      %1006 = vmatpush1.bf16.msra.mxu0 0
      %1007 = vmatprep.subr.bf16.mxu0 0
      %1008 = vmatpush1.bf16.msra.mxu0 0
      %1009 = vmatprep.subr.bf16.mxu0 0
      %1010 = vmatpush1.bf16.msra.mxu0 0
      %1011 = vmatprep.subr.bf16.mxu0 0
      %1012 = vmatpush1.bf16.msra.mxu0 0
      %1013 = vmatprep.subr.bf16.mxu0 0
      %1014 = vmatpush1.bf16.msra.mxu0 0
      %1015 = vmatprep.subr.bf16.mxu0 0
      %1016 = vmatpush1.bf16.msra.mxu0 0
      %1017 = vmatprep.subr.bf16.mxu0 0
      %1018 = vmatpush1.bf16.msra.mxu0 0
      %1019 = vmatprep.subr.bf16.mxu0 0
      %1020 = vmatpush1.bf16.msra.mxu0 0
      %1021 = vmatprep.subr.bf16.mxu0 0
      %1022 = vmatpush1.bf16.msra.mxu0 0
      %1023 = vmatprep.subr.bf16.mxu0 0
      %1024 = vmatpush1.bf16.msra.mxu0 0
      %1025 = vmatprep.subr.bf16.mxu0 0
      %1026 = vmatpush1.bf16.msra.mxu0 0
      %1027 = vmatprep.mubr.bf16.mxu0 0
      %1028 = vmatmul.mubr.bf16.gmra.mrb[0].mxu0 %v990
      %v1029 = vpop.f32.mrb[0].mxu0
      %v1030 = vadd.f32 0.0, %v1029
      %v1031 = vpop.f32.mrb[0].mxu0
      %v1032 = vpop.f32.mrb[0].mxu0
      %v1033 = vpop.f32.mrb[0].mxu0
      %1034 = vdwg.mxu0
      %1035 = vrot.lane.b32.xlu0 %v653, 104
      %v1036 = vpop.permute.xlu0 %1035
      %1037 = vrot.lane.b32.xlu0 %v654, 104
      %v1038 = vpop.permute.xlu0 %1037
      %1039 = vrot.lane.b32.xlu0 %v655, 104
      %v1040 = vpop.permute.xlu0 %1039
      %1041 = vrot.lane.b32.xlu0 %v656, 104
      %v1042 = vpop.permute.xlu0 %1041
      %v1044 = vsel %vm660, %v1036, 0
      %v1047 = vsel %vm660, %v1038, 0
      %v1050 = vsel %vm660, %v1040, 0
      %v1053 = vsel %vm660, %v1042, 0
      %1055 = vmatprep.subr.bf16.mxu0 0
      %1056 = vmatpush1.bf16.xpose.msra.mxu0 %v1047
      %1057 = vmatprep.subr.bf16.mxu0 0
      %1058 = vmatpush1.bf16.xpose.msra.mxu0 %v1050
      %1059 = vmatprep.subr.bf16.mxu0 0
      %1060 = vmatpush1.bf16.xpose.msra.mxu0 %v1053
      %1061 = vmatprep.subr.bf16.mxu0 0
      %1062 = vmatpush1.bf16.xpose.msra.mxu0 0
      %1063 = vmatprep.subr.bf16.mxu0 0
      %1064 = vmatpush1.bf16.xpose.msra.mxu0 0
      %1065 = vmatprep.subr.bf16.mxu0 0
      %1066 = vmatpush1.bf16.xpose.msra.mxu0 0
      %1067 = vmatprep.subr.bf16.mxu0 0
      %1068 = vmatpush1.bf16.xpose.msra.mxu0 0
      %1069 = vmatprep.subr.bf16.mxu0 0
      %1070 = vmatpush1.bf16.xpose.msra.mxu0 0
      %1071 = vmatprep.subr.bf16.mxu0 0
      %1072 = vmatpush1.bf16.xpose.msra.mxu0 0
      %1073 = vmatprep.subr.bf16.mxu0 0
      %1074 = vmatpush1.bf16.xpose.msra.mxu0 0
      %1075 = vmatprep.subr.bf16.mxu0 0
      %1076 = vmatpush1.bf16.xpose.msra.mxu0 0
      %1077 = vmatprep.subr.bf16.mxu0 0
      %1078 = vmatpush1.bf16.xpose.msra.mxu0 0
      %1079 = vmatprep.subr.bf16.mxu0 0
      %1080 = vmatpush1.bf16.xpose.msra.mxu0 0
      %1081 = vmatprep.subr.bf16.mxu0 0
      %1082 = vmatpush1.bf16.xpose.msra.mxu0 0
      %1083 = vmatprep.subr.bf16.mxu0 0
      %1084 = vmatpush1.bf16.xpose.msra.mxu0 0
      %1085 = vmatprep.subr.bf16.mxu0 0
      %1086 = vmatpush1.bf16.xpose.msra.mxu0 0
      %1087 = vmatprep.mubr.bf16.mxu0 0
      %1088 = vmatmul.mubr.bf16.gmra.mrb[0].mxu0 %v1044
      %v1089 = vpop.f32.mrb[0].mxu0
      %v1090 = vadd.f32 0.0, %v1089
      %v1091 = vpop.f32.mrb[0].mxu0
      %v1092 = vpop.f32.mrb[0].mxu0
      %v1093 = vpop.f32.mrb[0].mxu0
      %1094 = vdwg.mxu0
      %v1095 = vmul.f32 %v1090, 0.35355338
      %v1096 = vsel %vm714, %v1095, -inf
      %1097 = vmax.xlane.f32.xlu0 %v1096
      %v1098 = vpop.xlane.xlu0 %1097
      %v1099 = vsub.f32 %v1095, %v1098
      %v1100 = vmul.f32 %v1099, 1.442695
      %v1101 = vpow.pop %v1100
      %v1102 = vsel %vm714, %v1101, 0.0
      %1103 = vadd.xlane.f32.xlu0 %v1102
      %v1104 = vpop.xlane.xlu0 %1103
      %v1105 = vrcp.pop %v1104
      %v1106 = vmul.f32 %v1101, %v1105
      %v1107 = vpack.c.bf16 %v1106, %v1106
      %1108 = vrot.lane.b32.xlu0 %v657, 104
      %v1109 = vpop.permute.xlu0 %1108
      %1110 = vrot.lane.b32.xlu0 %v658, 104
      %v1111 = vpop.permute.xlu0 %1110
      %1112 = vrot.lane.b32.xlu0 %v659, 104
      %v1113 = vpop.permute.xlu0 %1112
      %v1117 = vsel %vm714, %v1107, 0
      %v1120 = vsel %vm730, %v1113, 0
      %1122 = vmatprep.subr.bf16.mxu0 0
      %1123 = vmatpush1.bf16.msra.mxu0 %v1109
      %1124 = vmatprep.subr.bf16.mxu0 0
      %1125 = vmatpush1.bf16.msra.mxu0 %v1111
      %1126 = vmatprep.subr.bf16.mxu0 0
      %1127 = vmatpush1.bf16.msra.mxu0 %v1120
      %1128 = vmatprep.subr.bf16.mxu0 0
      %1129 = vmatpush1.bf16.msra.mxu0 0
      %1130 = vmatprep.subr.bf16.mxu0 0
      %1131 = vmatpush1.bf16.msra.mxu0 0
      %1132 = vmatprep.subr.bf16.mxu0 0
      %1133 = vmatpush1.bf16.msra.mxu0 0
      %1134 = vmatprep.subr.bf16.mxu0 0
      %1135 = vmatpush1.bf16.msra.mxu0 0
      %1136 = vmatprep.subr.bf16.mxu0 0
      %1137 = vmatpush1.bf16.msra.mxu0 0
      %1138 = vmatprep.subr.bf16.mxu0 0
      %1139 = vmatpush1.bf16.msra.mxu0 0
      %1140 = vmatprep.subr.bf16.mxu0 0
      %1141 = vmatpush1.bf16.msra.mxu0 0
      %1142 = vmatprep.subr.bf16.mxu0 0
      %1143 = vmatpush1.bf16.msra.mxu0 0
      %1144 = vmatprep.subr.bf16.mxu0 0
      %1145 = vmatpush1.bf16.msra.mxu0 0
      %1146 = vmatprep.subr.bf16.mxu0 0
      %1147 = vmatpush1.bf16.msra.mxu0 0
      %1148 = vmatprep.subr.bf16.mxu0 0
      %1149 = vmatpush1.bf16.msra.mxu0 0
      %1150 = vmatprep.subr.bf16.mxu0 0
      %1151 = vmatpush1.bf16.msra.mxu0 0
      %1152 = vmatprep.subr.bf16.mxu0 0
      %1153 = vmatpush1.bf16.msra.mxu0 0
      %1154 = vmatprep.mubr.bf16.mxu0 0
      %1155 = vmatmul.mubr.bf16.gmra.mrb[0].mxu0 %v1117
      %v1156 = vpop.f32.mrb[0].mxu0
      %v1157 = vadd.f32 0.0, %v1156
      %v1158 = vpop.f32.mrb[0].mxu0
      %v1159 = vpop.f32.mrb[0].mxu0
      %v1160 = vpop.f32.mrb[0].mxu0
      %1161 = vdwg.mxu0
      %1163 = vrot.lane.b32.xlu0 %v903, 8
      %v1164 = vpop.permute.xlu0 %1163
      %1167 = vrot.lane.b32.xlu0 %v1030, 16
      %v1168 = vpop.permute.xlu0 %1167
      %1171 = vrot.lane.b32.xlu0 %v1157, 24
      %v1172 = vpop.permute.xlu0 %1171
      %v1174 = vsel %vm660, %v769, %v1164
      %vm1175 = vcmask 130048
      %v1176 = vsel %vm1175, %v1174, %v1168
      %vm1177 = vcmask 195584
      %v1178 = vsel %vm1177, %v1176, %v1172
      %v1179 = vpack.c.bf16 %v1178, %v1178
      %v1180 = vld [vmem:[%s6] sm:$0xf]
      %v1181 = vld [vmem:[%s6 + $0x4] sm:$0xf]
      %v1182 = vld [vmem:[%s6 + $0x8] sm:$0xf]
      %v1183 = vld [vmem:[%s6 + $0xc] sm:$0xf]
      %v1184 = vld [vmem:[%s7] sm:$0x1]
      %v1186 = vlaneseq
      %v1187 = vshrl.u32 %v1186, 7
      %v1188 = vsub.s32 0, %v1187
      %v1189 = vrot.slane %v1184, %v1188
      %v1195 = vunpack.c.l.b16 %v1180
      %v1196 = vunpack.c.l.b16 %v1181
      %v1197 = vunpack.c.l.b16 %v1182
      %v1198 = vunpack.c.l.b16 %v1183
      %v1199 = vpack.c.b16 %v1196, %v1195
      %v1200 = vpack.c.b16 %v1198, %v1197
      %v1204 = vsel %vm455, %v1179, 0
      %1206 = vmatprep.subr.bf16.mxu0 0
      %1207 = vmatpush1.bf16.msra.mxu0 %v1199
      %1208 = vmatprep.subr.bf16.mxu0 0
      %1209 = vmatpush1.bf16.msra.mxu0 %v1200
      %1210 = vmatprep.subr.bf16.mxu0 0
      %1211 = vmatpush1.bf16.msra.mxu0 0
      %1212 = vmatprep.subr.bf16.mxu0 0
      %1213 = vmatpush1.bf16.msra.mxu0 0
      %1214 = vmatprep.subr.bf16.mxu0 0
      %1215 = vmatpush1.bf16.msra.mxu0 0
      %1216 = vmatprep.subr.bf16.mxu0 0
      %1217 = vmatpush1.bf16.msra.mxu0 0
      %1218 = vmatprep.subr.bf16.mxu0 0
      %1219 = vmatpush1.bf16.msra.mxu0 0
      %1220 = vmatprep.subr.bf16.mxu0 0
      %1221 = vmatpush1.bf16.msra.mxu0 0
      %1222 = vmatprep.subr.bf16.mxu0 0
      %1223 = vmatpush1.bf16.msra.mxu0 0
      %1224 = vmatprep.subr.bf16.mxu0 0
      %1225 = vmatpush1.bf16.msra.mxu0 0
      %1226 = vmatprep.subr.bf16.mxu0 0
      %1227 = vmatpush1.bf16.msra.mxu0 0
      %1228 = vmatprep.subr.bf16.mxu0 0
      %1229 = vmatpush1.bf16.msra.mxu0 0
      %1230 = vmatprep.subr.bf16.mxu0 0
      %1231 = vmatpush1.bf16.msra.mxu0 0
      %1232 = vmatprep.subr.bf16.mxu0 0
      %1233 = vmatpush1.bf16.msra.mxu0 0
      %1234 = vmatprep.subr.bf16.mxu0 0
      %1235 = vmatpush1.bf16.msra.mxu0 0
      %1236 = vmatprep.subr.bf16.mxu0 0
      %1237 = vmatpush1.bf16.msra.mxu0 0
      %1238 = vmatprep.mubr.bf16.mxu0 0
      %1239 = vmatmul.mubr.bf16.gmra.mrb[0].mxu0 %v1204
      %v1240 = vpop.f32.mrb[0].mxu0
      %v1241 = vadd.f32 %v1189, %v1240
      %v1242 = vpop.f32.mrb[0].mxu0
      %v1243 = vpop.f32.mrb[0].mxu0
      %v1244 = vpop.f32.mrb[0].mxu0
      %1245 = vdwg.mxu0
      %v1246 = vadd.f32 %v413, %v1241
      %v1247 = vld [vmem:[%s8] sm:$0x1]
      %v1248 = vld [vmem:[%s9] sm:$0x1]
      %v1249 = vsel %vm455, %v1246, 0.0
      %1250 = vadd.xlane.f32.xlu0 %v1249
      %v1251 = vpop.xlane.xlu0 %1250
      %v1252 = vrcp.pop 32.0
      %v1253 = vmul.f32 %v1251, %v1252
      %v1254 = vsub.f32 %v1246, %v1253
      %v1255 = vmul.f32 %v1254, %v1254
      %v1256 = vsel %vm455, %v1255, 0.0
      %1257 = vadd.xlane.f32.xlu0 %v1256
      %v1258 = vpop.xlane.xlu0 %1257
      %v1259 = vmul.f32 %v1258, %v1252
      %v1260 = vadd.f32 %v1259, 1e-05
      %v1261 = vrsqrt.pop %v1260
      %v1262 = vmul.f32 %v1254, %v1261
      %v1264 = vlaneseq
      %v1265 = vshrl.u32 %v1264, 7
      %v1266 = vsub.s32 0, %v1265
      %v1267 = vrot.slane %v1247, %v1266
      %v1269 = vmul.f32 %v1262, %v1267
      %v1271 = vlaneseq
      %v1272 = vshrl.u32 %v1271, 7
      %v1273 = vsub.s32 0, %v1272
      %v1274 = vrot.slane %v1248, %v1273
      %v1276 = vadd.f32 %v1269, %v1274
      %1277 = vst.msk [vmem:[%s411] sm:$0xff] %vm455, %v1276
      %p1278 = scmp.lt.s32.totalorder %s21, 1
      %s1279 = scalar_select %p1278, %s21, 1
      %s1280 = smul.addr %s1279, 8
      %s1281 = scalar_lea.vmem %s10, %s1280
      // Predicated region
      $region61: #{ifc_decoder_forward.9} parent=59 // pred_check
        %p1282 = pneg %p269
      $region62: #{ifc_decoder_forward.9} parent=59 // pred_check_branch
        %1284 = sbr.rel (%p1282) target = $region64
      $region63: #{ifc_decoder_forward.9} parent=59 // pred_region
        _
      $region64: #{ifc_decoder_forward.9} parent=59 // pred_fallthru
        _
    $region60: #{ifc_decoder_forward.9} parent=5 // pred_fallthru
      _
    %p1285 = scmp.le.s32.totalorder 2, %s16
    // Predicated region
    $region65: #{ifc_decoder_forward.9} parent=5 // pred_check
      %p1286 = pneg %p1285
    $region66: #{ifc_decoder_forward.9} parent=5 // pred_check_branch
      %1288 = sbr.rel (%p1286) target = $region68
    $region67: #{ifc_decoder_forward.9} parent=5 // pred_region
      %s1289 = ssub.s32 %s16, 2
      // Predicated region
      $region69: #{ifc_decoder_forward.9} parent=67 // pred_check
        %p1290 = pneg %p275
      $region70: #{ifc_decoder_forward.9} parent=67 // pred_check_branch
        %1292 = sbr.rel (%p1290) target = $region72
      $region71: #{ifc_decoder_forward.9} parent=67 // pred_region
        %p1293 = scmp.lt.s32.totalorder %s22, 1
        %s1294 = scalar_select %p1293, %s22, 1
        %s1295 = smul.addr %s1294, 8
        %s1296 = scalar_lea.vmem %s10, %s1295
      $region72: #{ifc_decoder_forward.9} parent=67 // pred_fallthru
        _
    $region68: #{ifc_decoder_forward.9} parent=5 // pred_fallthru
      _
  $region6: #{ifc_decoder_forward.9} parent=0 // loop_footer
    %s20 = sadd.s32 1, %s16
  $region7: #{ifc_decoder_forward.9} parent=0 // loop_footer_branch
    %15 = sbr.rel target = $region3
  $region8: #{ifc_decoder_forward.9} parent=0 // loop_exit
    _

// kernel: ifc_decoder_forward.8
$region0: #{ifc_decoder_forward.8}
  #allocation0 [shape = 'u32[]', space=smem, size = 0x4, offset = 0x4, fixed_abs, tag = 'smem constant byte address 0x4 - core index']
  #allocation1 [shape = 'u32[144,128]{1,0:T(1,128)}', space=vmem, size = 0x12000, scoped, tag = 'internal scratch']
  %s0 = inlined_call_operand.vmem [shape: f32[2,8,32], index: 0, kind: input, shape index: {}, may-alias: {0,2}]
  %s1 = inlined_call_operand.vmem [shape: f32[2,8,32], index: 1, kind: input, shape index: {}, may-alias: {1,3}]
  %s2 = inlined_call_operand.vmem [shape: f32[2,8,32], index: 2, kind: input, shape index: {}, may-alias: {0,2}]
  %s3 = inlined_call_operand.vmem [shape: f32[2,8,32], index: 3, kind: input, shape index: {}, may-alias: {1,3}]
  %s4 = inlined_call_operand.vmem [shape: bf16[32,96], index: 4, kind: input, shape index: {}]
  %s5 = inlined_call_operand.vmem [shape: f32[1,96], index: 5, kind: input, shape index: {}]
  %s6 = inlined_call_operand.vmem [shape: bf16[32,32], index: 6, kind: input, shape index: {}]
  %s7 = inlined_call_operand.vmem [shape: f32[1,32], index: 7, kind: input, shape index: {}]
  %s8 = inlined_call_operand.vmem [shape: f32[1,32], index: 8, kind: input, shape index: {}]
  %s9 = inlined_call_operand.vmem [shape: f32[1,32], index: 9, kind: input, shape index: {}]
  %s10 = inlined_call_operand.vmem [shape: f32[2,8,32], index: 10, kind: output, shape index: {}]
  %s11 = sld [smem:[#allocation0]]
  $region73: #{ifc_decoder_forward.8} parent=0
    _
  %s13 = ssub.s32 1, %s11
  %s14 = scalar_select 0, %s13, %s11
  loop: start=0, step=1, limit=4
  $region2: #{ifc_decoder_forward.8} parent=0 // loop_pre_header
    _
  $region3: #{ifc_decoder_forward.8} parent=0 // loop_header
    %s16 = sphi 0, %s20
    %p17 = scmp.ge.s32.totalorder %s16, 4
    %s26 = sphi 0, %s28
    %s29 = sphi 0, %s26
    %s30 = sphi 0, %s29
    %s46 = sphi 0, %s30
    %s52 = sphi 0, %s54
    %s55 = sphi 0, %s52
    %s56 = sphi 0, %s55
    %s72 = sphi 0, %s56
    %s78 = sphi 0, %s80
    %s81 = sphi 0, %s78
    %s82 = sphi 0, %s81
    %s98 = sphi 0, %s82
    %s104 = sphi 0, %s106
    %s107 = sphi 0, %s104
    %s108 = sphi 0, %s107
    %s124 = sphi 0, %s108
    %s128 = sphi 0, %s128
    %s130 = sphi 0, %s128
    %s131 = sphi 0, %s130
    %s145 = sphi 0, %s131
    %s149 = sphi 0, %s149
    %s151 = sphi 0, %s149
    %s152 = sphi 0, %s151
    %s166 = sphi 0, %s152
    %s170 = sphi 0, %s170
    %s172 = sphi 0, %s170
    %s173 = sphi 0, %s172
    %s187 = sphi 0, %s173
    %s191 = sphi 0, %s191
    %s193 = sphi 0, %s191
    %s194 = sphi 0, %s193
    %s208 = sphi 0, %s194
    %s212 = sphi 0, %s212
    %s214 = sphi 0, %s212
    %s215 = sphi 0, %s214
    %s229 = sphi 0, %s215
    %s233 = sphi 0, %s233
    %s235 = sphi 0, %s233
    %s236 = sphi 0, %s235
    %s250 = sphi 0, %s236
    %s256 = sphi 0, %s258
    %s259 = sphi 0, %s256
    %s260 = sphi 0, %s259
    %s276 = sphi 0, %s260
  $region4: #{ifc_decoder_forward.8} parent=0 // loop_header_branch
    %19 = sbr.rel (%p17) target = $region8
  $region5: #{ifc_decoder_forward.8} parent=0 // loop_body
    %s21 = ssub.s32 %s16, 1
    %s22 = ssub.s32 %s16, 2
    %s23 = sadd.s32 %s16, 1
    %s24 = ssub.s32 %s16, %s23
    %p25 = scmp.eq.s32.totalorder %s24, 0
    %s27 = sadd.s32 %s26, 1
    %s28 = scalar_select %p25, %s26, %s27
    %p31 = pneg %p25
    %p32 = scmp.eq.s32.totalorder %s16, 1
    %p33 = por %p31, %p32
    %p34 = scmp.ne.s32.totalorder %s26, %s29
    %p35 = scmp.eq.s32.totalorder %s16, 0
    %p36 = por %p34, %p35
    %p37 = scmp.ne.s32.totalorder %s26, %s29
    %p38 = scmp.eq.s32.totalorder %s21, 1
    %p39 = por %p37, %p38
    %p40 = scmp.ne.s32.totalorder %s29, %s30
    %p41 = scmp.eq.s32.totalorder %s21, 0
    %p42 = por %p40, %p41
    %p43 = scmp.ne.s32.totalorder %s29, %s30
    %p44 = scmp.eq.s32.totalorder %s22, 1
    %p45 = por %p43, %p44
    %p47 = scmp.ne.s32.totalorder %s30, %s46
    %p48 = scmp.eq.s32.totalorder %s22, 0
    %p49 = por %p47, %p48
    %s50 = ssub.s32 %s16, %s23
    %p51 = scmp.eq.s32.totalorder %s50, 0
    %s53 = sadd.s32 %s52, 1
    %s54 = scalar_select %p51, %s52, %s53
    %p57 = pneg %p51
    %p58 = scmp.eq.s32.totalorder %s16, 1
    %p59 = por %p57, %p58
    %p60 = scmp.ne.s32.totalorder %s52, %s55
    %p61 = scmp.eq.s32.totalorder %s16, 0
    %p62 = por %p60, %p61
    %p63 = scmp.ne.s32.totalorder %s52, %s55
    %p64 = scmp.eq.s32.totalorder %s21, 1
    %p65 = por %p63, %p64
    %p66 = scmp.ne.s32.totalorder %s55, %s56
    %p67 = scmp.eq.s32.totalorder %s21, 0
    %p68 = por %p66, %p67
    %p69 = scmp.ne.s32.totalorder %s55, %s56
    %p70 = scmp.eq.s32.totalorder %s22, 1
    %p71 = por %p69, %p70
    %p73 = scmp.ne.s32.totalorder %s56, %s72
    %p74 = scmp.eq.s32.totalorder %s22, 0
    %p75 = por %p73, %p74
    %s76 = ssub.s32 %s16, %s23
    %p77 = scmp.eq.s32.totalorder %s76, 0
    %s79 = sadd.s32 %s78, 1
    %s80 = scalar_select %p77, %s78, %s79
    %p83 = pneg %p77
    %p84 = scmp.eq.s32.totalorder %s16, 1
    %p85 = por %p83, %p84
    %p86 = scmp.ne.s32.totalorder %s78, %s81
    %p87 = scmp.eq.s32.totalorder %s16, 0
    %p88 = por %p86, %p87
    %p89 = scmp.ne.s32.totalorder %s78, %s81
    %p90 = scmp.eq.s32.totalorder %s21, 1
    %p91 = por %p89, %p90
    %p92 = scmp.ne.s32.totalorder %s81, %s82
    %p93 = scmp.eq.s32.totalorder %s21, 0
    %p94 = por %p92, %p93
    %p95 = scmp.ne.s32.totalorder %s81, %s82
    %p96 = scmp.eq.s32.totalorder %s22, 1
    %p97 = por %p95, %p96
    %p99 = scmp.ne.s32.totalorder %s82, %s98
    %p100 = scmp.eq.s32.totalorder %s22, 0
    %p101 = por %p99, %p100
    %s102 = ssub.s32 %s16, %s23
    %p103 = scmp.eq.s32.totalorder %s102, 0
    %s105 = sadd.s32 %s104, 1
    %s106 = scalar_select %p103, %s104, %s105
    %p109 = pneg %p103
    %p110 = scmp.eq.s32.totalorder %s16, 1
    %p111 = por %p109, %p110
    %p112 = scmp.ne.s32.totalorder %s104, %s107
    %p113 = scmp.eq.s32.totalorder %s16, 0
    %p114 = por %p112, %p113
    %p115 = scmp.ne.s32.totalorder %s104, %s107
    %p116 = scmp.eq.s32.totalorder %s21, 1
    %p117 = por %p115, %p116
    %p118 = scmp.ne.s32.totalorder %s107, %s108
    %p119 = scmp.eq.s32.totalorder %s21, 0
    %p120 = por %p118, %p119
    %p121 = scmp.ne.s32.totalorder %s107, %s108
    %p122 = scmp.eq.s32.totalorder %s22, 1
    %p123 = por %p121, %p122
    %p125 = scmp.ne.s32.totalorder %s108, %s124
    %p126 = scmp.eq.s32.totalorder %s22, 0
    %p127 = por %p125, %p126
    %s129 = sadd.s32 %s128, 1
    %p132 = scmp.eq.s32.totalorder %s16, 1
    %p133 = scmp.ne.s32.totalorder %s128, %s130
    %p134 = scmp.eq.s32.totalorder %s16, 0
    %p135 = por %p133, %p134
    %p136 = scmp.ne.s32.totalorder %s128, %s130
    %p137 = scmp.eq.s32.totalorder %s21, 1
    %p138 = por %p136, %p137
    %p139 = scmp.ne.s32.totalorder %s130, %s131
    %p140 = scmp.eq.s32.totalorder %s21, 0
    %p141 = por %p139, %p140
    %p142 = scmp.ne.s32.totalorder %s130, %s131
    %p143 = scmp.eq.s32.totalorder %s22, 1
    %p144 = por %p142, %p143
    %p146 = scmp.ne.s32.totalorder %s131, %s145
    %p147 = scmp.eq.s32.totalorder %s22, 0
    %p148 = por %p146, %p147
    %s150 = sadd.s32 %s149, 1
    %p153 = scmp.eq.s32.totalorder %s16, 1
    %p154 = scmp.ne.s32.totalorder %s149, %s151
    %p155 = scmp.eq.s32.totalorder %s16, 0
    %p156 = por %p154, %p155
    %p157 = scmp.ne.s32.totalorder %s149, %s151
    %p158 = scmp.eq.s32.totalorder %s21, 1
    %p159 = por %p157, %p158
    %p160 = scmp.ne.s32.totalorder %s151, %s152
    %p161 = scmp.eq.s32.totalorder %s21, 0
    %p162 = por %p160, %p161
    %p163 = scmp.ne.s32.totalorder %s151, %s152
    %p164 = scmp.eq.s32.totalorder %s22, 1
    %p165 = por %p163, %p164
    %p167 = scmp.ne.s32.totalorder %s152, %s166
    %p168 = scmp.eq.s32.totalorder %s22, 0
    %p169 = por %p167, %p168
    %s171 = sadd.s32 %s170, 1
    %p174 = scmp.eq.s32.totalorder %s16, 1
    %p175 = scmp.ne.s32.totalorder %s170, %s172
    %p176 = scmp.eq.s32.totalorder %s16, 0
    %p177 = por %p175, %p176
    %p178 = scmp.ne.s32.totalorder %s170, %s172
    %p179 = scmp.eq.s32.totalorder %s21, 1
    %p180 = por %p178, %p179
    %p181 = scmp.ne.s32.totalorder %s172, %s173
    %p182 = scmp.eq.s32.totalorder %s21, 0
    %p183 = por %p181, %p182
    %p184 = scmp.ne.s32.totalorder %s172, %s173
    %p185 = scmp.eq.s32.totalorder %s22, 1
    %p186 = por %p184, %p185
    %p188 = scmp.ne.s32.totalorder %s173, %s187
    %p189 = scmp.eq.s32.totalorder %s22, 0
    %p190 = por %p188, %p189
    %s192 = sadd.s32 %s191, 1
    %p195 = scmp.eq.s32.totalorder %s16, 1
    %p196 = scmp.ne.s32.totalorder %s191, %s193
    %p197 = scmp.eq.s32.totalorder %s16, 0
    %p198 = por %p196, %p197
    %p199 = scmp.ne.s32.totalorder %s191, %s193
    %p200 = scmp.eq.s32.totalorder %s21, 1
    %p201 = por %p199, %p200
    %p202 = scmp.ne.s32.totalorder %s193, %s194
    %p203 = scmp.eq.s32.totalorder %s21, 0
    %p204 = por %p202, %p203
    %p205 = scmp.ne.s32.totalorder %s193, %s194
    %p206 = scmp.eq.s32.totalorder %s22, 1
    %p207 = por %p205, %p206
    %p209 = scmp.ne.s32.totalorder %s194, %s208
    %p210 = scmp.eq.s32.totalorder %s22, 0
    %p211 = por %p209, %p210
    %s213 = sadd.s32 %s212, 1
    %p216 = scmp.eq.s32.totalorder %s16, 1
    %p217 = scmp.ne.s32.totalorder %s212, %s214
    %p218 = scmp.eq.s32.totalorder %s16, 0
    %p219 = por %p217, %p218
    %p220 = scmp.ne.s32.totalorder %s212, %s214
    %p221 = scmp.eq.s32.totalorder %s21, 1
    %p222 = por %p220, %p221
    %p223 = scmp.ne.s32.totalorder %s214, %s215
    %p224 = scmp.eq.s32.totalorder %s21, 0
    %p225 = por %p223, %p224
    %p226 = scmp.ne.s32.totalorder %s214, %s215
    %p227 = scmp.eq.s32.totalorder %s22, 1
    %p228 = por %p226, %p227
    %p230 = scmp.ne.s32.totalorder %s215, %s229
    %p231 = scmp.eq.s32.totalorder %s22, 0
    %p232 = por %p230, %p231
    %s234 = sadd.s32 %s233, 1
    %p237 = scmp.eq.s32.totalorder %s16, 1
    %p238 = scmp.ne.s32.totalorder %s233, %s235
    %p239 = scmp.eq.s32.totalorder %s16, 0
    %p240 = por %p238, %p239
    %p241 = scmp.ne.s32.totalorder %s233, %s235
    %p242 = scmp.eq.s32.totalorder %s21, 1
    %p243 = por %p241, %p242
    %p244 = scmp.ne.s32.totalorder %s235, %s236
    %p245 = scmp.eq.s32.totalorder %s21, 0
    %p246 = por %p244, %p245
    %p247 = scmp.ne.s32.totalorder %s235, %s236
    %p248 = scmp.eq.s32.totalorder %s22, 1
    %p249 = por %p247, %p248
    %p251 = scmp.ne.s32.totalorder %s236, %s250
    %p252 = scmp.eq.s32.totalorder %s22, 0
    %p253 = por %p251, %p252
    %s254 = ssub.s32 %s16, %s23
    %p255 = scmp.eq.s32.totalorder %s254, 0
    %s257 = sadd.s32 %s256, 1
    %s258 = scalar_select %p255, %s256, %s257
    %p261 = pneg %p255
    %p262 = scmp.eq.s32.totalorder %s16, 1
    %p263 = por %p261, %p262
    %p264 = scmp.ne.s32.totalorder %s256, %s259
    %p265 = scmp.eq.s32.totalorder %s16, 0
    %p266 = por %p264, %p265
    %p267 = scmp.ne.s32.totalorder %s256, %s259
    %p268 = scmp.eq.s32.totalorder %s21, 1
    %p269 = por %p267, %p268
    %p270 = scmp.ne.s32.totalorder %s259, %s260
    %p271 = scmp.eq.s32.totalorder %s21, 0
    %p272 = por %p270, %p271
    %p273 = scmp.ne.s32.totalorder %s259, %s260
    %p274 = scmp.eq.s32.totalorder %s22, 1
    %p275 = por %p273, %p274
    %p277 = scmp.ne.s32.totalorder %s260, %s276
    %p278 = scmp.eq.s32.totalorder %s22, 0
    %p279 = por %p277, %p278
    %p280 = scmp.le.s32.totalorder 1, %s16
    %p281 = scmp.lt.s32.totalorder %s16, 3
    %p282 = pnand %p280, %p281
    %p283 = pneg %p282
    // Predicated region
    $region9: #{ifc_decoder_forward.8} parent=5 // pred_check
      _
    $region10: #{ifc_decoder_forward.8} parent=5 // pred_check_branch
      %285 = sbr.rel (%p282) target = $region12
    $region11: #{ifc_decoder_forward.8} parent=5 // pred_region
      %s286 = ssub.s32 %s16, 1
      // Predicated region
      $region13: #{ifc_decoder_forward.8} parent=11 // pred_check
        %p287 = pneg %p141
      $region14: #{ifc_decoder_forward.8} parent=11 // pred_check_branch
        %289 = sbr.rel (%p287) target = $region16
      $region15: #{ifc_decoder_forward.8} parent=11 // pred_region
        _
      $region16: #{ifc_decoder_forward.8} parent=11 // pred_fallthru
        _
      // Predicated region
      $region17: #{ifc_decoder_forward.8} parent=11 // pred_check
        %p290 = pneg %p162
      $region18: #{ifc_decoder_forward.8} parent=11 // pred_check_branch
        %292 = sbr.rel (%p290) target = $region20
      $region19: #{ifc_decoder_forward.8} parent=11 // pred_region
        _
      $region20: #{ifc_decoder_forward.8} parent=11 // pred_fallthru
        _
      // Predicated region
      $region21: #{ifc_decoder_forward.8} parent=11 // pred_check
        %p293 = pneg %p183
      $region22: #{ifc_decoder_forward.8} parent=11 // pred_check_branch
        %295 = sbr.rel (%p293) target = $region24
      $region23: #{ifc_decoder_forward.8} parent=11 // pred_region
        _
      $region24: #{ifc_decoder_forward.8} parent=11 // pred_fallthru
        _
      // Predicated region
      $region25: #{ifc_decoder_forward.8} parent=11 // pred_check
        %p296 = pneg %p204
      $region26: #{ifc_decoder_forward.8} parent=11 // pred_check_branch
        %298 = sbr.rel (%p296) target = $region28
      $region27: #{ifc_decoder_forward.8} parent=11 // pred_region
        _
      $region28: #{ifc_decoder_forward.8} parent=11 // pred_fallthru
        _
      // Predicated region
      $region29: #{ifc_decoder_forward.8} parent=11 // pred_check
        %p299 = pneg %p225
      $region30: #{ifc_decoder_forward.8} parent=11 // pred_check_branch
        %301 = sbr.rel (%p299) target = $region32
      $region31: #{ifc_decoder_forward.8} parent=11 // pred_region
        _
      $region32: #{ifc_decoder_forward.8} parent=11 // pred_fallthru
        _
      // Predicated region
      $region33: #{ifc_decoder_forward.8} parent=11 // pred_check
        %p302 = pneg %p246
      $region34: #{ifc_decoder_forward.8} parent=11 // pred_check_branch
        %304 = sbr.rel (%p302) target = $region36
      $region35: #{ifc_decoder_forward.8} parent=11 // pred_region
        _
      $region36: #{ifc_decoder_forward.8} parent=11 // pred_fallthru
        _
    $region12: #{ifc_decoder_forward.8} parent=5 // pred_fallthru
      _
    %p305 = scmp.lt.s32.totalorder %s16, 2
    // Predicated region
    $region37: #{ifc_decoder_forward.8} parent=5 // pred_check
      %p306 = pneg %p305
    $region38: #{ifc_decoder_forward.8} parent=5 // pred_check_branch
      %308 = sbr.rel (%p306) target = $region40
    $region39: #{ifc_decoder_forward.8} parent=5 // pred_region
      // Predicated region
      $region41: #{ifc_decoder_forward.8} parent=39 // pred_check
        %p309 = pneg %p36
      $region42: #{ifc_decoder_forward.8} parent=39 // pred_check_branch
        %311 = sbr.rel (%p309) target = $region44
      $region43: #{ifc_decoder_forward.8} parent=39 // pred_region
        %p312 = scmp.lt.s32.totalorder %s16, 1
        %s313 = scalar_select %p312, %s16, 1
        %s314 = smul.addr %s313, 8
        %s315 = scalar_lea.vmem %s0, %s314
      $region44: #{ifc_decoder_forward.8} parent=39 // pred_fallthru
        _
      // Predicated region
      $region45: #{ifc_decoder_forward.8} parent=39 // pred_check
        %p316 = pneg %p62
      $region46: #{ifc_decoder_forward.8} parent=39 // pred_check_branch
        %318 = sbr.rel (%p316) target = $region48
      $region47: #{ifc_decoder_forward.8} parent=39 // pred_region
        %p319 = scmp.lt.s32.totalorder %s16, 1
        %s320 = scalar_select %p319, %s16, 1
        %s321 = smul.addr %s320, 8
        %s322 = scalar_lea.vmem %s1, %s321
      $region48: #{ifc_decoder_forward.8} parent=39 // pred_fallthru
        _
      // Predicated region
      $region49: #{ifc_decoder_forward.8} parent=39 // pred_check
        %p323 = pneg %p88
      $region50: #{ifc_decoder_forward.8} parent=39 // pred_check_branch
        %325 = sbr.rel (%p323) target = $region52
      $region51: #{ifc_decoder_forward.8} parent=39 // pred_region
        %p326 = scmp.lt.s32.totalorder %s16, 1
        %s327 = scalar_select %p326, %s16, 1
        %s328 = smul.addr %s327, 8
        %s329 = scalar_lea.vmem %s2, %s328
      $region52: #{ifc_decoder_forward.8} parent=39 // pred_fallthru
        _
      // Predicated region
      $region53: #{ifc_decoder_forward.8} parent=39 // pred_check
        %p330 = pneg %p114
      $region54: #{ifc_decoder_forward.8} parent=39 // pred_check_branch
        %332 = sbr.rel (%p330) target = $region56
      $region55: #{ifc_decoder_forward.8} parent=39 // pred_region
        %p333 = scmp.lt.s32.totalorder %s16, 1
        %s334 = scalar_select %p333, %s16, 1
        %s335 = smul.addr %s334, 8
        %s336 = scalar_lea.vmem %s3, %s335
      $region56: #{ifc_decoder_forward.8} parent=39 // pred_fallthru
        _
    $region40: #{ifc_decoder_forward.8} parent=5 // pred_fallthru
      _
    %p337 = scmp.le.s32.totalorder 1, %s16
    %p338 = scmp.lt.s32.totalorder %s16, 3
    %p339 = pnand %p337, %p338
    %p340 = pneg %p339
    // Predicated region
    $region57: #{ifc_decoder_forward.8} parent=5 // pred_check
      _
    $region58: #{ifc_decoder_forward.8} parent=5 // pred_check_branch
      %342 = sbr.rel (%p339) target = $region60
    $region59: #{ifc_decoder_forward.8} parent=5 // pred_region
      %s343 = ssub.s32 %s16, 1
      %p344 = scmp.lt.s32.totalorder %s21, 1
      %s345 = scalar_select %p344, %s21, 1
      %s346 = smul.addr %s345, 8
      %s347 = scalar_lea.vmem %s0, %s346
      %p348 = pneg %p42
      %p349 = pneg %p39
      %p350 = scmp.lt.s32.totalorder %s21, 1
      %s351 = scalar_select %p350, %s21, 1
      %s352 = smul.addr %s351, 8
      %s353 = scalar_lea.vmem %s1, %s352
      %p354 = pneg %p68
      %p355 = pneg %p65
      %p356 = scmp.lt.s32.totalorder %s21, 1
      %s357 = scalar_select %p356, %s21, 1
      %s358 = smul.addr %s357, 8
      %s359 = scalar_lea.vmem %s2, %s358
      %p360 = pneg %p94
      %p361 = pneg %p91
      %p362 = scmp.lt.s32.totalorder %s21, 1
      %s363 = scalar_select %p362, %s21, 1
      %s364 = smul.addr %s363, 8
      %s365 = scalar_lea.vmem %s3, %s364
      %p366 = pneg %p120
      %p367 = pneg %p117
      %p368 = pneg %p141
      %p369 = pneg %p138
      %p370 = pneg %p162
      %p371 = pneg %p159
      %p372 = pneg %p183
      %p373 = pneg %p180
      %p374 = pneg %p204
      %p375 = pneg %p201
      %p376 = pneg %p225
      %p377 = pneg %p222
      %p378 = pneg %p246
      %p379 = pneg %p243
      %p380 = pneg %p272
      %p381 = pneg %p269
      %p382 = scmp.lt.s32.totalorder %s21, 1
      %s383 = scalar_select %p382, %s21, 1
      %s384 = smul.addr %s383, 8
      %s385 = scalar_lea.vmem %s10, %s384
      %p386 = scmp.lt.s32.totalorder %s21, 1
      %s387 = scalar_select %p386, %s21, 1
      %s388 = smul.addr %s387, 8
      %s389 = scalar_lea.vmem %s0, %s388
      %p390 = scmp.lt.s32.totalorder %s21, 1
      %s391 = scalar_select %p390, %s21, 1
      %s392 = smul.addr %s391, 8
      %s393 = scalar_lea.vmem %s1, %s392
      %p394 = scmp.lt.s32.totalorder %s21, 1
      %s395 = scalar_select %p394, %s21, 1
      %s396 = smul.addr %s395, 8
      %s397 = scalar_lea.vmem %s2, %s396
      %p398 = scmp.lt.s32.totalorder %s21, 1
      %s399 = scalar_select %p398, %s21, 1
      %s400 = smul.addr %s399, 8
      %s401 = scalar_lea.vmem %s3, %s400
      %p402 = scmp.lt.s32.totalorder %s21, 1
      %s403 = scalar_select %p402, %s21, 1
      %s404 = smul.addr %s403, 8
      %s405 = scalar_lea.vmem %s10, %s404
      %v407 = vld [vmem:[%s389] sm:$0xff]
      %v408 = vld [vmem:[%s393] sm:$0xff]
      %v409 = vadd.f32 %v407, %v408
      %v410 = vld [vmem:[%s397] sm:$0xff]
      %v411 = vld [vmem:[%s401] sm:$0xff]
      %v412 = vadd.f32 %v410, %v411
      %v413 = vld [vmem:[%s4] sm:$0xf]
      %v414 = vld [vmem:[%s4 + $0x4] sm:$0xf]
      %v415 = vld [vmem:[%s4 + $0x8] sm:$0xf]
      %v416 = vld [vmem:[%s4 + $0xc] sm:$0xf]
      %v417 = vld [vmem:[%s5] sm:$0x1]
      %v418 = vpack.c.bf16 %v409, %v409
      %v420 = vlaneseq
      %v421 = vshrl.u32 %v420, 7
      %v422 = vsub.s32 0, %v421
      %v423 = vrot.slane %v417, %v422
      %v429 = vunpack.c.l.b16 %v413
      %v430 = vunpack.c.l.b16 %v414
      %v431 = vunpack.c.l.b16 %v415
      %v432 = vunpack.c.l.b16 %v416
      %v433 = vpack.c.b16 %v430, %v429
      %v434 = vpack.c.b16 %v432, %v431
      %vm437 = vcmask 261120
      %v439 = vsel %vm437, %v418, 0
      %441 = vmatprep.subr.bf16.mxu0 0
      %442 = vmatpush1.bf16.msra.mxu0 %v433
      %443 = vmatprep.subr.bf16.mxu0 0
      %444 = vmatpush1.bf16.msra.mxu0 %v434
      %445 = vmatprep.subr.bf16.mxu0 0
      %446 = vmatpush1.bf16.msra.mxu0 0
      %447 = vmatprep.subr.bf16.mxu0 0
      %448 = vmatpush1.bf16.msra.mxu0 0
      %449 = vmatprep.subr.bf16.mxu0 0
      %450 = vmatpush1.bf16.msra.mxu0 0
      %451 = vmatprep.subr.bf16.mxu0 0
      %452 = vmatpush1.bf16.msra.mxu0 0
      %453 = vmatprep.subr.bf16.mxu0 0
      %454 = vmatpush1.bf16.msra.mxu0 0
      %455 = vmatprep.subr.bf16.mxu0 0
      %456 = vmatpush1.bf16.msra.mxu0 0
      %457 = vmatprep.subr.bf16.mxu0 0
      %458 = vmatpush1.bf16.msra.mxu0 0
      %459 = vmatprep.subr.bf16.mxu0 0
      %460 = vmatpush1.bf16.msra.mxu0 0
      %461 = vmatprep.subr.bf16.mxu0 0
      %462 = vmatpush1.bf16.msra.mxu0 0
      %463 = vmatprep.subr.bf16.mxu0 0
      %464 = vmatpush1.bf16.msra.mxu0 0
      %465 = vmatprep.subr.bf16.mxu0 0
      %466 = vmatpush1.bf16.msra.mxu0 0
      %467 = vmatprep.subr.bf16.mxu0 0
      %468 = vmatpush1.bf16.msra.mxu0 0
      %469 = vmatprep.subr.bf16.mxu0 0
      %470 = vmatpush1.bf16.msra.mxu0 0
      %471 = vmatprep.subr.bf16.mxu0 0
      %472 = vmatpush1.bf16.msra.mxu0 0
      %473 = vmatprep.mubr.bf16.mxu0 0
      %474 = vmatmul.mubr.bf16.gmra.mrb[0].mxu0 %v439
      %v475 = vpop.f32.mrb[0].mxu0
      %v476 = vadd.f32 %v423, %v475
      %v477 = vpop.f32.mrb[0].mxu0
      %v478 = vpop.f32.mrb[0].mxu0
      %v479 = vpop.f32.mrb[0].mxu0
      %480 = vdwg.mxu0
      %v481 = vpack.c.bf16 %v412, %v412
      %482 = vrot.lane.b32.xlu0 %v433, 96
      %v483 = vpop.permute.xlu0 %482
      %484 = vrot.lane.b32.xlu0 %v434, 96
      %v485 = vpop.permute.xlu0 %484
      %488 = vrot.lane.b32.xlu0 %v423, 96
      %v489 = vpop.permute.xlu0 %488
      %v492 = vsel %vm437, %v481, 0
      %494 = vmatprep.subr.bf16.mxu0 0
      %495 = vmatpush1.bf16.msra.mxu0 %v483
      %496 = vmatprep.subr.bf16.mxu0 0
      %497 = vmatpush1.bf16.msra.mxu0 %v485
      %498 = vmatprep.subr.bf16.mxu0 0
      %499 = vmatpush1.bf16.msra.mxu0 0
      %500 = vmatprep.subr.bf16.mxu0 0
      %501 = vmatpush1.bf16.msra.mxu0 0
      %502 = vmatprep.subr.bf16.mxu0 0
      %503 = vmatpush1.bf16.msra.mxu0 0
      %504 = vmatprep.subr.bf16.mxu0 0
      %505 = vmatpush1.bf16.msra.mxu0 0
      %506 = vmatprep.subr.bf16.mxu0 0
      %507 = vmatpush1.bf16.msra.mxu0 0
      %508 = vmatprep.subr.bf16.mxu0 0
      %509 = vmatpush1.bf16.msra.mxu0 0
      %510 = vmatprep.subr.bf16.mxu0 0
      %511 = vmatpush1.bf16.msra.mxu0 0
      %512 = vmatprep.subr.bf16.mxu0 0
      %513 = vmatpush1.bf16.msra.mxu0 0
      %514 = vmatprep.subr.bf16.mxu0 0
      %515 = vmatpush1.bf16.msra.mxu0 0
      %516 = vmatprep.subr.bf16.mxu0 0
      %517 = vmatpush1.bf16.msra.mxu0 0
      %518 = vmatprep.subr.bf16.mxu0 0
      %519 = vmatpush1.bf16.msra.mxu0 0
      %520 = vmatprep.subr.bf16.mxu0 0
      %521 = vmatpush1.bf16.msra.mxu0 0
      %522 = vmatprep.subr.bf16.mxu0 0
      %523 = vmatpush1.bf16.msra.mxu0 0
      %524 = vmatprep.subr.bf16.mxu0 0
      %525 = vmatpush1.bf16.msra.mxu0 0
      %526 = vmatprep.mubr.bf16.mxu0 0
      %527 = vmatmul.mubr.bf16.gmra.mrb[0].mxu0 %v492
      %v528 = vpop.f32.mrb[0].mxu0
      %v529 = vadd.f32 %v489, %v528
      %v530 = vpop.f32.mrb[0].mxu0
      %v531 = vpop.f32.mrb[0].mxu0
      %v532 = vpop.f32.mrb[0].mxu0
      %533 = vdwg.mxu0
      %v534 = vpack.c.bf16 %v410, %v410
      %535 = vrot.lane.b32.xlu0 %v433, 64
      %v536 = vpop.permute.xlu0 %535
      %537 = vrot.lane.b32.xlu0 %v434, 64
      %v538 = vpop.permute.xlu0 %537
      %541 = vrot.lane.b32.xlu0 %v423, 64
      %v542 = vpop.permute.xlu0 %541
      %v545 = vsel %vm437, %v534, 0
      %547 = vmatprep.subr.bf16.mxu0 0
      %548 = vmatpush1.bf16.msra.mxu0 %v536
      %549 = vmatprep.subr.bf16.mxu0 0
      %550 = vmatpush1.bf16.msra.mxu0 %v538
      %551 = vmatprep.subr.bf16.mxu0 0
      %552 = vmatpush1.bf16.msra.mxu0 0
      %553 = vmatprep.subr.bf16.mxu0 0
      %554 = vmatpush1.bf16.msra.mxu0 0
      %555 = vmatprep.subr.bf16.mxu0 0
      %556 = vmatpush1.bf16.msra.mxu0 0
      %557 = vmatprep.subr.bf16.mxu0 0
      %558 = vmatpush1.bf16.msra.mxu0 0
      %559 = vmatprep.subr.bf16.mxu0 0
      %560 = vmatpush1.bf16.msra.mxu0 0
      %561 = vmatprep.subr.bf16.mxu0 0
      %562 = vmatpush1.bf16.msra.mxu0 0
      %563 = vmatprep.subr.bf16.mxu0 0
      %564 = vmatpush1.bf16.msra.mxu0 0
      %565 = vmatprep.subr.bf16.mxu0 0
      %566 = vmatpush1.bf16.msra.mxu0 0
      %567 = vmatprep.subr.bf16.mxu0 0
      %568 = vmatpush1.bf16.msra.mxu0 0
      %569 = vmatprep.subr.bf16.mxu0 0
      %570 = vmatpush1.bf16.msra.mxu0 0
      %571 = vmatprep.subr.bf16.mxu0 0
      %572 = vmatpush1.bf16.msra.mxu0 0
      %573 = vmatprep.subr.bf16.mxu0 0
      %574 = vmatpush1.bf16.msra.mxu0 0
      %575 = vmatprep.subr.bf16.mxu0 0
      %576 = vmatpush1.bf16.msra.mxu0 0
      %577 = vmatprep.subr.bf16.mxu0 0
      %578 = vmatpush1.bf16.msra.mxu0 0
      %579 = vmatprep.mubr.bf16.mxu0 0
      %580 = vmatmul.mubr.bf16.gmra.mrb[0].mxu0 %v545
      %v581 = vpop.f32.mrb[0].mxu0
      %v582 = vadd.f32 %v542, %v581
      %v583 = vpop.f32.mrb[0].mxu0
      %v584 = vpop.f32.mrb[0].mxu0
      %v585 = vpop.f32.mrb[0].mxu0
      %586 = vdwg.mxu0
      %v587 = vpack.c.bf16 %v476, %v476
      %v588 = vpack.c.bf16 %v529, %v529
      %v589 = vpack.c.bf16 %v582, %v582
      %vm590 = vcmask 64512
      %v592 = vsel %vm590, %v587, 0
      %v595 = vsel %vm590, %v588, 0
      %597 = vmatprep.subr.bf16.mxu0 0
      %598 = vmatpush1.bf16.xpose.msra.mxu0 %v595
      %599 = vmatprep.subr.bf16.mxu0 0
      %600 = vmatpush1.bf16.xpose.msra.mxu0 0
      %601 = vmatprep.subr.bf16.mxu0 0
      %602 = vmatpush1.bf16.xpose.msra.mxu0 0
      %603 = vmatprep.subr.bf16.mxu0 0
      %604 = vmatpush1.bf16.xpose.msra.mxu0 0
      %605 = vmatprep.subr.bf16.mxu0 0
      %606 = vmatpush1.bf16.xpose.msra.mxu0 0
      %607 = vmatprep.subr.bf16.mxu0 0
      %608 = vmatpush1.bf16.xpose.msra.mxu0 0
      %609 = vmatprep.subr.bf16.mxu0 0
      %610 = vmatpush1.bf16.xpose.msra.mxu0 0
      %611 = vmatprep.subr.bf16.mxu0 0
      %612 = vmatpush1.bf16.xpose.msra.mxu0 0
      %613 = vmatprep.subr.bf16.mxu0 0
      %614 = vmatpush1.bf16.xpose.msra.mxu0 0
      %615 = vmatprep.subr.bf16.mxu0 0
      %616 = vmatpush1.bf16.xpose.msra.mxu0 0
      %617 = vmatprep.subr.bf16.mxu0 0
      %618 = vmatpush1.bf16.xpose.msra.mxu0 0
      %619 = vmatprep.subr.bf16.mxu0 0
      %620 = vmatpush1.bf16.xpose.msra.mxu0 0
      %621 = vmatprep.subr.bf16.mxu0 0
      %622 = vmatpush1.bf16.xpose.msra.mxu0 0
      %623 = vmatprep.subr.bf16.mxu0 0
      %624 = vmatpush1.bf16.xpose.msra.mxu0 0
      %625 = vmatprep.subr.bf16.mxu0 0
      %626 = vmatpush1.bf16.xpose.msra.mxu0 0
      %627 = vmatprep.subr.bf16.mxu0 0
      %628 = vmatpush1.bf16.xpose.msra.mxu0 0
      %629 = vmatprep.mubr.bf16.mxu0 0
      %630 = vmatmul.mubr.bf16.gmra.mrb[0].mxu0 %v592
      %v631 = vpop.f32.mrb[0].mxu0
      %v632 = vadd.f32 0.0, %v631
      %v633 = vpop.f32.mrb[0].mxu0
      %v634 = vpop.f32.mrb[0].mxu0
      %v635 = vpop.f32.mrb[0].mxu0
      %636 = vdwg.mxu0
      %v637 = vmul.f32 %v632, 0.35355338
      %v638 = vsel %vm590, %v637, -inf
      %639 = vmax.xlane.f32.xlu0 %v638
      %v640 = vpop.xlane.xlu0 %639
      %v641 = vsub.f32 %v637, %v640
      %v642 = vmul.f32 %v641, 1.442695
      %v643 = vpow.pop %v642
      %v644 = vsel %vm590, %v643, 0.0
      %645 = vadd.xlane.f32.xlu0 %v644
      %v646 = vpop.xlane.xlu0 %645
      %v647 = vrcp.pop %v646
      %v648 = vmul.f32 %v643, %v647
      %v649 = vpack.c.bf16 %v648, %v648
      %v651 = vsel %vm590, %v649, 0
      %vm653 = vcmask 1043456
      %v655 = vsel %vm653, %v589, 0
      %657 = vmatprep.subr.bf16.mxu0 0
      %658 = vmatpush1.bf16.msra.mxu0 %v655
      %659 = vmatprep.subr.bf16.mxu0 0
      %660 = vmatpush1.bf16.msra.mxu0 0
      %661 = vmatprep.subr.bf16.mxu0 0
      %662 = vmatpush1.bf16.msra.mxu0 0
      %663 = vmatprep.subr.bf16.mxu0 0
      %664 = vmatpush1.bf16.msra.mxu0 0
      %665 = vmatprep.subr.bf16.mxu0 0
      %666 = vmatpush1.bf16.msra.mxu0 0
      %667 = vmatprep.subr.bf16.mxu0 0
      %668 = vmatpush1.bf16.msra.mxu0 0
      %669 = vmatprep.subr.bf16.mxu0 0
      %670 = vmatpush1.bf16.msra.mxu0 0
      %671 = vmatprep.subr.bf16.mxu0 0
      %672 = vmatpush1.bf16.msra.mxu0 0
      %673 = vmatprep.subr.bf16.mxu0 0
      %674 = vmatpush1.bf16.msra.mxu0 0
      %675 = vmatprep.subr.bf16.mxu0 0
      %676 = vmatpush1.bf16.msra.mxu0 0
      %677 = vmatprep.subr.bf16.mxu0 0
      %678 = vmatpush1.bf16.msra.mxu0 0
      %679 = vmatprep.subr.bf16.mxu0 0
      %680 = vmatpush1.bf16.msra.mxu0 0
      %681 = vmatprep.subr.bf16.mxu0 0
      %682 = vmatpush1.bf16.msra.mxu0 0
      %683 = vmatprep.subr.bf16.mxu0 0
      %684 = vmatpush1.bf16.msra.mxu0 0
      %685 = vmatprep.subr.bf16.mxu0 0
      %686 = vmatpush1.bf16.msra.mxu0 0
      %687 = vmatprep.subr.bf16.mxu0 0
      %688 = vmatpush1.bf16.msra.mxu0 0
      %689 = vmatprep.mubr.bf16.mxu0 0
      %690 = vmatmul.mubr.bf16.gmra.mrb[0].mxu0 %v651
      %v691 = vpop.f32.mrb[0].mxu0
      %v692 = vadd.f32 0.0, %v691
      %v693 = vpop.f32.mrb[0].mxu0
      %v694 = vpop.f32.mrb[0].mxu0
      %v695 = vpop.f32.mrb[0].mxu0
      %696 = vdwg.mxu0
      %698 = vrot.lane.b32.xlu0 %v587, 120
      %v699 = vpop.permute.xlu0 %698
      %701 = vrot.lane.b32.xlu0 %v588, 120
      %v702 = vpop.permute.xlu0 %701
      %v704 = vsel %vm590, %v699, 0
      %v707 = vsel %vm590, %v702, 0
      %709 = vmatprep.subr.bf16.mxu0 0
      %710 = vmatpush1.bf16.xpose.msra.mxu0 %v707
      %711 = vmatprep.subr.bf16.mxu0 0
      %712 = vmatpush1.bf16.xpose.msra.mxu0 0
      %713 = vmatprep.subr.bf16.mxu0 0
      %714 = vmatpush1.bf16.xpose.msra.mxu0 0
      %715 = vmatprep.subr.bf16.mxu0 0
      %716 = vmatpush1.bf16.xpose.msra.mxu0 0
      %717 = vmatprep.subr.bf16.mxu0 0
      %718 = vmatpush1.bf16.xpose.msra.mxu0 0
      %719 = vmatprep.subr.bf16.mxu0 0
      %720 = vmatpush1.bf16.xpose.msra.mxu0 0
      %721 = vmatprep.subr.bf16.mxu0 0
      %722 = vmatpush1.bf16.xpose.msra.mxu0 0
      %723 = vmatprep.subr.bf16.mxu0 0
      %724 = vmatpush1.bf16.xpose.msra.mxu0 0
      %725 = vmatprep.subr.bf16.mxu0 0
      %726 = vmatpush1.bf16.xpose.msra.mxu0 0
      %727 = vmatprep.subr.bf16.mxu0 0
      %728 = vmatpush1.bf16.xpose.msra.mxu0 0
      %729 = vmatprep.subr.bf16.mxu0 0
      %730 = vmatpush1.bf16.xpose.msra.mxu0 0
      %731 = vmatprep.subr.bf16.mxu0 0
      %732 = vmatpush1.bf16.xpose.msra.mxu0 0
      %733 = vmatprep.subr.bf16.mxu0 0
      %734 = vmatpush1.bf16.xpose.msra.mxu0 0
      %735 = vmatprep.subr.bf16.mxu0 0
      %736 = vmatpush1.bf16.xpose.msra.mxu0 0
      %737 = vmatprep.subr.bf16.mxu0 0
      %738 = vmatpush1.bf16.xpose.msra.mxu0 0
      %739 = vmatprep.subr.bf16.mxu0 0
      %740 = vmatpush1.bf16.xpose.msra.mxu0 0
      %741 = vmatprep.mubr.bf16.mxu0 0
      %742 = vmatmul.mubr.bf16.gmra.mrb[0].mxu0 %v704
      %v743 = vpop.f32.mrb[0].mxu0
      %v744 = vadd.f32 0.0, %v743
      %v745 = vpop.f32.mrb[0].mxu0
      %v746 = vpop.f32.mrb[0].mxu0
      %v747 = vpop.f32.mrb[0].mxu0
      %748 = vdwg.mxu0
      %v749 = vmul.f32 %v744, 0.35355338
      %v750 = vsel %vm590, %v749, -inf
      %751 = vmax.xlane.f32.xlu0 %v750
      %v752 = vpop.xlane.xlu0 %751
      %v753 = vsub.f32 %v749, %v752
      %v754 = vmul.f32 %v753, 1.442695
      %v755 = vpow.pop %v754
      %v756 = vsel %vm590, %v755, 0.0
      %757 = vadd.xlane.f32.xlu0 %v756
      %v758 = vpop.xlane.xlu0 %757
      %v759 = vrcp.pop %v758
      %v760 = vmul.f32 %v755, %v759
      %v761 = vpack.c.bf16 %v760, %v760
      %763 = vrot.lane.b32.xlu0 %v589, 120
      %v764 = vpop.permute.xlu0 %763
      %v766 = vsel %vm590, %v761, 0
      %v769 = vsel %vm653, %v764, 0
      %771 = vmatprep.subr.bf16.mxu0 0
      %772 = vmatpush1.bf16.msra.mxu0 %v769
      %773 = vmatprep.subr.bf16.mxu0 0
      %774 = vmatpush1.bf16.msra.mxu0 0
      %775 = vmatprep.subr.bf16.mxu0 0
      %776 = vmatpush1.bf16.msra.mxu0 0
      %777 = vmatprep.subr.bf16.mxu0 0
      %778 = vmatpush1.bf16.msra.mxu0 0
      %779 = vmatprep.subr.bf16.mxu0 0
      %780 = vmatpush1.bf16.msra.mxu0 0
      %781 = vmatprep.subr.bf16.mxu0 0
      %782 = vmatpush1.bf16.msra.mxu0 0
      %783 = vmatprep.subr.bf16.mxu0 0
      %784 = vmatpush1.bf16.msra.mxu0 0
      %785 = vmatprep.subr.bf16.mxu0 0
      %786 = vmatpush1.bf16.msra.mxu0 0
      %787 = vmatprep.subr.bf16.mxu0 0
      %788 = vmatpush1.bf16.msra.mxu0 0
      %789 = vmatprep.subr.bf16.mxu0 0
      %790 = vmatpush1.bf16.msra.mxu0 0
      %791 = vmatprep.subr.bf16.mxu0 0
      %792 = vmatpush1.bf16.msra.mxu0 0
      %793 = vmatprep.subr.bf16.mxu0 0
      %794 = vmatpush1.bf16.msra.mxu0 0
      %795 = vmatprep.subr.bf16.mxu0 0
      %796 = vmatpush1.bf16.msra.mxu0 0
      %797 = vmatprep.subr.bf16.mxu0 0
      %798 = vmatpush1.bf16.msra.mxu0 0
      %799 = vmatprep.subr.bf16.mxu0 0
      %800 = vmatpush1.bf16.msra.mxu0 0
      %801 = vmatprep.subr.bf16.mxu0 0
      %802 = vmatpush1.bf16.msra.mxu0 0
      %803 = vmatprep.mubr.bf16.mxu0 0
      %804 = vmatmul.mubr.bf16.gmra.mrb[0].mxu0 %v766
      %v805 = vpop.f32.mrb[0].mxu0
      %v806 = vadd.f32 0.0, %v805
      %v807 = vpop.f32.mrb[0].mxu0
      %v808 = vpop.f32.mrb[0].mxu0
      %v809 = vpop.f32.mrb[0].mxu0
      %810 = vdwg.mxu0
      %811 = vrot.lane.b32.xlu0 %v587, 112
      %v812 = vpop.permute.xlu0 %811
      %813 = vrot.lane.b32.xlu0 %v588, 112
      %v814 = vpop.permute.xlu0 %813
      %v816 = vsel %vm590, %v812, 0
      %v819 = vsel %vm590, %v814, 0
      %821 = vmatprep.subr.bf16.mxu0 0
      %822 = vmatpush1.bf16.xpose.msra.mxu0 %v819
      %823 = vmatprep.subr.bf16.mxu0 0
      %824 = vmatpush1.bf16.xpose.msra.mxu0 0
      %825 = vmatprep.subr.bf16.mxu0 0
      %826 = vmatpush1.bf16.xpose.msra.mxu0 0
      %827 = vmatprep.subr.bf16.mxu0 0
      %828 = vmatpush1.bf16.xpose.msra.mxu0 0
      %829 = vmatprep.subr.bf16.mxu0 0
      %830 = vmatpush1.bf16.xpose.msra.mxu0 0
      %831 = vmatprep.subr.bf16.mxu0 0
      %832 = vmatpush1.bf16.xpose.msra.mxu0 0
      %833 = vmatprep.subr.bf16.mxu0 0
      %834 = vmatpush1.bf16.xpose.msra.mxu0 0
      %835 = vmatprep.subr.bf16.mxu0 0
      %836 = vmatpush1.bf16.xpose.msra.mxu0 0
      %837 = vmatprep.subr.bf16.mxu0 0
      %838 = vmatpush1.bf16.xpose.msra.mxu0 0
      %839 = vmatprep.subr.bf16.mxu0 0
      %840 = vmatpush1.bf16.xpose.msra.mxu0 0
      %841 = vmatprep.subr.bf16.mxu0 0
      %842 = vmatpush1.bf16.xpose.msra.mxu0 0
      %843 = vmatprep.subr.bf16.mxu0 0
      %844 = vmatpush1.bf16.xpose.msra.mxu0 0
      %845 = vmatprep.subr.bf16.mxu0 0
      %846 = vmatpush1.bf16.xpose.msra.mxu0 0
      %847 = vmatprep.subr.bf16.mxu0 0
      %848 = vmatpush1.bf16.xpose.msra.mxu0 0
      %849 = vmatprep.subr.bf16.mxu0 0
      %850 = vmatpush1.bf16.xpose.msra.mxu0 0
      %851 = vmatprep.subr.bf16.mxu0 0
      %852 = vmatpush1.bf16.xpose.msra.mxu0 0
      %853 = vmatprep.mubr.bf16.mxu0 0
      %854 = vmatmul.mubr.bf16.gmra.mrb[0].mxu0 %v816
      %v855 = vpop.f32.mrb[0].mxu0
      %v856 = vadd.f32 0.0, %v855
      %v857 = vpop.f32.mrb[0].mxu0
      %v858 = vpop.f32.mrb[0].mxu0
      %v859 = vpop.f32.mrb[0].mxu0
      %860 = vdwg.mxu0
      %v861 = vmul.f32 %v856, 0.35355338
      %v862 = vsel %vm590, %v861, -inf
      %863 = vmax.xlane.f32.xlu0 %v862
      %v864 = vpop.xlane.xlu0 %863
      %v865 = vsub.f32 %v861, %v864
      %v866 = vmul.f32 %v865, 1.442695
      %v867 = vpow.pop %v866
      %v868 = vsel %vm590, %v867, 0.0
      %869 = vadd.xlane.f32.xlu0 %v868
      %v870 = vpop.xlane.xlu0 %869
      %v871 = vrcp.pop %v870
      %v872 = vmul.f32 %v867, %v871
      %v873 = vpack.c.bf16 %v872, %v872
      %874 = vrot.lane.b32.xlu0 %v589, 112
      %v875 = vpop.permute.xlu0 %874
      %v877 = vsel %vm590, %v873, 0
      %v880 = vsel %vm653, %v875, 0
      %882 = vmatprep.subr.bf16.mxu0 0
      %883 = vmatpush1.bf16.msra.mxu0 %v880
      %884 = vmatprep.subr.bf16.mxu0 0
      %885 = vmatpush1.bf16.msra.mxu0 0
      %886 = vmatprep.subr.bf16.mxu0 0
      %887 = vmatpush1.bf16.msra.mxu0 0
      %888 = vmatprep.subr.bf16.mxu0 0
      %889 = vmatpush1.bf16.msra.mxu0 0
      %890 = vmatprep.subr.bf16.mxu0 0
      %891 = vmatpush1.bf16.msra.mxu0 0
      %892 = vmatprep.subr.bf16.mxu0 0
      %893 = vmatpush1.bf16.msra.mxu0 0
      %894 = vmatprep.subr.bf16.mxu0 0
      %895 = vmatpush1.bf16.msra.mxu0 0
      %896 = vmatprep.subr.bf16.mxu0 0
      %897 = vmatpush1.bf16.msra.mxu0 0
      %898 = vmatprep.subr.bf16.mxu0 0
      %899 = vmatpush1.bf16.msra.mxu0 0
      %900 = vmatprep.subr.bf16.mxu0 0
      %901 = vmatpush1.bf16.msra.mxu0 0
      %902 = vmatprep.subr.bf16.mxu0 0
      %903 = vmatpush1.bf16.msra.mxu0 0
      %904 = vmatprep.subr.bf16.mxu0 0
      %905 = vmatpush1.bf16.msra.mxu0 0
      %906 = vmatprep.subr.bf16.mxu0 0
      %907 = vmatpush1.bf16.msra.mxu0 0
      %908 = vmatprep.subr.bf16.mxu0 0
      %909 = vmatpush1.bf16.msra.mxu0 0
      %910 = vmatprep.subr.bf16.mxu0 0
      %911 = vmatpush1.bf16.msra.mxu0 0
      %912 = vmatprep.subr.bf16.mxu0 0
      %913 = vmatpush1.bf16.msra.mxu0 0
      %914 = vmatprep.mubr.bf16.mxu0 0
      %915 = vmatmul.mubr.bf16.gmra.mrb[0].mxu0 %v877
      %v916 = vpop.f32.mrb[0].mxu0
      %v917 = vadd.f32 0.0, %v916
      %v918 = vpop.f32.mrb[0].mxu0
      %v919 = vpop.f32.mrb[0].mxu0
      %v920 = vpop.f32.mrb[0].mxu0
      %921 = vdwg.mxu0
      %922 = vrot.lane.b32.xlu0 %v587, 104
      %v923 = vpop.permute.xlu0 %922
      %924 = vrot.lane.b32.xlu0 %v588, 104
      %v925 = vpop.permute.xlu0 %924
      %v927 = vsel %vm590, %v923, 0
      %v930 = vsel %vm590, %v925, 0
      %932 = vmatprep.subr.bf16.mxu0 0
      %933 = vmatpush1.bf16.xpose.msra.mxu0 %v930
      %934 = vmatprep.subr.bf16.mxu0 0
      %935 = vmatpush1.bf16.xpose.msra.mxu0 0
      %936 = vmatprep.subr.bf16.mxu0 0
      %937 = vmatpush1.bf16.xpose.msra.mxu0 0
      %938 = vmatprep.subr.bf16.mxu0 0
      %939 = vmatpush1.bf16.xpose.msra.mxu0 0
      %940 = vmatprep.subr.bf16.mxu0 0
      %941 = vmatpush1.bf16.xpose.msra.mxu0 0
      %942 = vmatprep.subr.bf16.mxu0 0
      %943 = vmatpush1.bf16.xpose.msra.mxu0 0
      %944 = vmatprep.subr.bf16.mxu0 0
      %945 = vmatpush1.bf16.xpose.msra.mxu0 0
      %946 = vmatprep.subr.bf16.mxu0 0
      %947 = vmatpush1.bf16.xpose.msra.mxu0 0
      %948 = vmatprep.subr.bf16.mxu0 0
      %949 = vmatpush1.bf16.xpose.msra.mxu0 0
      %950 = vmatprep.subr.bf16.mxu0 0
      %951 = vmatpush1.bf16.xpose.msra.mxu0 0
      %952 = vmatprep.subr.bf16.mxu0 0
      %953 = vmatpush1.bf16.xpose.msra.mxu0 0
      %954 = vmatprep.subr.bf16.mxu0 0
      %955 = vmatpush1.bf16.xpose.msra.mxu0 0
      %956 = vmatprep.subr.bf16.mxu0 0
      %957 = vmatpush1.bf16.xpose.msra.mxu0 0
      %958 = vmatprep.subr.bf16.mxu0 0
      %959 = vmatpush1.bf16.xpose.msra.mxu0 0
      %960 = vmatprep.subr.bf16.mxu0 0
      %961 = vmatpush1.bf16.xpose.msra.mxu0 0
      %962 = vmatprep.subr.bf16.mxu0 0
      %963 = vmatpush1.bf16.xpose.msra.mxu0 0
      %964 = vmatprep.mubr.bf16.mxu0 0
      %965 = vmatmul.mubr.bf16.gmra.mrb[0].mxu0 %v927
      %v966 = vpop.f32.mrb[0].mxu0
      %v967 = vadd.f32 0.0, %v966
      %v968 = vpop.f32.mrb[0].mxu0
      %v969 = vpop.f32.mrb[0].mxu0
      %v970 = vpop.f32.mrb[0].mxu0
      %971 = vdwg.mxu0
      %v972 = vmul.f32 %v967, 0.35355338
      %v973 = vsel %vm590, %v972, -inf
      %974 = vmax.xlane.f32.xlu0 %v973
      %v975 = vpop.xlane.xlu0 %974
      %v976 = vsub.f32 %v972, %v975
      %v977 = vmul.f32 %v976, 1.442695
      %v978 = vpow.pop %v977
      %v979 = vsel %vm590, %v978, 0.0
      %980 = vadd.xlane.f32.xlu0 %v979
      %v981 = vpop.xlane.xlu0 %980
      %v982 = vrcp.pop %v981
      %v983 = vmul.f32 %v978, %v982
      %v984 = vpack.c.bf16 %v983, %v983
      %985 = vrot.lane.b32.xlu0 %v589, 104
      %v986 = vpop.permute.xlu0 %985
      %v988 = vsel %vm590, %v984, 0
      %v991 = vsel %vm653, %v986, 0
      %993 = vmatprep.subr.bf16.mxu0 0
      %994 = vmatpush1.bf16.msra.mxu0 %v991
      %995 = vmatprep.subr.bf16.mxu0 0
      %996 = vmatpush1.bf16.msra.mxu0 0
      %997 = vmatprep.subr.bf16.mxu0 0
      %998 = vmatpush1.bf16.msra.mxu0 0
      %999 = vmatprep.subr.bf16.mxu0 0
      %1000 = vmatpush1.bf16.msra.mxu0 0
      %1001 = vmatprep.subr.bf16.mxu0 0
      %1002 = vmatpush1.bf16.msra.mxu0 0
      %1003 = vmatprep.subr.bf16.mxu0 0
      %1004 = vmatpush1.bf16.msra.mxu0 0
      %1005 = vmatprep.subr.bf16.mxu0 0
      %1006 = vmatpush1.bf16.msra.mxu0 0
      %1007 = vmatprep.subr.bf16.mxu0 0
      %1008 = vmatpush1.bf16.msra.mxu0 0
      %1009 = vmatprep.subr.bf16.mxu0 0
      %1010 = vmatpush1.bf16.msra.mxu0 0
      %1011 = vmatprep.subr.bf16.mxu0 0
      %1012 = vmatpush1.bf16.msra.mxu0 0
      %1013 = vmatprep.subr.bf16.mxu0 0
      %1014 = vmatpush1.bf16.msra.mxu0 0
      %1015 = vmatprep.subr.bf16.mxu0 0
      %1016 = vmatpush1.bf16.msra.mxu0 0
      %1017 = vmatprep.subr.bf16.mxu0 0
      %1018 = vmatpush1.bf16.msra.mxu0 0
      %1019 = vmatprep.subr.bf16.mxu0 0
      %1020 = vmatpush1.bf16.msra.mxu0 0
      %1021 = vmatprep.subr.bf16.mxu0 0
      %1022 = vmatpush1.bf16.msra.mxu0 0
      %1023 = vmatprep.subr.bf16.mxu0 0
      %1024 = vmatpush1.bf16.msra.mxu0 0
      %1025 = vmatprep.mubr.bf16.mxu0 0
      %1026 = vmatmul.mubr.bf16.gmra.mrb[0].mxu0 %v988
      %v1027 = vpop.f32.mrb[0].mxu0
      %v1028 = vadd.f32 0.0, %v1027
      %v1029 = vpop.f32.mrb[0].mxu0
      %v1030 = vpop.f32.mrb[0].mxu0
      %v1031 = vpop.f32.mrb[0].mxu0
      %1032 = vdwg.mxu0
      %1034 = vrot.lane.b32.xlu0 %v806, 8
      %v1035 = vpop.permute.xlu0 %1034
      %1038 = vrot.lane.b32.xlu0 %v917, 16
      %v1039 = vpop.permute.xlu0 %1038
      %1042 = vrot.lane.b32.xlu0 %v1028, 24
      %v1043 = vpop.permute.xlu0 %1042
      %v1045 = vsel %vm590, %v692, %v1035
      %vm1046 = vcmask 130048
      %v1047 = vsel %vm1046, %v1045, %v1039
      %vm1048 = vcmask 195584
      %v1049 = vsel %vm1048, %v1047, %v1043
      %v1050 = vpack.c.bf16 %v1049, %v1049
      %v1051 = vld [vmem:[%s6] sm:$0xf]
      %v1052 = vld [vmem:[%s6 + $0x4] sm:$0xf]
      %v1053 = vld [vmem:[%s6 + $0x8] sm:$0xf]
      %v1054 = vld [vmem:[%s6 + $0xc] sm:$0xf]
      %v1055 = vld [vmem:[%s7] sm:$0x1]
      %v1057 = vlaneseq
      %v1058 = vshrl.u32 %v1057, 7
      %v1059 = vsub.s32 0, %v1058
      %v1060 = vrot.slane %v1055, %v1059
      %v1066 = vunpack.c.l.b16 %v1051
      %v1067 = vunpack.c.l.b16 %v1052
      %v1068 = vunpack.c.l.b16 %v1053
      %v1069 = vunpack.c.l.b16 %v1054
      %v1070 = vpack.c.b16 %v1067, %v1066
      %v1071 = vpack.c.b16 %v1069, %v1068
      %v1075 = vsel %vm437, %v1050, 0
      %1077 = vmatprep.subr.bf16.mxu0 0
      %1078 = vmatpush1.bf16.msra.mxu0 %v1070
      %1079 = vmatprep.subr.bf16.mxu0 0
      %1080 = vmatpush1.bf16.msra.mxu0 %v1071
      %1081 = vmatprep.subr.bf16.mxu0 0
      %1082 = vmatpush1.bf16.msra.mxu0 0
      %1083 = vmatprep.subr.bf16.mxu0 0
      %1084 = vmatpush1.bf16.msra.mxu0 0
      %1085 = vmatprep.subr.bf16.mxu0 0
      %1086 = vmatpush1.bf16.msra.mxu0 0
      %1087 = vmatprep.subr.bf16.mxu0 0
      %1088 = vmatpush1.bf16.msra.mxu0 0
      %1089 = vmatprep.subr.bf16.mxu0 0
      %1090 = vmatpush1.bf16.msra.mxu0 0
      %1091 = vmatprep.subr.bf16.mxu0 0
      %1092 = vmatpush1.bf16.msra.mxu0 0
      %1093 = vmatprep.subr.bf16.mxu0 0
      %1094 = vmatpush1.bf16.msra.mxu0 0
      %1095 = vmatprep.subr.bf16.mxu0 0
      %1096 = vmatpush1.bf16.msra.mxu0 0
      %1097 = vmatprep.subr.bf16.mxu0 0
      %1098 = vmatpush1.bf16.msra.mxu0 0
      %1099 = vmatprep.subr.bf16.mxu0 0
      %1100 = vmatpush1.bf16.msra.mxu0 0
      %1101 = vmatprep.subr.bf16.mxu0 0
      %1102 = vmatpush1.bf16.msra.mxu0 0
      %1103 = vmatprep.subr.bf16.mxu0 0
      %1104 = vmatpush1.bf16.msra.mxu0 0
      %1105 = vmatprep.subr.bf16.mxu0 0
      %1106 = vmatpush1.bf16.msra.mxu0 0
      %1107 = vmatprep.subr.bf16.mxu0 0
      %1108 = vmatpush1.bf16.msra.mxu0 0
      %1109 = vmatprep.mubr.bf16.mxu0 0
      %1110 = vmatmul.mubr.bf16.gmra.mrb[0].mxu0 %v1075
      %v1111 = vpop.f32.mrb[0].mxu0
      %v1112 = vadd.f32 %v1060, %v1111
      %v1113 = vpop.f32.mrb[0].mxu0
      %v1114 = vpop.f32.mrb[0].mxu0
      %v1115 = vpop.f32.mrb[0].mxu0
      %1116 = vdwg.mxu0
      %v1117 = vadd.f32 %v407, %v1112
      %v1118 = vld [vmem:[%s8] sm:$0x1]
      %v1119 = vld [vmem:[%s9] sm:$0x1]
      %v1120 = vsel %vm437, %v1117, 0.0
      %1121 = vadd.xlane.f32.xlu0 %v1120
      %v1122 = vpop.xlane.xlu0 %1121
      %v1123 = vrcp.pop 32.0
      %v1124 = vmul.f32 %v1122, %v1123
      %v1125 = vsub.f32 %v1117, %v1124
      %v1126 = vmul.f32 %v1125, %v1125
      %v1127 = vsel %vm437, %v1126, 0.0
      %1128 = vadd.xlane.f32.xlu0 %v1127
      %v1129 = vpop.xlane.xlu0 %1128
      %v1130 = vmul.f32 %v1129, %v1123
      %v1131 = vadd.f32 %v1130, 1e-05
      %v1132 = vrsqrt.pop %v1131
      %v1133 = vmul.f32 %v1125, %v1132
      %v1135 = vlaneseq
      %v1136 = vshrl.u32 %v1135, 7
      %v1137 = vsub.s32 0, %v1136
      %v1138 = vrot.slane %v1118, %v1137
      %v1140 = vmul.f32 %v1133, %v1138
      %v1142 = vlaneseq
      %v1143 = vshrl.u32 %v1142, 7
      %v1144 = vsub.s32 0, %v1143
      %v1145 = vrot.slane %v1119, %v1144
      %v1147 = vadd.f32 %v1140, %v1145
      %1148 = vst.msk [vmem:[%s405] sm:$0xff] %vm437, %v1147
      %p1149 = scmp.lt.s32.totalorder %s21, 1
      %s1150 = scalar_select %p1149, %s21, 1
      %s1151 = smul.addr %s1150, 8
      %s1152 = scalar_lea.vmem %s10, %s1151
      // Predicated region
      $region61: #{ifc_decoder_forward.8} parent=59 // pred_check
        %p1153 = pneg %p269
      $region62: #{ifc_decoder_forward.8} parent=59 // pred_check_branch
        %1155 = sbr.rel (%p1153) target = $region64
      $region63: #{ifc_decoder_forward.8} parent=59 // pred_region
        _
      $region64: #{ifc_decoder_forward.8} parent=59 // pred_fallthru
        _
    $region60: #{ifc_decoder_forward.8} parent=5 // pred_fallthru
      _
    %p1156 = scmp.le.s32.totalorder 2, %s16
    // Predicated region
    $region65: #{ifc_decoder_forward.8} parent=5 // pred_check
      %p1157 = pneg %p1156
    $region66: #{ifc_decoder_forward.8} parent=5 // pred_check_branch
      %1159 = sbr.rel (%p1157) target = $region68
    $region67: #{ifc_decoder_forward.8} parent=5 // pred_region
      %s1160 = ssub.s32 %s16, 2
      // Predicated region
      $region69: #{ifc_decoder_forward.8} parent=67 // pred_check
        %p1161 = pneg %p275
      $region70: #{ifc_decoder_forward.8} parent=67 // pred_check_branch
        %1163 = sbr.rel (%p1161) target = $region72
      $region71: #{ifc_decoder_forward.8} parent=67 // pred_region
        %p1164 = scmp.lt.s32.totalorder %s22, 1
        %s1165 = scalar_select %p1164, %s22, 1
        %s1166 = smul.addr %s1165, 8
        %s1167 = scalar_lea.vmem %s10, %s1166
      $region72: #{ifc_decoder_forward.8} parent=67 // pred_fallthru
        _
    $region68: #{ifc_decoder_forward.8} parent=5 // pred_fallthru
      _
  $region6: #{ifc_decoder_forward.8} parent=0 // loop_footer
    %s20 = sadd.s32 1, %s16
  $region7: #{ifc_decoder_forward.8} parent=0 // loop_footer_branch
    %15 = sbr.rel target = $region3
  $region8: #{ifc_decoder_forward.8} parent=0 // loop_exit
    _

</llo_original>
